<compile_context>
chip_gen: v7x
topology: tpu7x:2x2x1
jax: 0.10.0
libtpu: 0.0.40
codegen_flags: <defaults>
</compile_context>

<pallas_src>
import jax
import jax.numpy as jnp
from jax import lax
from jax.experimental import pallas as pl
from jax.experimental.pallas import tpu as pltpu

NUM_EXPERTS = 4
NUM_DIFFICULTIES = 3
TOPK = 2
ROUTE_PAD = 128   # lane-dense padding for the routing-info output


def moe_kernel(x_ref, lbl_ref, embt_ref, wgx_ref, wge_ref, bg_ref, w_ref, b_ref,
               out_ref, route_ref, acc_ref, wcomb_ref):
    e = pl.program_id(2)

    # ---- gate / routing: once per (batch-tile, H-tile), at the first expert step ----
    @pl.when(e == 0)
    def _gate():
        x = x_ref[...]                                    # (TB, D) f32
        lbl = lbl_ref[...]                                # (TB, 1) int32

        # In-kernel embedding gather from the tiny resident table (exact row select).
        emb = jnp.zeros((x.shape[0], embt_ref.shape[1]), jnp.float32)
        for d in range(NUM_DIFFICULTIES):                 # tiny static loop (3 selects)
            row = embt_ref[pl.ds(d, 1), :]                # (1, D)
            emb = jnp.where(lbl == d, row, emb)           # (TB, D)

        # gate logits = concat([x, emb], dim=1) @ Wg.T + bg  (split form, f32)
        logits = (jnp.dot(x, wgx_ref[...], preferred_element_type=jnp.float32)
                  + jnp.dot(emb, wge_ref[...], preferred_element_type=jnp.float32)
                  + bg_ref[...])                          # (TB, E)

        # softmax over experts; normalization on the EUP
        m = jnp.max(logits, axis=1, keepdims=True)
        ex = jnp.exp(logits - m)
        probs = ex * pl.reciprocal(jnp.sum(ex, axis=1, keepdims=True), approx=True)

        # top-2 (ties broken toward the lower index, matching lax.top_k)
        lane = lax.broadcasted_iota(jnp.int32, probs.shape, 1)
        m1 = jnp.max(probs, axis=1, keepdims=True)
        idx1 = jnp.min(jnp.where(probs == m1, lane, NUM_EXPERTS), axis=1, keepdims=True)
        pm = jnp.where(lane == idx1, -jnp.inf, probs)
        m2 = jnp.max(pm, axis=1, keepdims=True)
        idx2 = jnp.min(jnp.where(pm == m2, lane, NUM_EXPERTS), axis=1, keepdims=True)

        # per-expert combine weight: prob if the expert is in the top-2, else 0
        sel = jnp.logical_or(lane == idx1, lane == idx2)
        wcomb_ref[...] = jnp.where(sel, probs, 0.0)       # (TB, E)

        # routing info, padded to a lane-dense (TB, ROUTE_PAD) int32 slab
        rlane = lax.broadcasted_iota(jnp.int32, route_ref.shape, 1)
        route_ref[...] = jnp.where(rlane == 0, idx1, jnp.where(rlane == 1, idx2, 0))

        acc_ref[...] = jnp.zeros_like(acc_ref)

    # ---- one expert's (D, th) slab: bf16 MXU matmul, f32 accumulation ----
    xb = x_ref[...].astype(jnp.bfloat16)                              # (TB, D) bf16
    eo = jnp.dot(xb, w_ref[...], preferred_element_type=jnp.float32) + b_ref[...]   # (TB, TH)
    lane_e = lax.broadcasted_iota(jnp.int32, wcomb_ref.shape, 1)      # (TB, E)
    w_e = jnp.sum(jnp.where(lane_e == e, wcomb_ref[...], 0.0),
                  axis=1, keepdims=True)                              # (TB, 1)
    acc_ref[...] += eo * w_e

    @pl.when(e == pl.num_programs(2) - 1)
    def _finalize():
        out_ref[...] = acc_ref[...].astype(out_ref.dtype)


def prepare_kernel_params(p):
    """One-time layout prep (outside the per-call path): pre-transpose & bf16-cast."""
    D = p["emb_table"].shape[1]
    return {
        "we_t": jnp.transpose(p["w_experts"], (0, 2, 1)).astype(jnp.bfloat16),  # (E, D, H)
        "be": p["b_experts"][:, None, :].astype(jnp.float32),                   # (E, 1, H)
        "wgx": p["w_gate"][:, :D].T.astype(jnp.float32),                        # (D, E)
        "wge": p["w_gate"][:, D:].T.astype(jnp.float32),                        # (D, E)
        "bg": p["b_gate"][None, :].astype(jnp.float32),                         # (1, E)
        "emb_table": p["emb_table"].astype(jnp.float32),                        # (NDIFF, D)
    }


def moe_forward(x, difficulty_labels, kp, *, tb=128, th=128):
    B, D = x.shape
    E, _, H = kp["we_t"].shape
    assert B % tb == 0 and H % th == 0, "demo assumes exact tiling"

    lbl = difficulty_labels.reshape(B, 1).astype(jnp.int32)
    grid = (B // tb, H // th, E)

    out, route_pad = pl.pallas_call(
        moe_kernel,
        out_shape=(jax.ShapeDtypeStruct((B, H), jnp.float32),
                   jax.ShapeDtypeStruct((B, ROUTE_PAD), jnp.int32)),
        grid_spec=pltpu.PrefetchScalarGridSpec(
            num_scalar_prefetch=0,
            grid=grid,
            in_specs=[
                pl.BlockSpec((tb, D), lambda i, j, e: (i, 0)),                   # x
                pl.BlockSpec((tb, 1), lambda i, j, e: (i, 0)),                   # labels
                pl.BlockSpec((NUM_DIFFICULTIES, D), lambda i, j, e: (0, 0)),     # emb table
                pl.BlockSpec((D, NUM_EXPERTS), lambda i, j, e: (0, 0)),          # gate W (x half)
                pl.BlockSpec((D, NUM_EXPERTS), lambda i, j, e: (0, 0)),          # gate W (emb half)
                pl.BlockSpec((1, NUM_EXPERTS), lambda i, j, e: (0, 0)),          # gate bias
                pl.BlockSpec((None, D, th), lambda i, j, e: (e, 0, j)),          # expert W slab (bf16)
                pl.BlockSpec((None, 1, th), lambda i, j, e: (e, 0, j)),          # expert bias slab
            ],
            out_specs=[
                pl.BlockSpec((tb, th), lambda i, j, e: (i, j)),                  # output (lane-dense)
                pl.BlockSpec((tb, ROUTE_PAD), lambda i, j, e: (i, 0)),           # routing (padded)
            ],
            scratch_shapes=[
                pltpu.VMEM((tb, th), jnp.float32),            # f32 accumulator
                pltpu.VMEM((tb, NUM_EXPERTS), jnp.float32),   # cached per-expert gate weights
            ],
        ),
        compiler_params=pltpu.CompilerParams(
            dimension_semantics=("parallel", "arbitrary", "arbitrary"),
            vmem_limit_bytes=64 * 1024 * 1024,
        ),
    )(x, lbl, kp["emb_table"], kp["wgx"], kp["wge"], kp["bg"], kp["we_t"], kp["be"])

    return out, route_pad[:, :TOPK]


def init_params(key, input_dim, hidden_dim):
    """Deterministic synthetic params matching the PyTorch module's shapes."""
    k = jax.random.split(key, 5)
    return {
        # nn.Linear(input_dim, hidden_dim) x num_experts: weight (H, D), bias (H,)
        "w_experts": 0.05 * jax.random.normal(k[0], (NUM_EXPERTS, hidden_dim, input_dim), jnp.float32),
        "b_experts": 0.05 * jax.random.normal(k[1], (NUM_EXPERTS, hidden_dim), jnp.float32),
        # nn.Embedding(num_difficulties, input_dim)
        "emb_table": jax.random.normal(k[2], (NUM_DIFFICULTIES, input_dim), jnp.float32),
        # nn.Linear(input_dim * 2, num_experts): weight (E, 2D), bias (E,)
        "w_gate": 0.1 * jax.random.normal(k[3], (NUM_EXPERTS, 2 * input_dim), jnp.float32),
        "b_gate": 0.1 * jax.random.normal(k[4], (NUM_EXPERTS,), jnp.float32),
    }


def moe_ref(x, labels, p):
    """Plain-JAX f32 reference mirroring the PyTorch forward semantics."""
    emb = p["emb_table"][labels]
    gate_in = jnp.concatenate([x, emb], axis=1)
    logits = gate_in @ p["w_gate"].T + p["b_gate"]
    probs = jax.nn.softmax(logits, axis=1)
    topk_probs, topk_idx = lax.top_k(probs, TOPK)
    out = jnp.zeros((x.shape[0], p["w_experts"].shape[1]), jnp.float32)
    for i in range(NUM_EXPERTS):
        eo = x @ p["w_experts"][i].T + p["b_experts"][i]
        w = jnp.sum(jnp.where(topk_idx == i, topk_probs, 0.0), axis=1, keepdims=True)
        out = out + eo * w
    return out, topk_idx


if __name__ == "__main__":
    B, D, H = 256, 256, 256          # small but MXU/lane-aligned demo shapes
    key = jax.random.PRNGKey(0)
    kx, kl, kp_key = jax.random.split(key, 3)

    x = jax.random.normal(kx, (B, D), jnp.float32)
    difficulty_labels = jax.random.randint(kl, (B,), 0, NUM_DIFFICULTIES)
    params = init_params(kp_key, D, H)
    kparams = prepare_kernel_params(params)   # one-time layout prep, outside the call path

    out, route = moe_forward(x, difficulty_labels, kparams, tb=128, th=128)
    jax.block_until_ready((out, route))

    ref_out, ref_route = moe_ref(x, difficulty_labels, params)
    assert out.shape == (B, H) and route.shape == (B, TOPK)
    # bf16 matmul + approx-reciprocal softmax vs. the pure-f32 reference
    assert jnp.allclose(out, ref_out, atol=5e-2, rtol=5e-2), "output mismatch"
    assert jnp.array_equal(route, ref_route.astype(jnp.int32)), "routing mismatch"

    print("KERNEL_OK")
</pallas_src>

<mosaic_0001>
module attributes {stable_mosaic.version = 11 : i64} {
  func.func @moe_kernel(%arg0: i32, %arg1: i32, %arg2: i32, %arg3: memref<128x256xf32, #tpu.memory_space<vmem>>, %arg4: memref<128x1xi32, #tpu.memory_space<vmem>>, %arg5: memref<3x256xf32, #tpu.memory_space<vmem>>, %arg6: memref<256x4xf32, #tpu.memory_space<vmem>>, %arg7: memref<256x4xf32, #tpu.memory_space<vmem>>, %arg8: memref<1x4xf32, #tpu.memory_space<vmem>>, %arg9: memref<1x256x128xbf16, #tpu.memory_space<vmem>>, %arg10: memref<1x1x128xf32, #tpu.memory_space<vmem>>, %arg11: memref<128x128xf32, #tpu.memory_space<vmem>>, %arg12: memref<128x128xi32, #tpu.memory_space<vmem>>, %arg13: memref<128x128xf32, #tpu.memory_space<vmem>>, %arg14: memref<128x4xf32, #tpu.memory_space<vmem>>) attributes {dimension_semantics = [#tpu.dimension_semantics<parallel>, #tpu.dimension_semantics<arbitrary>, #tpu.dimension_semantics<arbitrary>], iteration_bounds = array<i64: 2, 2, 4>, scalar_prefetch = 0 : i64, scratch_operands = 2 : i64, tpu.core_type = #tpu.core_type<tc>, window_params = [{transform_indices = @transform_0, window_bounds = array<i64: 128, 256>}, {transform_indices = @transform_1, window_bounds = array<i64: 128, 1>}, {pipeline_mode = #tpu.pipeline_mode<synchronous>, transform_indices = @transform_2, window_bounds = array<i64: 3, 256>}, {pipeline_mode = #tpu.pipeline_mode<synchronous>, transform_indices = @transform_3, window_bounds = array<i64: 256, 4>}, {pipeline_mode = #tpu.pipeline_mode<synchronous>, transform_indices = @transform_4, window_bounds = array<i64: 256, 4>}, {pipeline_mode = #tpu.pipeline_mode<synchronous>, transform_indices = @transform_5, window_bounds = array<i64: 1, 4>}, {transform_indices = @transform_6, window_bounds = array<i64: 1, 256, 128>}, {transform_indices = @transform_7, window_bounds = array<i64: 1, 1, 128>}, {transform_indices = @transform_8, window_bounds = array<i64: 128, 128>}, {transform_indices = @transform_9, window_bounds = array<i64: 128, 128>}]} {
    %c0_i32 = arith.constant 0 : i32
    %0 = arith.cmpi eq, %arg2, %c0_i32 : i32
    %1 = arith.extui %0 : i1 to i32
    %c0_i32_0 = arith.constant 0 : i32
    %2 = arith.cmpi ne, %1, %c0_i32_0 : i32
    scf.if %2 {
      %c0_17 = arith.constant 0 : index
      %c0_18 = arith.constant 0 : index
      %28 = vector.load %arg3[%c0_17, %c0_18] : memref<128x256xf32, #tpu.memory_space<vmem>>, vector<128x256xf32>
      %c0_19 = arith.constant 0 : index
      %c0_20 = arith.constant 0 : index
      %29 = vector.load %arg4[%c0_19, %c0_20] : memref<128x1xi32, #tpu.memory_space<vmem>>, vector<128x1xi32>
      %cst_21 = arith.constant 0.000000e+00 : f32
      %30 = vector.broadcast %cst_21 : f32 to vector<128x256xf32>
      %c0_22 = arith.constant 0 : index
      %c0_23 = arith.constant 0 : index
      %31 = vector.load %arg5[%c0_22, %c0_23] : memref<3x256xf32, #tpu.memory_space<vmem>>, vector<1x256xf32>
      %c0_i32_24 = arith.constant 0 : i32
      %32 = vector.broadcast %c0_i32_24 : i32 to vector<128x1xi32>
      %33 = arith.cmpi eq, %29, %32 : vector<128x1xi32>
      %34 = vector.shape_cast %33 : vector<128x1xi1> to vector<128x1xi1>
      %35 = vector.broadcast %34 : vector<128x1xi1> to vector<128x256xi1>
      %36 = vector.shape_cast %31 : vector<1x256xf32> to vector<1x256xf32>
      %37 = vector.broadcast %36 : vector<1x256xf32> to vector<128x256xf32>
      %38 = arith.select %35, %37, %30 : vector<128x256xi1>, vector<128x256xf32>
      %c1 = arith.constant 1 : index
      %c0_25 = arith.constant 0 : index
      %39 = vector.load %arg5[%c1, %c0_25] : memref<3x256xf32, #tpu.memory_space<vmem>>, vector<1x256xf32>
      %c1_i32 = arith.constant 1 : i32
      %40 = vector.broadcast %c1_i32 : i32 to vector<128x1xi32>
      %41 = arith.cmpi eq, %29, %40 : vector<128x1xi32>
      %42 = vector.shape_cast %41 : vector<128x1xi1> to vector<128x1xi1>
      %43 = vector.broadcast %42 : vector<128x1xi1> to vector<128x256xi1>
      %44 = vector.shape_cast %39 : vector<1x256xf32> to vector<1x256xf32>
      %45 = vector.broadcast %44 : vector<1x256xf32> to vector<128x256xf32>
      %46 = arith.select %43, %45, %38 : vector<128x256xi1>, vector<128x256xf32>
      %c2 = arith.constant 2 : index
      %c0_26 = arith.constant 0 : index
      %47 = vector.load %arg5[%c2, %c0_26] : memref<3x256xf32, #tpu.memory_space<vmem>>, vector<1x256xf32>
      %c2_i32 = arith.constant 2 : i32
      %48 = vector.broadcast %c2_i32 : i32 to vector<128x1xi32>
      %49 = arith.cmpi eq, %29, %48 : vector<128x1xi32>
      %50 = vector.shape_cast %49 : vector<128x1xi1> to vector<128x1xi1>
      %51 = vector.broadcast %50 : vector<128x1xi1> to vector<128x256xi1>
      %52 = vector.shape_cast %47 : vector<1x256xf32> to vector<1x256xf32>
      %53 = vector.broadcast %52 : vector<1x256xf32> to vector<128x256xf32>
      %54 = arith.select %51, %53, %46 : vector<128x256xi1>, vector<128x256xf32>
      %c0_27 = arith.constant 0 : index
      %c0_28 = arith.constant 0 : index
      %55 = vector.load %arg6[%c0_27, %c0_28] : memref<256x4xf32, #tpu.memory_space<vmem>>, vector<256x4xf32>
      %cst_29 = arith.constant dense<0.000000e+00> : vector<128x4xf32>
      %56 = tpu.matmul %28, %55, %cst_29 {dimension_numbers = #tpu.dot_dimension_numbers<[1], [0], [0], [1], [0, 0, 1, 1], [], []>} : vector<128x256xf32>, vector<256x4xf32>, vector<128x4xf32> -> vector<128x4xf32>
      %c0_30 = arith.constant 0 : index
      %c0_31 = arith.constant 0 : index
      %57 = vector.load %arg7[%c0_30, %c0_31] : memref<256x4xf32, #tpu.memory_space<vmem>>, vector<256x4xf32>
      %cst_32 = arith.constant dense<0.000000e+00> : vector<128x4xf32>
      %58 = tpu.matmul %54, %57, %cst_32 {dimension_numbers = #tpu.dot_dimension_numbers<[1], [0], [0], [1], [0, 0, 1, 1], [], []>} : vector<128x256xf32>, vector<256x4xf32>, vector<128x4xf32> -> vector<128x4xf32>
      %59 = arith.addf %56, %58 : vector<128x4xf32>
      %c0_33 = arith.constant 0 : index
      %c0_34 = arith.constant 0 : index
      %60 = vector.load %arg8[%c0_33, %c0_34] : memref<1x4xf32, #tpu.memory_space<vmem>>, vector<1x4xf32>
      %61 = vector.broadcast %60 : vector<1x4xf32> to vector<128x4xf32>
      %62 = arith.addf %59, %61 : vector<128x4xf32>
      %cst_35 = arith.constant dense<0xFF800000> : vector<128xf32>
      %63 = vector.multi_reduction <maximumf>, %62, %cst_35 [1] : vector<128x4xf32> to vector<128xf32>
      %64 = vector.shape_cast %63 : vector<128xf32> to vector<128x1xf32>
      %65 = vector.broadcast %64 : vector<128x1xf32> to vector<128x4xf32>
      %66 = arith.subf %62, %65 : vector<128x4xf32>
      %67 = math.exp %66 : vector<128x4xf32>
      %cst_36 = arith.constant dense<0.000000e+00> : vector<128xf32>
      %68 = vector.multi_reduction <add>, %67, %cst_36 [1] : vector<128x4xf32> to vector<128xf32>
      %69 = vector.shape_cast %68 : vector<128xf32> to vector<128x1xf32>
      %70 = tpu.reciprocal %69 {approx = true} : vector<128x1xf32> -> vector<128x1xf32>
      %71 = vector.broadcast %70 : vector<128x1xf32> to vector<128x4xf32>
      %72 = arith.mulf %67, %71 : vector<128x4xf32>
      %73 = tpu.iota {dimensions = array<i32: 1>} : vector<128x4xi32>
      %cst_37 = arith.constant dense<0xFF800000> : vector<128xf32>
      %74 = vector.multi_reduction <maximumf>, %72, %cst_37 [1] : vector<128x4xf32> to vector<128xf32>
      %75 = vector.shape_cast %74 : vector<128xf32> to vector<128x1xf32>
      %76 = vector.broadcast %75 : vector<128x1xf32> to vector<128x4xf32>
      %77 = arith.cmpf oeq, %72, %76 : vector<128x4xf32>
      %c4_i32 = arith.constant 4 : i32
      %78 = vector.broadcast %c4_i32 : i32 to vector<128x4xi32>
      %79 = arith.select %77, %73, %78 : vector<128x4xi1>, vector<128x4xi32>
      %cst_38 = arith.constant dense<2147483647> : vector<128xi32>
      %80 = vector.multi_reduction <minsi>, %79, %cst_38 [1] : vector<128x4xi32> to vector<128xi32>
      %81 = vector.shape_cast %80 : vector<128xi32> to vector<128x1xi32>
      %82 = vector.broadcast %81 : vector<128x1xi32> to vector<128x4xi32>
      %83 = arith.cmpi eq, %73, %82 : vector<128x4xi32>
      %cst_39 = arith.constant 0xFF800000 : f32
      %84 = vector.broadcast %cst_39 : f32 to vector<128x4xf32>
      %85 = arith.select %83, %84, %72 : vector<128x4xi1>, vector<128x4xf32>
      %cst_40 = arith.constant dense<0xFF800000> : vector<128xf32>
      %86 = vector.multi_reduction <maximumf>, %85, %cst_40 [1] : vector<128x4xf32> to vector<128xf32>
      %87 = vector.shape_cast %86 : vector<128xf32> to vector<128x1xf32>
      %88 = vector.broadcast %87 : vector<128x1xf32> to vector<128x4xf32>
      %89 = arith.cmpf oeq, %85, %88 : vector<128x4xf32>
      %c4_i32_41 = arith.constant 4 : i32
      %90 = vector.broadcast %c4_i32_41 : i32 to vector<128x4xi32>
      %91 = arith.select %89, %73, %90 : vector<128x4xi1>, vector<128x4xi32>
      %cst_42 = arith.constant dense<2147483647> : vector<128xi32>
      %92 = vector.multi_reduction <minsi>, %91, %cst_42 [1] : vector<128x4xi32> to vector<128xi32>
      %93 = vector.shape_cast %92 : vector<128xi32> to vector<128x1xi32>
      %94 = vector.broadcast %81 : vector<128x1xi32> to vector<128x4xi32>
      %95 = arith.cmpi eq, %73, %94 : vector<128x4xi32>
      %96 = vector.broadcast %93 : vector<128x1xi32> to vector<128x4xi32>
      %97 = arith.cmpi eq, %73, %96 : vector<128x4xi32>
      %98 = arith.ori %95, %97 : vector<128x4xi1>
      %cst_43 = arith.constant 0.000000e+00 : f32
      %99 = vector.broadcast %cst_43 : f32 to vector<128x4xf32>
      %100 = arith.select %98, %72, %99 : vector<128x4xi1>, vector<128x4xf32>
      %c0_44 = arith.constant 0 : index
      %c0_45 = arith.constant 0 : index
      %101 = vector.load %arg14[%c0_44, %c0_45] : memref<128x4xf32, #tpu.memory_space<vmem>>, vector<128x4xf32>
      tpu.vector_store %arg14[%c0_44, %c0_45], %100 {strides = array<i32>} : memref<128x4xf32, #tpu.memory_space<vmem>>, vector<128x4xf32>,
      %102 = tpu.iota {dimensions = array<i32: 1>} : vector<128x128xi32>
      %c0_i32_46 = arith.constant 0 : i32
      %103 = vector.broadcast %c0_i32_46 : i32 to vector<128x128xi32>
      %104 = arith.cmpi eq, %102, %103 : vector<128x128xi32>
      %c1_i32_47 = arith.constant 1 : i32
      %105 = vector.broadcast %c1_i32_47 : i32 to vector<128x128xi32>
      %106 = arith.cmpi eq, %102, %105 : vector<128x128xi32>
      %c0_i32_48 = arith.constant 0 : i32
      %107 = vector.shape_cast %93 : vector<128x1xi32> to vector<128x1xi32>
      %108 = vector.broadcast %107 : vector<128x1xi32> to vector<128x128xi32>
      %109 = vector.broadcast %c0_i32_48 : i32 to vector<128x128xi32>
      %110 = arith.select %106, %108, %109 : vector<128x128xi1>, vector<128x128xi32>
      %111 = vector.shape_cast %81 : vector<128x1xi32> to vector<128x1xi32>
      %112 = vector.broadcast %111 : vector<128x1xi32> to vector<128x128xi32>
      %113 = arith.select %104, %112, %110 : vector<128x128xi1>, vector<128x128xi32>
      %c0_49 = arith.constant 0 : index
      %c0_50 = arith.constant 0 : index
      %114 = vector.load %arg12[%c0_49, %c0_50] : memref<128x128xi32, #tpu.memory_space<vmem>>, vector<128x128xi32>
      tpu.vector_store %arg12[%c0_49, %c0_50], %113 {strides = array<i32>} : memref<128x128xi32, #tpu.memory_space<vmem>>, vector<128x128xi32>,
      %cst_51 = arith.constant 0.000000e+00 : f32
      %115 = vector.broadcast %cst_51 : f32 to vector<128x128xf32>
      %c0_52 = arith.constant 0 : index
      %c0_53 = arith.constant 0 : index
      %116 = vector.load %arg13[%c0_52, %c0_53] : memref<128x128xf32, #tpu.memory_space<vmem>>, vector<128x128xf32>
      tpu.vector_store %arg13[%c0_52, %c0_53], %115 {strides = array<i32>} : memref<128x128xf32, #tpu.memory_space<vmem>>, vector<128x128xf32>,
    } else {
    }
    %c0 = arith.constant 0 : index
    %c0_1 = arith.constant 0 : index
    %3 = vector.load %arg3[%c0, %c0_1] : memref<128x256xf32, #tpu.memory_space<vmem>>, vector<128x256xf32>
    %4 = arith.truncf %3 : vector<128x256xf32> to vector<128x256xbf16>
    %c0_2 = arith.constant 0 : index
    %c0_3 = arith.constant 0 : index
    %c0_4 = arith.constant 0 : index
    %5 = vector.load %arg9[%c0_2, %c0_3, %c0_4] : memref<1x256x128xbf16, #tpu.memory_space<vmem>>, vector<1x256x128xbf16>
    %6 = vector.shape_cast %5 : vector<1x256x128xbf16> to vector<256x128xbf16>
    %cst = arith.constant dense<0.000000e+00> : vector<128x128xf32>
    %7 = tpu.matmul %4, %6, %cst {dimension_numbers = #tpu.dot_dimension_numbers<[1], [0], [0], [1], [0, 0, 1, 1], [], []>} : vector<128x256xbf16>, vector<256x128xbf16>, vector<128x128xf32> -> vector<128x128xf32>
    %c0_5 = arith.constant 0 : index
    %c0_6 = arith.constant 0 : index
    %c0_7 = arith.constant 0 : index
    %8 = vector.load %arg10[%c0_5, %c0_6, %c0_7] : memref<1x1x128xf32, #tpu.memory_space<vmem>>, vector<1x1x128xf32>
    %9 = vector.shape_cast %8 : vector<1x1x128xf32> to vector<1x128xf32>
    %10 = vector.broadcast %9 : vector<1x128xf32> to vector<128x128xf32>
    %11 = arith.addf %7, %10 : vector<128x128xf32>
    %12 = tpu.iota {dimensions = array<i32: 1>} : vector<128x4xi32>
    %13 = vector.broadcast %arg2 : i32 to vector<128x4xi32>
    %14 = arith.cmpi eq, %12, %13 : vector<128x4xi32>
    %c0_8 = arith.constant 0 : index
    %c0_9 = arith.constant 0 : index
    %15 = vector.load %arg14[%c0_8, %c0_9] : memref<128x4xf32, #tpu.memory_space<vmem>>, vector<128x4xf32>
    %cst_10 = arith.constant 0.000000e+00 : f32
    %16 = vector.broadcast %cst_10 : f32 to vector<128x4xf32>
    %17 = arith.select %14, %15, %16 : vector<128x4xi1>, vector<128x4xf32>
    %cst_11 = arith.constant dense<0.000000e+00> : vector<128xf32>
    %18 = vector.multi_reduction <add>, %17, %cst_11 [1] : vector<128x4xf32> to vector<128xf32>
    %19 = vector.shape_cast %18 : vector<128xf32> to vector<128x1xf32>
    %c0_12 = arith.constant 0 : index
    %c0_13 = arith.constant 0 : index
    %20 = vector.load %arg13[%c0_12, %c0_13] : memref<128x128xf32, #tpu.memory_space<vmem>>, vector<128x128xf32>
    %21 = vector.broadcast %19 : vector<128x1xf32> to vector<128x128xf32>
    %22 = arith.mulf %11, %21 : vector<128x128xf32>
    %23 = arith.addf %20, %22 : vector<128x128xf32>
    %c0_14 = arith.constant 0 : index
    %c0_15 = arith.constant 0 : index
    %24 = vector.load %arg13[%c0_14, %c0_15] : memref<128x128xf32, #tpu.memory_space<vmem>>, vector<128x128xf32>
    tpu.vector_store %arg13[%c0_14, %c0_15], %23 {strides = array<i32>} : memref<128x128xf32, #tpu.memory_space<vmem>>, vector<128x128xf32>,
    %c3_i32 = arith.constant 3 : i32
    %25 = arith.cmpi eq, %arg2, %c3_i32 : i32
    %26 = arith.extui %25 : i1 to i32
    %c0_i32_16 = arith.constant 0 : i32
    %27 = arith.cmpi ne, %26, %c0_i32_16 : i32
    scf.if %27 {
      %c0_17 = arith.constant 0 : index
      %c0_18 = arith.constant 0 : index
      %28 = vector.load %arg13[%c0_17, %c0_18] : memref<128x128xf32, #tpu.memory_space<vmem>>, vector<128x128xf32>
      %c0_19 = arith.constant 0 : index
      %c0_20 = arith.constant 0 : index
      %29 = vector.load %arg11[%c0_19, %c0_20] : memref<128x128xf32, #tpu.memory_space<vmem>>, vector<128x128xf32>
      tpu.vector_store %arg11[%c0_19, %c0_20], %28 {strides = array<i32>} : memref<128x128xf32, #tpu.memory_space<vmem>>, vector<128x128xf32>,
    } else {
    }
    return
  }
  func.func @transform_0(%arg0: i32, %arg1: i32, %arg2: i32) -> (i32, i32) {
    %c0_i32 = arith.constant 0 : i32
    %c0_i32_0 = arith.constant 0 : i32
    return %arg0, %c0_i32 : i32, i32
  }
  func.func @transform_1(%arg0: i32, %arg1: i32, %arg2: i32) -> (i32, i32) {
    %c0_i32 = arith.constant 0 : i32
    %c0_i32_0 = arith.constant 0 : i32
    return %arg0, %c0_i32 : i32, i32
  }
  func.func @transform_2(%arg0: i32, %arg1: i32, %arg2: i32) -> (i32, i32) {
    %c0_i32 = arith.constant 0 : i32
    %c0_i32_0 = arith.constant 0 : i32
    %c0_i32_1 = arith.constant 0 : i32
    return %c0_i32, %c0_i32_0 : i32, i32
  }
  func.func @transform_3(%arg0: i32, %arg1: i32, %arg2: i32) -> (i32, i32) {
    %c0_i32 = arith.constant 0 : i32
    %c0_i32_0 = arith.constant 0 : i32
    %c0_i32_1 = arith.constant 0 : i32
    return %c0_i32, %c0_i32_0 : i32, i32
  }
  func.func @transform_4(%arg0: i32, %arg1: i32, %arg2: i32) -> (i32, i32) {
    %c0_i32 = arith.constant 0 : i32
    %c0_i32_0 = arith.constant 0 : i32
    %c0_i32_1 = arith.constant 0 : i32
    return %c0_i32, %c0_i32_0 : i32, i32
  }
  func.func @transform_5(%arg0: i32, %arg1: i32, %arg2: i32) -> (i32, i32) {
    %c0_i32 = arith.constant 0 : i32
    %c0_i32_0 = arith.constant 0 : i32
    %c0_i32_1 = arith.constant 0 : i32
    return %c0_i32, %c0_i32_0 : i32, i32
  }
  func.func @transform_6(%arg0: i32, %arg1: i32, %arg2: i32) -> (i32, i32, i32) {
    %c0_i32 = arith.constant 0 : i32
    %c0_i32_0 = arith.constant 0 : i32
    return %arg2, %c0_i32, %arg1 : i32, i32, i32
  }
  func.func @transform_7(%arg0: i32, %arg1: i32, %arg2: i32) -> (i32, i32, i32) {
    %c0_i32 = arith.constant 0 : i32
    %c0_i32_0 = arith.constant 0 : i32
    return %arg2, %c0_i32, %arg1 : i32, i32, i32
  }
  func.func @transform_8(%arg0: i32, %arg1: i32, %arg2: i32) -> (i32, i32) {
    %c0_i32 = arith.constant 0 : i32
    return %arg0, %arg1 : i32, i32
  }
  func.func @transform_9(%arg0: i32, %arg1: i32, %arg2: i32) -> (i32, i32) {
    %c0_i32 = arith.constant 0 : i32
    %c0_i32_0 = arith.constant 0 : i32
    return %arg0, %c0_i32 : i32, i32
  }
}

</mosaic_0001>

<llo_original>
// kernel: tpu_custom_call.1
$region0: #{tpu_custom_call.1}
  #allocation0 [shape = 'u32[]', space=smem, size = 0x4, offset = 0x4, fixed_abs, tag = 'smem constant byte address 0x4 - core index']
  #allocation1 [shape = 'u32[144,128]{1,0:T(1,128)}', space=vmem, size = 0x12000, scoped, tag = 'internal scratch']
  #allocation2 [shape = 'f32[128,128]{1,0:T(8,128)}', space=vmem, size = 0x10000, scoped, tag = 'scratch operand']
  #allocation3 [shape = 'f32[128,4]{1,0:T(8,128)}', space=vmem, size = 0x10000, scoped, tag = 'scratch operand']
  %s0 = inlined_call_operand.hbm [shape: f32[256,256], index: 0, kind: input, shape index: {}]
  %s1 = inlined_call_operand.hbm [shape: s32[256,1], index: 1, kind: input, shape index: {}]
  %s2 = inlined_call_operand.hbm [shape: f32[3,256], index: 2, kind: input, shape index: {}]
  %s3 = inlined_call_operand.hbm [shape: f32[256,4], index: 3, kind: input, shape index: {}]
  %s4 = inlined_call_operand.hbm [shape: f32[256,4], index: 4, kind: input, shape index: {}]
  %s5 = inlined_call_operand.hbm [shape: f32[1,4], index: 5, kind: input, shape index: {}]
  %s6 = inlined_call_operand.hbm [shape: bf16[4,256,256], index: 6, kind: input, shape index: {}]
  %s7 = inlined_call_operand.hbm [shape: f32[4,1,256], index: 7, kind: input, shape index: {}]
  %s8 = inlined_call_operand.hbm [shape: f32[256,256], index: 8, kind: output, shape index: {0}]
  %s9 = inlined_call_operand.hbm [shape: s32[256,128], index: 9, kind: output, shape index: {1}]
  %10 = xla_tuple %s8, %s9
  %s11 = sld [smem:[#allocation0]]
  $region113: #{tpu_custom_call.1} parent=0
    _
  %s13 = ssub.s32 1, %s11
  %s14 = scalar_select 0, %s13, %s11
  $region1: #{tpu_custom_call.1} parent=0
    #allocation4 [shape = 'u8[262144]{0}', space=vmem, size = 0x40000, scoped, tag = 'input window, operand 0']
    #allocation5 [shape = 's32[2]{0}', space=sflag, size = 0x8, scoped, tag = 'scoped memory for tpu_custom_call.1']
    #allocation6 [shape = 's32[2]{0}', space=sflag, size = 0x8, scoped, tag = 'scoped memory for tpu_custom_call.1']
    #allocation7 [shape = 'u8[131072]{0}', space=vmem, size = 0x20000, scoped, tag = 'input window, operand 1']
    #allocation8 [shape = 's32[2]{0}', space=sflag, size = 0x8, scoped, tag = 'scoped memory for tpu_custom_call.1']
    #allocation9 [shape = 'u8[4096]{0}', space=vmem, size = 0x1000, scoped, tag = 'input window, operand 2, single buffered']
    #allocation10 [shape = 'u8[131072]{0}', space=vmem, size = 0x20000, scoped, tag = 'input window, operand 3, single buffered']
    #allocation11 [shape = 's32[1]{0}', space=sflag, size = 0x4, scoped, tag = 'scoped memory for tpu_custom_call.1']
    #allocation12 [shape = 'u8[131072]{0}', space=vmem, size = 0x20000, scoped, tag = 'input window, operand 4, single buffered']
    #allocation13 [shape = 'u8[512]{0}', space=vmem, size = 0x400, scoped, tag = 'input window, operand 5, single buffered']
    #allocation14 [shape = 's32[1]{0}', space=sflag, size = 0x4, scoped, tag = 'scoped memory for tpu_custom_call.1']
    #allocation15 [shape = 'u8[131072]{0}', space=vmem, size = 0x20000, scoped, tag = 'input window, operand 6']
    #allocation16 [shape = 'u8[1024]{0}', space=vmem, size = 0x400, scoped, tag = 'input window, operand 7']
    #allocation17 [shape = 'u8[131072]{0}', space=vmem, size = 0x20000, scoped, tag = 'output window, operand 0']
    #allocation18 [shape = 'u8[131072]{0}', space=vmem, size = 0x20000, scoped, tag = 'output window, operand 1']
    #allocation19 [shape = 's32[2]{0}', space=sflag, size = 0x8, scoped, tag = 'scoped memory for tpu_custom_call.1']
    %15 = vsyncpa [#allocation5], 0
    %s16 = scalar_lea.sflag [#allocation5], 1
    %17 = vsyncpa %s16, 0
    %18 = vsyncpa [#allocation8], 0
    %s19 = scalar_lea.sflag [#allocation8], 1
    %20 = vsyncpa %s19, 0
    %21 = vsyncpa [#allocation11], 0
    %22 = vsyncpa [#allocation14], 0
    %23 = vsyncpa [#allocation6], 0
    %s24 = scalar_lea.sflag [#allocation6], 1
    %25 = vsyncpa %s24, 0
    %26 = vsyncpa [#allocation19], 0
    %s27 = scalar_lea.sflag [#allocation19], 1
    %28 = vsyncpa %s27, 0
    loop: start=0, step=1, limit=18
    $region2: #{tpu_custom_call.1} parent=1 // loop_pre_header
      _
    $region3: #{tpu_custom_call.1} parent=1 // loop_header
      %s30 = sphi 0, %s34
      %p31 = scmp.ge.s32.totalorder %s30, 18
      %s37 = sphi 0, %s56
      %s38 = sphi 0, %s52
      %s39 = sphi 0, %s48
      %s40 = sphi 0, %s37
      %s41 = sphi 0, %s38
      %s42 = sphi 0, %s39
      %s43 = sphi 0, %s40
      %s44 = sphi 0, %s41
      %s45 = sphi 0, %s42
      %s59 = sphi 0, %s61
      %s62 = sphi 0, %s59
      %s63 = sphi 0, %s62
      %s79 = sphi 0, %s63
      %s85 = sphi 0, %s87
      %s88 = sphi 0, %s85
      %s89 = sphi 0, %s88
      %s105 = sphi 0, %s89
      %s109 = sphi 0, %s109
      %s111 = sphi 0, %s109
      %s112 = sphi 0, %s111
      %s126 = sphi 0, %s112
      %s130 = sphi 0, %s130
      %s132 = sphi 0, %s130
      %s133 = sphi 0, %s132
      %s147 = sphi 0, %s133
      %s151 = sphi 0, %s151
      %s153 = sphi 0, %s151
      %s154 = sphi 0, %s153
      %s168 = sphi 0, %s154
      %s172 = sphi 0, %s172
      %s174 = sphi 0, %s172
      %s175 = sphi 0, %s174
      %s189 = sphi 0, %s175
      %s197 = sphi 0, %s199
      %s200 = sphi 0, %s197
      %s201 = sphi 0, %s200
      %s217 = sphi 0, %s201
      %s225 = sphi 0, %s227
      %s228 = sphi 0, %s225
      %s229 = sphi 0, %s228
      %s245 = sphi 0, %s229
      %s253 = sphi 0, %s255
      %s256 = sphi 0, %s253
      %s257 = sphi 0, %s256
      %s273 = sphi 0, %s257
      %s279 = sphi 0, %s281
      %s282 = sphi 0, %s279
      %s283 = sphi 0, %s282
      %s299 = sphi 0, %s283
    $region4: #{tpu_custom_call.1} parent=1 // loop_header_branch
      %33 = sbr.rel (%p31) target = $region8
    $region5: #{tpu_custom_call.1} parent=1 // loop_body
      %s35 = ssub.s32 %s30, 1
      %s36 = ssub.s32 %s30, 2
      %s46 = sadd.s32 1, %s39
      %p47 = scmp.ge.s32.totalorder %s46, 4
      %s48 = scalar_select %p47, 0, %s46
      %s49 = sadd.s32 1, %s38
      %s50 = scalar_select %p47, %s49, %s38
      %p51 = scmp.ge.s32.totalorder %s50, 2
      %s52 = scalar_select %p51, 0, %s50
      %s53 = sadd.s32 1, %s37
      %s54 = scalar_select %p51, %s53, %s37
      %p55 = scmp.ge.s32.totalorder %s54, 2
      %s56 = scalar_select %p55, 0, %s54
      %s57 = ssub.s32 %s37, %s56
      %p58 = scmp.eq.s32.totalorder %s57, 0
      %s60 = sadd.s32 %s59, 1
      %s61 = scalar_select %p58, %s59, %s60
      %p64 = pneg %p58
      %p65 = scmp.eq.s32.totalorder %s30, 15
      %p66 = por %p64, %p65
      %p67 = scmp.ne.s32.totalorder %s59, %s62
      %p68 = scmp.eq.s32.totalorder %s30, 0
      %p69 = por %p67, %p68
      %p70 = scmp.ne.s32.totalorder %s59, %s62
      %p71 = scmp.eq.s32.totalorder %s35, 15
      %p72 = por %p70, %p71
      %p73 = scmp.ne.s32.totalorder %s62, %s63
      %p74 = scmp.eq.s32.totalorder %s35, 0
      %p75 = por %p73, %p74
      %p76 = scmp.ne.s32.totalorder %s62, %s63
      %p77 = scmp.eq.s32.totalorder %s36, 15
      %p78 = por %p76, %p77
      %p80 = scmp.ne.s32.totalorder %s63, %s79
      %p81 = scmp.eq.s32.totalorder %s36, 0
      %p82 = por %p80, %p81
      %s83 = ssub.s32 %s37, %s56
      %p84 = scmp.eq.s32.totalorder %s83, 0
      %s86 = sadd.s32 %s85, 1
      %s87 = scalar_select %p84, %s85, %s86
      %p90 = pneg %p84
      %p91 = scmp.eq.s32.totalorder %s30, 15
      %p92 = por %p90, %p91
      %p93 = scmp.ne.s32.totalorder %s85, %s88
      %p94 = scmp.eq.s32.totalorder %s30, 0
      %p95 = por %p93, %p94
      %p96 = scmp.ne.s32.totalorder %s85, %s88
      %p97 = scmp.eq.s32.totalorder %s35, 15
      %p98 = por %p96, %p97
      %p99 = scmp.ne.s32.totalorder %s88, %s89
      %p100 = scmp.eq.s32.totalorder %s35, 0
      %p101 = por %p99, %p100
      %p102 = scmp.ne.s32.totalorder %s88, %s89
      %p103 = scmp.eq.s32.totalorder %s36, 15
      %p104 = por %p102, %p103
      %p106 = scmp.ne.s32.totalorder %s89, %s105
      %p107 = scmp.eq.s32.totalorder %s36, 0
      %p108 = por %p106, %p107
      %s110 = sadd.s32 %s109, 1
      %p113 = scmp.eq.s32.totalorder %s30, 15
      %p114 = scmp.ne.s32.totalorder %s109, %s111
      %p115 = scmp.eq.s32.totalorder %s30, 0
      %p116 = por %p114, %p115
      %p117 = scmp.ne.s32.totalorder %s109, %s111
      %p118 = scmp.eq.s32.totalorder %s35, 15
      %p119 = por %p117, %p118
      %p120 = scmp.ne.s32.totalorder %s111, %s112
      %p121 = scmp.eq.s32.totalorder %s35, 0
      %p122 = por %p120, %p121
      %p123 = scmp.ne.s32.totalorder %s111, %s112
      %p124 = scmp.eq.s32.totalorder %s36, 15
      %p125 = por %p123, %p124
      %p127 = scmp.ne.s32.totalorder %s112, %s126
      %p128 = scmp.eq.s32.totalorder %s36, 0
      %p129 = por %p127, %p128
      %s131 = sadd.s32 %s130, 1
      %p134 = scmp.eq.s32.totalorder %s30, 15
      %p135 = scmp.ne.s32.totalorder %s130, %s132
      %p136 = scmp.eq.s32.totalorder %s30, 0
      %p137 = por %p135, %p136
      %p138 = scmp.ne.s32.totalorder %s130, %s132
      %p139 = scmp.eq.s32.totalorder %s35, 15
      %p140 = por %p138, %p139
      %p141 = scmp.ne.s32.totalorder %s132, %s133
      %p142 = scmp.eq.s32.totalorder %s35, 0
      %p143 = por %p141, %p142
      %p144 = scmp.ne.s32.totalorder %s132, %s133
      %p145 = scmp.eq.s32.totalorder %s36, 15
      %p146 = por %p144, %p145
      %p148 = scmp.ne.s32.totalorder %s133, %s147
      %p149 = scmp.eq.s32.totalorder %s36, 0
      %p150 = por %p148, %p149
      %s152 = sadd.s32 %s151, 1
      %p155 = scmp.eq.s32.totalorder %s30, 15
      %p156 = scmp.ne.s32.totalorder %s151, %s153
      %p157 = scmp.eq.s32.totalorder %s30, 0
      %p158 = por %p156, %p157
      %p159 = scmp.ne.s32.totalorder %s151, %s153
      %p160 = scmp.eq.s32.totalorder %s35, 15
      %p161 = por %p159, %p160
      %p162 = scmp.ne.s32.totalorder %s153, %s154
      %p163 = scmp.eq.s32.totalorder %s35, 0
      %p164 = por %p162, %p163
      %p165 = scmp.ne.s32.totalorder %s153, %s154
      %p166 = scmp.eq.s32.totalorder %s36, 15
      %p167 = por %p165, %p166
      %p169 = scmp.ne.s32.totalorder %s154, %s168
      %p170 = scmp.eq.s32.totalorder %s36, 0
      %p171 = por %p169, %p170
      %s173 = sadd.s32 %s172, 1
      %p176 = scmp.eq.s32.totalorder %s30, 15
      %p177 = scmp.ne.s32.totalorder %s172, %s174
      %p178 = scmp.eq.s32.totalorder %s30, 0
      %p179 = por %p177, %p178
      %p180 = scmp.ne.s32.totalorder %s172, %s174
      %p181 = scmp.eq.s32.totalorder %s35, 15
      %p182 = por %p180, %p181
      %p183 = scmp.ne.s32.totalorder %s174, %s175
      %p184 = scmp.eq.s32.totalorder %s35, 0
      %p185 = por %p183, %p184
      %p186 = scmp.ne.s32.totalorder %s174, %s175
      %p187 = scmp.eq.s32.totalorder %s36, 15
      %p188 = por %p186, %p187
      %p190 = scmp.ne.s32.totalorder %s175, %s189
      %p191 = scmp.eq.s32.totalorder %s36, 0
      %p192 = por %p190, %p191
      %s193 = ssub.s32 %s39, %s48
      %s194 = ssub.s32 %s38, %s52
      %s195 = sor.u32 %s193, %s194
      %p196 = scmp.eq.s32.totalorder %s195, 0
      %s198 = sadd.s32 %s197, 1
      %s199 = scalar_select %p196, %s197, %s198
      %p202 = pneg %p196
      %p203 = scmp.eq.s32.totalorder %s30, 15
      %p204 = por %p202, %p203
      %p205 = scmp.ne.s32.totalorder %s197, %s200
      %p206 = scmp.eq.s32.totalorder %s30, 0
      %p207 = por %p205, %p206
      %p208 = scmp.ne.s32.totalorder %s197, %s200
      %p209 = scmp.eq.s32.totalorder %s35, 15
      %p210 = por %p208, %p209
      %p211 = scmp.ne.s32.totalorder %s200, %s201
      %p212 = scmp.eq.s32.totalorder %s35, 0
      %p213 = por %p211, %p212
      %p214 = scmp.ne.s32.totalorder %s200, %s201
      %p215 = scmp.eq.s32.totalorder %s36, 15
      %p216 = por %p214, %p215
      %p218 = scmp.ne.s32.totalorder %s201, %s217
      %p219 = scmp.eq.s32.totalorder %s36, 0
      %p220 = por %p218, %p219
      %s221 = ssub.s32 %s39, %s48
      %s222 = ssub.s32 %s38, %s52
      %s223 = sor.u32 %s221, %s222
      %p224 = scmp.eq.s32.totalorder %s223, 0
      %s226 = sadd.s32 %s225, 1
      %s227 = scalar_select %p224, %s225, %s226
      %p230 = pneg %p224
      %p231 = scmp.eq.s32.totalorder %s30, 15
      %p232 = por %p230, %p231
      %p233 = scmp.ne.s32.totalorder %s225, %s228
      %p234 = scmp.eq.s32.totalorder %s30, 0
      %p235 = por %p233, %p234
      %p236 = scmp.ne.s32.totalorder %s225, %s228
      %p237 = scmp.eq.s32.totalorder %s35, 15
      %p238 = por %p236, %p237
      %p239 = scmp.ne.s32.totalorder %s228, %s229
      %p240 = scmp.eq.s32.totalorder %s35, 0
      %p241 = por %p239, %p240
      %p242 = scmp.ne.s32.totalorder %s228, %s229
      %p243 = scmp.eq.s32.totalorder %s36, 15
      %p244 = por %p242, %p243
      %p246 = scmp.ne.s32.totalorder %s229, %s245
      %p247 = scmp.eq.s32.totalorder %s36, 0
      %p248 = por %p246, %p247
      %s249 = ssub.s32 %s37, %s56
      %s250 = ssub.s32 %s38, %s52
      %s251 = sor.u32 %s249, %s250
      %p252 = scmp.eq.s32.totalorder %s251, 0
      %s254 = sadd.s32 %s253, 1
      %s255 = scalar_select %p252, %s253, %s254
      %p258 = pneg %p252
      %p259 = scmp.eq.s32.totalorder %s30, 15
      %p260 = por %p258, %p259
      %p261 = scmp.ne.s32.totalorder %s253, %s256
      %p262 = scmp.eq.s32.totalorder %s30, 0
      %p263 = por %p261, %p262
      %p264 = scmp.ne.s32.totalorder %s253, %s256
      %p265 = scmp.eq.s32.totalorder %s35, 15
      %p266 = por %p264, %p265
      %p267 = scmp.ne.s32.totalorder %s256, %s257
      %p268 = scmp.eq.s32.totalorder %s35, 0
      %p269 = por %p267, %p268
      %p270 = scmp.ne.s32.totalorder %s256, %s257
      %p271 = scmp.eq.s32.totalorder %s36, 15
      %p272 = por %p270, %p271
      %p274 = scmp.ne.s32.totalorder %s257, %s273
      %p275 = scmp.eq.s32.totalorder %s36, 0
      %p276 = por %p274, %p275
      %s277 = ssub.s32 %s37, %s56
      %p278 = scmp.eq.s32.totalorder %s277, 0
      %s280 = sadd.s32 %s279, 1
      %s281 = scalar_select %p278, %s279, %s280
      %p284 = pneg %p278
      %p285 = scmp.eq.s32.totalorder %s30, 15
      %p286 = por %p284, %p285
      %p287 = scmp.ne.s32.totalorder %s279, %s282
      %p288 = scmp.eq.s32.totalorder %s30, 0
      %p289 = por %p287, %p288
      %p290 = scmp.ne.s32.totalorder %s279, %s282
      %p291 = scmp.eq.s32.totalorder %s35, 15
      %p292 = por %p290, %p291
      %p293 = scmp.ne.s32.totalorder %s282, %s283
      %p294 = scmp.eq.s32.totalorder %s35, 0
      %p295 = por %p293, %p294
      %p296 = scmp.ne.s32.totalorder %s282, %s283
      %p297 = scmp.eq.s32.totalorder %s36, 15
      %p298 = por %p296, %p297
      %p300 = scmp.ne.s32.totalorder %s283, %s299
      %p301 = scmp.eq.s32.totalorder %s36, 0
      %p302 = por %p300, %p301
      %p303 = scmp.le.s32.totalorder 1, %s30
      %p304 = scmp.lt.s32.totalorder %s30, 17
      %p305 = pnand %p303, %p304
      %p306 = pneg %p305
      // Predicated region
      $region9: #{tpu_custom_call.1} parent=5 // pred_check
        _
      $region10: #{tpu_custom_call.1} parent=5 // pred_check_branch
        %308 = sbr.rel (%p305) target = $region12
      $region11: #{tpu_custom_call.1} parent=5 // pred_region
        %s309 = ssub.s32 %s30, 1
        // Predicated region
        $region13: #{tpu_custom_call.1} parent=11 // pred_check
          %p310 = pneg %p122
        $region14: #{tpu_custom_call.1} parent=11 // pred_check_branch
          %312 = sbr.rel (%p310) target = $region16
        $region15: #{tpu_custom_call.1} parent=11 // pred_region
          %s314 = ssub.s32 128, 128
          %315 = vsyncadd [#allocation8], %s314
          %s317 = sshll.u32 [#allocation9], 4
          %s318 = int_to_ptr.vmem [resolvable:$true] %s317
          %320 = dma.hbm_to_vmem [thread:$0]  %s2, 128, %s318, [#allocation8]
        $region16: #{tpu_custom_call.1} parent=11 // pred_fallthru
          _
        // Predicated region
        $region17: #{tpu_custom_call.1} parent=11 // pred_check
          %p321 = pneg %p143
        $region18: #{tpu_custom_call.1} parent=11 // pred_check_branch
          %323 = sbr.rel (%p321) target = $region20
        $region19: #{tpu_custom_call.1} parent=11 // pred_region
          %s325 = ssub.s32 4096, 4096
          %326 = vsyncadd [#allocation11], %s325
          %s327 = sshll.u32 [#allocation10], 4
          %s328 = int_to_ptr.vmem [resolvable:$true] %s327
          %333 = dma.hbm_to_vmem [thread:$0]  %s3, 4096, %s328, [#allocation11], 128, 128, 8
        $region20: #{tpu_custom_call.1} parent=11 // pred_fallthru
          _
        // Predicated region
        $region21: #{tpu_custom_call.1} parent=11 // pred_check
          %p334 = pneg %p164
        $region22: #{tpu_custom_call.1} parent=11 // pred_check_branch
          %336 = sbr.rel (%p334) target = $region24
        $region23: #{tpu_custom_call.1} parent=11 // pred_region
          %s338 = ssub.s32 4096, 4096
          %339 = vsyncadd [#allocation11], %s338
          %s340 = sshll.u32 [#allocation12], 4
          %s341 = int_to_ptr.vmem [resolvable:$true] %s340
          %346 = dma.hbm_to_vmem [thread:$0]  %s4, 4096, %s341, [#allocation11], 128, 128, 8
        $region24: #{tpu_custom_call.1} parent=11 // pred_fallthru
          _
        // Predicated region
        $region25: #{tpu_custom_call.1} parent=11 // pred_check
          %p347 = pneg %p185
        $region26: #{tpu_custom_call.1} parent=11 // pred_check_branch
          %349 = sbr.rel (%p347) target = $region28
        $region27: #{tpu_custom_call.1} parent=11 // pred_region
          %s351 = ssub.s32 16, 16
          %352 = vsyncadd [#allocation14], %s351
          %s354 = sshll.u32 [#allocation13], 4
          %s355 = int_to_ptr.vmem [resolvable:$true] %s354
          %357 = dma.hbm_to_vmem [thread:$0]  %s5, 16, %s355, [#allocation14]
        $region28: #{tpu_custom_call.1} parent=11 // pred_fallthru
          _
      $region12: #{tpu_custom_call.1} parent=5 // pred_fallthru
        _
      %p358 = scmp.lt.s32.totalorder %s30, 16
      // Predicated region
      $region29: #{tpu_custom_call.1} parent=5 // pred_check
        %p359 = pneg %p358
      $region30: #{tpu_custom_call.1} parent=5 // pred_check_branch
        %361 = sbr.rel (%p359) target = $region32
      $region31: #{tpu_custom_call.1} parent=5 // pred_region
        // Predicated region
        $region33: #{tpu_custom_call.1} parent=31 // pred_check
          %p362 = pneg %p69
        $region34: #{tpu_custom_call.1} parent=31 // pred_check_branch
          %364 = sbr.rel (%p362) target = $region36
        $region35: #{tpu_custom_call.1} parent=31 // pred_region
          %s365 = sand.u32 %s30, 1
          %s366 = scalar_lea.sflag [#allocation5], %s365
          %s367 = sand.u32 %s59, 1
          %s368 = smul.addr %s367, 256
          %s369 = scalar_lea.vmem [#allocation4], %s368
          %s370 = smul.u32 16, %s37
          %s372 = ssub.s32 4096, 4096
          %373 = vsyncadd %s366, %s372
          %s374 = smul.addr %s370, 2
          %s375 = smul.addr %s374, 128
          %s376 = scalar_lea.hbm %s0, %s375
          %s377 = sshll.u32 %s369, 4
          %s378 = int_to_ptr.vmem [resolvable:$true] %s377
          %383 = dma.hbm_to_vmem [thread:$0]  %s376, 4096, %s378, %s366, 256, 256, 16
        $region36: #{tpu_custom_call.1} parent=31 // pred_fallthru
          _
        // Predicated region
        $region37: #{tpu_custom_call.1} parent=31 // pred_check
          %p384 = pneg %p95
        $region38: #{tpu_custom_call.1} parent=31 // pred_check_branch
          %386 = sbr.rel (%p384) target = $region40
        $region39: #{tpu_custom_call.1} parent=31 // pred_region
          %s387 = sand.u32 %s30, 1
          %s388 = scalar_lea.sflag [#allocation8], %s387
          %s389 = sand.u32 %s85, 1
          %s390 = smul.addr %s389, 128
          %s391 = scalar_lea.vmem [#allocation7], %s390
          %s392 = smul.u32 16, %s37
          %s394 = ssub.s32 2048, 2048
          %395 = vsyncadd %s388, %s394
          %s396 = smul.addr %s392, 128
          %s397 = scalar_lea.hbm %s1, %s396
          %s398 = sshll.u32 %s391, 4
          %s399 = int_to_ptr.vmem [resolvable:$true] %s398
          %404 = dma.hbm_to_vmem [thread:$0]  %s397, 2048, %s399, %s388, 128, 128, 8
        $region40: #{tpu_custom_call.1} parent=31 // pred_fallthru
          _
        // Predicated region
        $region41: #{tpu_custom_call.1} parent=31 // pred_check
          %p405 = pneg %p207
        $region42: #{tpu_custom_call.1} parent=31 // pred_check_branch
          %407 = sbr.rel (%p405) target = $region44
        $region43: #{tpu_custom_call.1} parent=31 // pred_region
          %s408 = sand.u32 %s30, 1
          %s409 = scalar_lea.sflag [#allocation5], %s408
          %s410 = sand.u32 %s197, 1
          %s411 = smul.addr %s410, 128
          %s412 = scalar_lea.vmem [#allocation15], %s411
          %s414 = ssub.s32 2048, 2048
          %415 = vsyncadd %s409, %s414
          %s416 = smul.addr %s39, 64
          %s417 = sadd.s32 %s38, %s416
          %s418 = smul.addr %s417, 64
          %s419 = scalar_lea.hbm %s6, %s418
          %s420 = sshll.u32 %s412, 4
          %s421 = int_to_ptr.vmem [resolvable:$true] %s420
          %426 = dma.hbm_to_vmem [thread:$0]  %s419, 2048, %s421, %s409, 128, 64, 4
        $region44: #{tpu_custom_call.1} parent=31 // pred_fallthru
          _
        // Predicated region
        $region45: #{tpu_custom_call.1} parent=31 // pred_check
          %p427 = pneg %p235
        $region46: #{tpu_custom_call.1} parent=31 // pred_check_branch
          %429 = sbr.rel (%p427) target = $region48
        $region47: #{tpu_custom_call.1} parent=31 // pred_region
          %s430 = sand.u32 %s30, 1
          %s431 = scalar_lea.sflag [#allocation8], %s430
          %s432 = sand.u32 %s225, 1
          %s433 = scalar_lea.vmem [#allocation16], %s432
          %s435 = ssub.s32 16, 16
          %436 = vsyncadd %s431, %s435
          %s437 = smul.addr %s39, 2
          %s438 = sadd.s32 %s38, %s437
          %s439 = smul.addr %s438, 16
          %s440 = scalar_lea.hbm %s7, %s439
          %s442 = sshll.u32 %s433, 4
          %s443 = int_to_ptr.vmem [resolvable:$true] %s442
          %445 = dma.hbm_to_vmem [thread:$0]  %s440, 16, %s443, %s431
        $region48: #{tpu_custom_call.1} parent=31 // pred_fallthru
          _
      $region32: #{tpu_custom_call.1} parent=5 // pred_fallthru
        _
      %p446 = scmp.le.s32.totalorder 1, %s30
      %p447 = scmp.lt.s32.totalorder %s30, 17
      %p448 = pnand %p446, %p447
      %p449 = pneg %p448
      // Predicated region
      $region49: #{tpu_custom_call.1} parent=5 // pred_check
        _
      $region50: #{tpu_custom_call.1} parent=5 // pred_check_branch
        %451 = sbr.rel (%p448) target = $region52
      $region51: #{tpu_custom_call.1} parent=5 // pred_region
        %s452 = ssub.s32 %s30, 1
        %s453 = sand.u32 %s35, 1
        %s454 = scalar_lea.sflag [#allocation5], %s453
        %s455 = sand.u32 %s62, 1
        %s456 = smul.addr %s455, 256
        %s457 = scalar_lea.vmem [#allocation4], %s456
        // Predicated region
        $region53: #{tpu_custom_call.1} parent=51 // pred_check
          %p458 = pneg %p75
        $region54: #{tpu_custom_call.1} parent=51 // pred_check_branch
          %460 = sbr.rel (%p458) target = $region56
        $region55: #{tpu_custom_call.1} parent=51 // pred_region
          %461 = dma.done %s454, 4096
        $region56: #{tpu_custom_call.1} parent=51 // pred_fallthru
          _
        %s462 = sand.u32 %s35, 1
        %s463 = scalar_lea.sflag [#allocation8], %s462
        %s464 = sand.u32 %s88, 1
        %s465 = smul.addr %s464, 128
        %s466 = scalar_lea.vmem [#allocation7], %s465
        // Predicated region
        $region57: #{tpu_custom_call.1} parent=51 // pred_check
          %p467 = pneg %p101
        $region58: #{tpu_custom_call.1} parent=51 // pred_check_branch
          %469 = sbr.rel (%p467) target = $region60
        $region59: #{tpu_custom_call.1} parent=51 // pred_region
          %470 = dma.done %s463, 2048
        $region60: #{tpu_custom_call.1} parent=51 // pred_fallthru
          _
        // Predicated region
        $region61: #{tpu_custom_call.1} parent=51 // pred_check
          %p471 = pneg %p122
        $region62: #{tpu_custom_call.1} parent=51 // pred_check_branch
          %473 = sbr.rel (%p471) target = $region64
        $region63: #{tpu_custom_call.1} parent=51 // pred_region
          %474 = dma.done [#allocation8], 128
        $region64: #{tpu_custom_call.1} parent=51 // pred_fallthru
          _
        // Predicated region
        $region65: #{tpu_custom_call.1} parent=51 // pred_check
          %p475 = pneg %p143
        $region66: #{tpu_custom_call.1} parent=51 // pred_check_branch
          %477 = sbr.rel (%p475) target = $region68
        $region67: #{tpu_custom_call.1} parent=51 // pred_region
          %478 = dma.done [#allocation11], 4096
        $region68: #{tpu_custom_call.1} parent=51 // pred_fallthru
          _
        // Predicated region
        $region69: #{tpu_custom_call.1} parent=51 // pred_check
          %p479 = pneg %p164
        $region70: #{tpu_custom_call.1} parent=51 // pred_check_branch
          %481 = sbr.rel (%p479) target = $region72
        $region71: #{tpu_custom_call.1} parent=51 // pred_region
          %482 = dma.done [#allocation11], 4096
        $region72: #{tpu_custom_call.1} parent=51 // pred_fallthru
          _
        // Predicated region
        $region73: #{tpu_custom_call.1} parent=51 // pred_check
          %p483 = pneg %p185
        $region74: #{tpu_custom_call.1} parent=51 // pred_check_branch
          %485 = sbr.rel (%p483) target = $region76
        $region75: #{tpu_custom_call.1} parent=51 // pred_region
          %486 = dma.done [#allocation14], 16
        $region76: #{tpu_custom_call.1} parent=51 // pred_fallthru
          _
        %s487 = sand.u32 %s35, 1
        %s488 = scalar_lea.sflag [#allocation5], %s487
        %s489 = sand.u32 %s200, 1
        %s490 = smul.addr %s489, 128
        %s491 = scalar_lea.vmem [#allocation15], %s490
        // Predicated region
        $region77: #{tpu_custom_call.1} parent=51 // pred_check
          %p492 = pneg %p213
        $region78: #{tpu_custom_call.1} parent=51 // pred_check_branch
          %494 = sbr.rel (%p492) target = $region80
        $region79: #{tpu_custom_call.1} parent=51 // pred_region
          %495 = dma.done %s488, 2048
        $region80: #{tpu_custom_call.1} parent=51 // pred_fallthru
          _
        %s496 = sand.u32 %s35, 1
        %s497 = scalar_lea.sflag [#allocation8], %s496
        %s498 = sand.u32 %s228, 1
        %s499 = scalar_lea.vmem [#allocation16], %s498
        // Predicated region
        $region81: #{tpu_custom_call.1} parent=51 // pred_check
          %p500 = pneg %p241
        $region82: #{tpu_custom_call.1} parent=51 // pred_check_branch
          %502 = sbr.rel (%p500) target = $region84
        $region83: #{tpu_custom_call.1} parent=51 // pred_region
          %503 = dma.done %s497, 16
        $region84: #{tpu_custom_call.1} parent=51 // pred_fallthru
          _
        %s504 = sand.u32 %s35, 1
        %s505 = scalar_lea.sflag [#allocation5], %s504
        %s506 = sand.u32 %s62, 1
        %s507 = smul.addr %s506, 256
        %s508 = scalar_lea.vmem [#allocation4], %s507
        %p509 = pneg %p75
        %p510 = pneg %p72
        %s511 = sand.u32 %s35, 1
        %s512 = scalar_lea.sflag [#allocation8], %s511
        %s513 = sand.u32 %s88, 1
        %s514 = smul.addr %s513, 128
        %s515 = scalar_lea.vmem [#allocation7], %s514
        %p516 = pneg %p101
        %p517 = pneg %p98
        %p518 = pneg %p122
        %p519 = pneg %p119
        %p520 = pneg %p143
        %p521 = pneg %p140
        %p522 = pneg %p164
        %p523 = pneg %p161
        %p524 = pneg %p185
        %p525 = pneg %p182
        %s526 = sand.u32 %s35, 1
        %s527 = scalar_lea.sflag [#allocation5], %s526
        %s528 = sand.u32 %s200, 1
        %s529 = smul.addr %s528, 128
        %s530 = scalar_lea.vmem [#allocation15], %s529
        %p531 = pneg %p213
        %p532 = pneg %p210
        %s533 = sand.u32 %s35, 1
        %s534 = scalar_lea.sflag [#allocation8], %s533
        %s535 = sand.u32 %s228, 1
        %s536 = scalar_lea.vmem [#allocation16], %s535
        %p537 = pneg %p241
        %p538 = pneg %p238
        %p539 = pneg %p269
        %p540 = pneg %p266
        %s541 = sand.u32 %s256, 1
        %s542 = scalar_lea.sflag [#allocation6], %s541
        %s543 = sand.u32 %s256, 1
        %s544 = smul.addr %s543, 128
        %s545 = scalar_lea.vmem [#allocation17], %s544
        %p546 = pneg %p295
        %p547 = pneg %p292
        %s548 = sand.u32 %s282, 1
        %s549 = scalar_lea.sflag [#allocation19], %s548
        %s550 = sand.u32 %s282, 1
        %s551 = smul.addr %s550, 128
        %s552 = scalar_lea.vmem [#allocation18], %s551
        %s553 = smul.u32 16, %s40
        %s554 = smul.u32 16, %s40
        %s555 = smul.u32 16, %s40
        %s556 = smul.u32 16, %s40
        %p558 = scmp.eq.s32.totalorder %s42, 0
        // Predicated region
        $region85: #{tpu_custom_call.1} parent=51 // pred_check
          %p559 = pneg %p558
        $region86: #{tpu_custom_call.1} parent=51 // pred_check_branch
          %561 = sbr.rel (%p559) target = $region88
        $region87: #{tpu_custom_call.1} parent=51 // pred_region
          %v562 = vld [vmem:[%s457] sm:$0xff]
          %v563 = vld [vmem:[%s457 + $0x8] sm:$0xff]
          %v564 = vld [vmem:[%s457 + $0x10] sm:$0xff]
          %v565 = vld [vmem:[%s457 + $0x18] sm:$0xff]
          %v566 = vld [vmem:[%s457 + $0x20] sm:$0xff]
          %v567 = vld [vmem:[%s457 + $0x28] sm:$0xff]
          %v568 = vld [vmem:[%s457 + $0x30] sm:$0xff]
          %v569 = vld [vmem:[%s457 + $0x38] sm:$0xff]
          %v570 = vld [vmem:[%s457 + $0x40] sm:$0xff]
          %v571 = vld [vmem:[%s457 + $0x48] sm:$0xff]
          %v572 = vld [vmem:[%s457 + $0x50] sm:$0xff]
          %v573 = vld [vmem:[%s457 + $0x58] sm:$0xff]
          %v574 = vld [vmem:[%s457 + $0x60] sm:$0xff]
          %v575 = vld [vmem:[%s457 + $0x68] sm:$0xff]
          %v576 = vld [vmem:[%s457 + $0x70] sm:$0xff]
          %v577 = vld [vmem:[%s457 + $0x78] sm:$0xff]
          %v578 = vld [vmem:[%s457 + $0x80] sm:$0xff]
          %v579 = vld [vmem:[%s457 + $0x88] sm:$0xff]
          %v580 = vld [vmem:[%s457 + $0x90] sm:$0xff]
          %v581 = vld [vmem:[%s457 + $0x98] sm:$0xff]
          %v582 = vld [vmem:[%s457 + $0xa0] sm:$0xff]
          %v583 = vld [vmem:[%s457 + $0xa8] sm:$0xff]
          %v584 = vld [vmem:[%s457 + $0xb0] sm:$0xff]
          %v585 = vld [vmem:[%s457 + $0xb8] sm:$0xff]
          %v586 = vld [vmem:[%s457 + $0xc0] sm:$0xff]
          %v587 = vld [vmem:[%s457 + $0xc8] sm:$0xff]
          %v588 = vld [vmem:[%s457 + $0xd0] sm:$0xff]
          %v589 = vld [vmem:[%s457 + $0xd8] sm:$0xff]
          %v590 = vld [vmem:[%s457 + $0xe0] sm:$0xff]
          %v591 = vld [vmem:[%s457 + $0xe8] sm:$0xff]
          %v592 = vld [vmem:[%s457 + $0xf0] sm:$0xff]
          %v593 = vld [vmem:[%s457 + $0xf8] sm:$0xff]
          %v594 = vld [vmem:[%s466] sm:$0xff]
          %v595 = vld [vmem:[%s466 + $0x8] sm:$0xff]
          %v596 = vld [vmem:[%s466 + $0x10] sm:$0xff]
          %v597 = vld [vmem:[%s466 + $0x18] sm:$0xff]
          %v598 = vld [vmem:[%s466 + $0x20] sm:$0xff]
          %v599 = vld [vmem:[%s466 + $0x28] sm:$0xff]
          %v600 = vld [vmem:[%s466 + $0x30] sm:$0xff]
          %v601 = vld [vmem:[%s466 + $0x38] sm:$0xff]
          %v602 = vld [vmem:[%s466 + $0x40] sm:$0xff]
          %v603 = vld [vmem:[%s466 + $0x48] sm:$0xff]
          %v604 = vld [vmem:[%s466 + $0x50] sm:$0xff]
          %v605 = vld [vmem:[%s466 + $0x58] sm:$0xff]
          %v606 = vld [vmem:[%s466 + $0x60] sm:$0xff]
          %v607 = vld [vmem:[%s466 + $0x68] sm:$0xff]
          %v608 = vld [vmem:[%s466 + $0x70] sm:$0xff]
          %v609 = vld [vmem:[%s466 + $0x78] sm:$0xff]
          %v610 = vld [vmem:[#allocation9] ss:$4 sm:$0x3]
          %vm611 = vcmp.eq.s32.totalorder %v594, 0
          %vm612 = vcmp.eq.s32.totalorder %v595, 0
          %vm613 = vcmp.eq.s32.totalorder %v596, 0
          %vm614 = vcmp.eq.s32.totalorder %v597, 0
          %vm615 = vcmp.eq.s32.totalorder %v598, 0
          %vm616 = vcmp.eq.s32.totalorder %v599, 0
          %vm617 = vcmp.eq.s32.totalorder %v600, 0
          %vm618 = vcmp.eq.s32.totalorder %v601, 0
          %vm619 = vcmp.eq.s32.totalorder %v602, 0
          %vm620 = vcmp.eq.s32.totalorder %v603, 0
          %vm621 = vcmp.eq.s32.totalorder %v604, 0
          %vm622 = vcmp.eq.s32.totalorder %v605, 0
          %vm623 = vcmp.eq.s32.totalorder %v606, 0
          %vm624 = vcmp.eq.s32.totalorder %v607, 0
          %vm625 = vcmp.eq.s32.totalorder %v608, 0
          %vm626 = vcmp.eq.s32.totalorder %v609, 0
          %v627 = vsel %vm611, 1, 0
          %v628 = vsel %vm612, 1, 0
          %v629 = vsel %vm613, 1, 0
          %v630 = vsel %vm614, 1, 0
          %v631 = vsel %vm615, 1, 0
          %v632 = vsel %vm616, 1, 0
          %v633 = vsel %vm617, 1, 0
          %v634 = vsel %vm618, 1, 0
          %v635 = vsel %vm619, 1, 0
          %v636 = vsel %vm620, 1, 0
          %v637 = vsel %vm621, 1, 0
          %v638 = vsel %vm622, 1, 0
          %v639 = vsel %vm623, 1, 0
          %v640 = vsel %vm624, 1, 0
          %v641 = vsel %vm625, 1, 0
          %v642 = vsel %vm626, 1, 0
          %643 = vset.pattern.permute.xlu0 0
          %644 = vperm.xlu0 %643, %v627
          %v645 = vpop.permute.xlu0 %644
          %646 = vset.pattern.permute.xlu0 0
          %647 = vperm.xlu0 %646, %v628
          %v648 = vpop.permute.xlu0 %647
          %649 = vset.pattern.permute.xlu0 0
          %650 = vperm.xlu0 %649, %v629
          %v651 = vpop.permute.xlu0 %650
          %652 = vset.pattern.permute.xlu0 0
          %653 = vperm.xlu0 %652, %v630
          %v654 = vpop.permute.xlu0 %653
          %655 = vset.pattern.permute.xlu0 0
          %656 = vperm.xlu0 %655, %v631
          %v657 = vpop.permute.xlu0 %656
          %658 = vset.pattern.permute.xlu0 0
          %659 = vperm.xlu0 %658, %v632
          %v660 = vpop.permute.xlu0 %659
          %661 = vset.pattern.permute.xlu0 0
          %662 = vperm.xlu0 %661, %v633
          %v663 = vpop.permute.xlu0 %662
          %664 = vset.pattern.permute.xlu0 0
          %665 = vperm.xlu0 %664, %v634
          %v666 = vpop.permute.xlu0 %665
          %667 = vset.pattern.permute.xlu0 0
          %668 = vperm.xlu0 %667, %v635
          %v669 = vpop.permute.xlu0 %668
          %670 = vset.pattern.permute.xlu0 0
          %671 = vperm.xlu0 %670, %v636
          %v672 = vpop.permute.xlu0 %671
          %673 = vset.pattern.permute.xlu0 0
          %674 = vperm.xlu0 %673, %v637
          %v675 = vpop.permute.xlu0 %674
          %676 = vset.pattern.permute.xlu0 0
          %677 = vperm.xlu0 %676, %v638
          %v678 = vpop.permute.xlu0 %677
          %679 = vset.pattern.permute.xlu0 0
          %680 = vperm.xlu0 %679, %v639
          %v681 = vpop.permute.xlu0 %680
          %682 = vset.pattern.permute.xlu0 0
          %683 = vperm.xlu0 %682, %v640
          %v684 = vpop.permute.xlu0 %683
          %685 = vset.pattern.permute.xlu0 0
          %686 = vperm.xlu0 %685, %v641
          %v687 = vpop.permute.xlu0 %686
          %688 = vset.pattern.permute.xlu0 0
          %689 = vperm.xlu0 %688, %v642
          %v690 = vpop.permute.xlu0 %689
          %vm691 = vcmp.eq.s32.totalorder %v645, 1
          %vm692 = vcmp.eq.s32.totalorder %v648, 1
          %vm693 = vcmp.eq.s32.totalorder %v651, 1
          %vm694 = vcmp.eq.s32.totalorder %v654, 1
          %vm695 = vcmp.eq.s32.totalorder %v657, 1
          %vm696 = vcmp.eq.s32.totalorder %v660, 1
          %vm697 = vcmp.eq.s32.totalorder %v663, 1
          %vm698 = vcmp.eq.s32.totalorder %v666, 1
          %vm699 = vcmp.eq.s32.totalorder %v669, 1
          %vm700 = vcmp.eq.s32.totalorder %v672, 1
          %vm701 = vcmp.eq.s32.totalorder %v675, 1
          %vm702 = vcmp.eq.s32.totalorder %v678, 1
          %vm703 = vcmp.eq.s32.totalorder %v681, 1
          %vm704 = vcmp.eq.s32.totalorder %v684, 1
          %vm705 = vcmp.eq.s32.totalorder %v687, 1
          %vm706 = vcmp.eq.s32.totalorder %v690, 1
          %v708 = vlaneseq
          %v709 = vshrl.u32 %v708, 7
          %v710 = vsub.s32 0, %v709
          %v711 = vrot.slane %v610, %v710
          %v712 = vlaneseq
          %v713 = vshrl.u32 %v712, 7
          %v714 = vsub.s32 1, %v713
          %v715 = vrot.slane %v610, %v714
          %v718 = vsel %vm691, %v711, 0.0
          %v719 = vsel %vm691, %v715, 0.0
          %v720 = vsel %vm692, %v711, 0.0
          %v721 = vsel %vm692, %v715, 0.0
          %v722 = vsel %vm693, %v711, 0.0
          %v723 = vsel %vm693, %v715, 0.0
          %v724 = vsel %vm694, %v711, 0.0
          %v725 = vsel %vm694, %v715, 0.0
          %v726 = vsel %vm695, %v711, 0.0
          %v727 = vsel %vm695, %v715, 0.0
          %v728 = vsel %vm696, %v711, 0.0
          %v729 = vsel %vm696, %v715, 0.0
          %v730 = vsel %vm697, %v711, 0.0
          %v731 = vsel %vm697, %v715, 0.0
          %v732 = vsel %vm698, %v711, 0.0
          %v733 = vsel %vm698, %v715, 0.0
          %v734 = vsel %vm699, %v711, 0.0
          %v735 = vsel %vm699, %v715, 0.0
          %v736 = vsel %vm700, %v711, 0.0
          %v737 = vsel %vm700, %v715, 0.0
          %v738 = vsel %vm701, %v711, 0.0
          %v739 = vsel %vm701, %v715, 0.0
          %v740 = vsel %vm702, %v711, 0.0
          %v741 = vsel %vm702, %v715, 0.0
          %v742 = vsel %vm703, %v711, 0.0
          %v743 = vsel %vm703, %v715, 0.0
          %v744 = vsel %vm704, %v711, 0.0
          %v745 = vsel %vm704, %v715, 0.0
          %v746 = vsel %vm705, %v711, 0.0
          %v747 = vsel %vm705, %v715, 0.0
          %v748 = vsel %vm706, %v711, 0.0
          %v749 = vsel %vm706, %v715, 0.0
          %s750 = scalar_lea.vmem [#allocation9], 1
          %v751 = vld [vmem:[%s750] ss:$4 sm:$0x3]
          %vm752 = vcmp.eq.s32.totalorder %v594, 1
          %vm753 = vcmp.eq.s32.totalorder %v595, 1
          %vm754 = vcmp.eq.s32.totalorder %v596, 1
          %vm755 = vcmp.eq.s32.totalorder %v597, 1
          %vm756 = vcmp.eq.s32.totalorder %v598, 1
          %vm757 = vcmp.eq.s32.totalorder %v599, 1
          %vm758 = vcmp.eq.s32.totalorder %v600, 1
          %vm759 = vcmp.eq.s32.totalorder %v601, 1
          %vm760 = vcmp.eq.s32.totalorder %v602, 1
          %vm761 = vcmp.eq.s32.totalorder %v603, 1
          %vm762 = vcmp.eq.s32.totalorder %v604, 1
          %vm763 = vcmp.eq.s32.totalorder %v605, 1
          %vm764 = vcmp.eq.s32.totalorder %v606, 1
          %vm765 = vcmp.eq.s32.totalorder %v607, 1
          %vm766 = vcmp.eq.s32.totalorder %v608, 1
          %vm767 = vcmp.eq.s32.totalorder %v609, 1
          %v768 = vsel %vm752, 1, 0
          %v769 = vsel %vm753, 1, 0
          %v770 = vsel %vm754, 1, 0
          %v771 = vsel %vm755, 1, 0
          %v772 = vsel %vm756, 1, 0
          %v773 = vsel %vm757, 1, 0
          %v774 = vsel %vm758, 1, 0
          %v775 = vsel %vm759, 1, 0
          %v776 = vsel %vm760, 1, 0
          %v777 = vsel %vm761, 1, 0
          %v778 = vsel %vm762, 1, 0
          %v779 = vsel %vm763, 1, 0
          %v780 = vsel %vm764, 1, 0
          %v781 = vsel %vm765, 1, 0
          %v782 = vsel %vm766, 1, 0
          %v783 = vsel %vm767, 1, 0
          %784 = vset.pattern.permute.xlu0 0
          %785 = vperm.xlu0 %784, %v768
          %v786 = vpop.permute.xlu0 %785
          %787 = vset.pattern.permute.xlu0 0
          %788 = vperm.xlu0 %787, %v769
          %v789 = vpop.permute.xlu0 %788
          %790 = vset.pattern.permute.xlu0 0
          %791 = vperm.xlu0 %790, %v770
          %v792 = vpop.permute.xlu0 %791
          %793 = vset.pattern.permute.xlu0 0
          %794 = vperm.xlu0 %793, %v771
          %v795 = vpop.permute.xlu0 %794
          %796 = vset.pattern.permute.xlu0 0
          %797 = vperm.xlu0 %796, %v772
          %v798 = vpop.permute.xlu0 %797
          %799 = vset.pattern.permute.xlu0 0
          %800 = vperm.xlu0 %799, %v773
          %v801 = vpop.permute.xlu0 %800
          %802 = vset.pattern.permute.xlu0 0
          %803 = vperm.xlu0 %802, %v774
          %v804 = vpop.permute.xlu0 %803
          %805 = vset.pattern.permute.xlu0 0
          %806 = vperm.xlu0 %805, %v775
          %v807 = vpop.permute.xlu0 %806
          %808 = vset.pattern.permute.xlu0 0
          %809 = vperm.xlu0 %808, %v776
          %v810 = vpop.permute.xlu0 %809
          %811 = vset.pattern.permute.xlu0 0
          %812 = vperm.xlu0 %811, %v777
          %v813 = vpop.permute.xlu0 %812
          %814 = vset.pattern.permute.xlu0 0
          %815 = vperm.xlu0 %814, %v778
          %v816 = vpop.permute.xlu0 %815
          %817 = vset.pattern.permute.xlu0 0
          %818 = vperm.xlu0 %817, %v779
          %v819 = vpop.permute.xlu0 %818
          %820 = vset.pattern.permute.xlu0 0
          %821 = vperm.xlu0 %820, %v780
          %v822 = vpop.permute.xlu0 %821
          %823 = vset.pattern.permute.xlu0 0
          %824 = vperm.xlu0 %823, %v781
          %v825 = vpop.permute.xlu0 %824
          %826 = vset.pattern.permute.xlu0 0
          %827 = vperm.xlu0 %826, %v782
          %v828 = vpop.permute.xlu0 %827
          %829 = vset.pattern.permute.xlu0 0
          %830 = vperm.xlu0 %829, %v783
          %v831 = vpop.permute.xlu0 %830
          %vm832 = vcmp.eq.s32.totalorder %v786, 1
          %vm833 = vcmp.eq.s32.totalorder %v789, 1
          %vm834 = vcmp.eq.s32.totalorder %v792, 1
          %vm835 = vcmp.eq.s32.totalorder %v795, 1
          %vm836 = vcmp.eq.s32.totalorder %v798, 1
          %vm837 = vcmp.eq.s32.totalorder %v801, 1
          %vm838 = vcmp.eq.s32.totalorder %v804, 1
          %vm839 = vcmp.eq.s32.totalorder %v807, 1
          %vm840 = vcmp.eq.s32.totalorder %v810, 1
          %vm841 = vcmp.eq.s32.totalorder %v813, 1
          %vm842 = vcmp.eq.s32.totalorder %v816, 1
          %vm843 = vcmp.eq.s32.totalorder %v819, 1
          %vm844 = vcmp.eq.s32.totalorder %v822, 1
          %vm845 = vcmp.eq.s32.totalorder %v825, 1
          %vm846 = vcmp.eq.s32.totalorder %v828, 1
          %vm847 = vcmp.eq.s32.totalorder %v831, 1
          %v849 = vlaneseq
          %v850 = vshrl.u32 %v849, 7
          %v851 = vsub.s32 0, %v850
          %v852 = vrot.slane %v751, %v851
          %v853 = vlaneseq
          %v854 = vshrl.u32 %v853, 7
          %v855 = vsub.s32 1, %v854
          %v856 = vrot.slane %v751, %v855
          %v859 = vsel %vm832, %v852, %v718
          %v860 = vsel %vm832, %v856, %v719
          %v861 = vsel %vm833, %v852, %v720
          %v862 = vsel %vm833, %v856, %v721
          %v863 = vsel %vm834, %v852, %v722
          %v864 = vsel %vm834, %v856, %v723
          %v865 = vsel %vm835, %v852, %v724
          %v866 = vsel %vm835, %v856, %v725
          %v867 = vsel %vm836, %v852, %v726
          %v868 = vsel %vm836, %v856, %v727
          %v869 = vsel %vm837, %v852, %v728
          %v870 = vsel %vm837, %v856, %v729
          %v871 = vsel %vm838, %v852, %v730
          %v872 = vsel %vm838, %v856, %v731
          %v873 = vsel %vm839, %v852, %v732
          %v874 = vsel %vm839, %v856, %v733
          %v875 = vsel %vm840, %v852, %v734
          %v876 = vsel %vm840, %v856, %v735
          %v877 = vsel %vm841, %v852, %v736
          %v878 = vsel %vm841, %v856, %v737
          %v879 = vsel %vm842, %v852, %v738
          %v880 = vsel %vm842, %v856, %v739
          %v881 = vsel %vm843, %v852, %v740
          %v882 = vsel %vm843, %v856, %v741
          %v883 = vsel %vm844, %v852, %v742
          %v884 = vsel %vm844, %v856, %v743
          %v885 = vsel %vm845, %v852, %v744
          %v886 = vsel %vm845, %v856, %v745
          %v887 = vsel %vm846, %v852, %v746
          %v888 = vsel %vm846, %v856, %v747
          %v889 = vsel %vm847, %v852, %v748
          %v890 = vsel %vm847, %v856, %v749
          %s891 = scalar_lea.vmem [#allocation9], 2
          %v892 = vld [vmem:[%s891] ss:$4 sm:$0x3]
          %vm893 = vcmp.eq.s32.totalorder %v594, 2
          %vm894 = vcmp.eq.s32.totalorder %v595, 2
          %vm895 = vcmp.eq.s32.totalorder %v596, 2
          %vm896 = vcmp.eq.s32.totalorder %v597, 2
          %vm897 = vcmp.eq.s32.totalorder %v598, 2
          %vm898 = vcmp.eq.s32.totalorder %v599, 2
          %vm899 = vcmp.eq.s32.totalorder %v600, 2
          %vm900 = vcmp.eq.s32.totalorder %v601, 2
          %vm901 = vcmp.eq.s32.totalorder %v602, 2
          %vm902 = vcmp.eq.s32.totalorder %v603, 2
          %vm903 = vcmp.eq.s32.totalorder %v604, 2
          %vm904 = vcmp.eq.s32.totalorder %v605, 2
          %vm905 = vcmp.eq.s32.totalorder %v606, 2
          %vm906 = vcmp.eq.s32.totalorder %v607, 2
          %vm907 = vcmp.eq.s32.totalorder %v608, 2
          %vm908 = vcmp.eq.s32.totalorder %v609, 2
          %v909 = vsel %vm893, 1, 0
          %v910 = vsel %vm894, 1, 0
          %v911 = vsel %vm895, 1, 0
          %v912 = vsel %vm896, 1, 0
          %v913 = vsel %vm897, 1, 0
          %v914 = vsel %vm898, 1, 0
          %v915 = vsel %vm899, 1, 0
          %v916 = vsel %vm900, 1, 0
          %v917 = vsel %vm901, 1, 0
          %v918 = vsel %vm902, 1, 0
          %v919 = vsel %vm903, 1, 0
          %v920 = vsel %vm904, 1, 0
          %v921 = vsel %vm905, 1, 0
          %v922 = vsel %vm906, 1, 0
          %v923 = vsel %vm907, 1, 0
          %v924 = vsel %vm908, 1, 0
          %925 = vset.pattern.permute.xlu0 0
          %926 = vperm.xlu0 %925, %v909
          %v927 = vpop.permute.xlu0 %926
          %928 = vset.pattern.permute.xlu0 0
          %929 = vperm.xlu0 %928, %v910
          %v930 = vpop.permute.xlu0 %929
          %931 = vset.pattern.permute.xlu0 0
          %932 = vperm.xlu0 %931, %v911
          %v933 = vpop.permute.xlu0 %932
          %934 = vset.pattern.permute.xlu0 0
          %935 = vperm.xlu0 %934, %v912
          %v936 = vpop.permute.xlu0 %935
          %937 = vset.pattern.permute.xlu0 0
          %938 = vperm.xlu0 %937, %v913
          %v939 = vpop.permute.xlu0 %938
          %940 = vset.pattern.permute.xlu0 0
          %941 = vperm.xlu0 %940, %v914
          %v942 = vpop.permute.xlu0 %941
          %943 = vset.pattern.permute.xlu0 0
          %944 = vperm.xlu0 %943, %v915
          %v945 = vpop.permute.xlu0 %944
          %946 = vset.pattern.permute.xlu0 0
          %947 = vperm.xlu0 %946, %v916
          %v948 = vpop.permute.xlu0 %947
          %949 = vset.pattern.permute.xlu0 0
          %950 = vperm.xlu0 %949, %v917
          %v951 = vpop.permute.xlu0 %950
          %952 = vset.pattern.permute.xlu0 0
          %953 = vperm.xlu0 %952, %v918
          %v954 = vpop.permute.xlu0 %953
          %955 = vset.pattern.permute.xlu0 0
          %956 = vperm.xlu0 %955, %v919
          %v957 = vpop.permute.xlu0 %956
          %958 = vset.pattern.permute.xlu0 0
          %959 = vperm.xlu0 %958, %v920
          %v960 = vpop.permute.xlu0 %959
          %961 = vset.pattern.permute.xlu0 0
          %962 = vperm.xlu0 %961, %v921
          %v963 = vpop.permute.xlu0 %962
          %964 = vset.pattern.permute.xlu0 0
          %965 = vperm.xlu0 %964, %v922
          %v966 = vpop.permute.xlu0 %965
          %967 = vset.pattern.permute.xlu0 0
          %968 = vperm.xlu0 %967, %v923
          %v969 = vpop.permute.xlu0 %968
          %970 = vset.pattern.permute.xlu0 0
          %971 = vperm.xlu0 %970, %v924
          %v972 = vpop.permute.xlu0 %971
          %vm973 = vcmp.eq.s32.totalorder %v927, 1
          %vm974 = vcmp.eq.s32.totalorder %v930, 1
          %vm975 = vcmp.eq.s32.totalorder %v933, 1
          %vm976 = vcmp.eq.s32.totalorder %v936, 1
          %vm977 = vcmp.eq.s32.totalorder %v939, 1
          %vm978 = vcmp.eq.s32.totalorder %v942, 1
          %vm979 = vcmp.eq.s32.totalorder %v945, 1
          %vm980 = vcmp.eq.s32.totalorder %v948, 1
          %vm981 = vcmp.eq.s32.totalorder %v951, 1
          %vm982 = vcmp.eq.s32.totalorder %v954, 1
          %vm983 = vcmp.eq.s32.totalorder %v957, 1
          %vm984 = vcmp.eq.s32.totalorder %v960, 1
          %vm985 = vcmp.eq.s32.totalorder %v963, 1
          %vm986 = vcmp.eq.s32.totalorder %v966, 1
          %vm987 = vcmp.eq.s32.totalorder %v969, 1
          %vm988 = vcmp.eq.s32.totalorder %v972, 1
          %v990 = vlaneseq
          %v991 = vshrl.u32 %v990, 7
          %v992 = vsub.s32 0, %v991
          %v993 = vrot.slane %v892, %v992
          %v994 = vlaneseq
          %v995 = vshrl.u32 %v994, 7
          %v996 = vsub.s32 1, %v995
          %v997 = vrot.slane %v892, %v996
          %v1000 = vsel %vm973, %v993, %v859
          %v1001 = vsel %vm973, %v997, %v860
          %v1002 = vsel %vm974, %v993, %v861
          %v1003 = vsel %vm974, %v997, %v862
          %v1004 = vsel %vm975, %v993, %v863
          %v1005 = vsel %vm975, %v997, %v864
          %v1006 = vsel %vm976, %v993, %v865
          %v1007 = vsel %vm976, %v997, %v866
          %v1008 = vsel %vm977, %v993, %v867
          %v1009 = vsel %vm977, %v997, %v868
          %v1010 = vsel %vm978, %v993, %v869
          %v1011 = vsel %vm978, %v997, %v870
          %v1012 = vsel %vm979, %v993, %v871
          %v1013 = vsel %vm979, %v997, %v872
          %v1014 = vsel %vm980, %v993, %v873
          %v1015 = vsel %vm980, %v997, %v874
          %v1016 = vsel %vm981, %v993, %v875
          %v1017 = vsel %vm981, %v997, %v876
          %v1018 = vsel %vm982, %v993, %v877
          %v1019 = vsel %vm982, %v997, %v878
          %v1020 = vsel %vm983, %v993, %v879
          %v1021 = vsel %vm983, %v997, %v880
          %v1022 = vsel %vm984, %v993, %v881
          %v1023 = vsel %vm984, %v997, %v882
          %v1024 = vsel %vm985, %v993, %v883
          %v1025 = vsel %vm985, %v997, %v884
          %v1026 = vsel %vm986, %v993, %v885
          %v1027 = vsel %vm986, %v997, %v886
          %v1028 = vsel %vm987, %v993, %v887
          %v1029 = vsel %vm987, %v997, %v888
          %v1030 = vsel %vm988, %v993, %v889
          %v1031 = vsel %vm988, %v997, %v890
          %v1032 = vld [vmem:[#allocation10] sm:$0xff]
          %v1033 = vld [vmem:[#allocation10 + $0x8] sm:$0xff]
          %v1034 = vld [vmem:[#allocation10 + $0x10] sm:$0xff]
          %v1035 = vld [vmem:[#allocation10 + $0x18] sm:$0xff]
          %v1036 = vld [vmem:[#allocation10 + $0x20] sm:$0xff]
          %v1037 = vld [vmem:[#allocation10 + $0x28] sm:$0xff]
          %v1038 = vld [vmem:[#allocation10 + $0x30] sm:$0xff]
          %v1039 = vld [vmem:[#allocation10 + $0x38] sm:$0xff]
          %v1040 = vld [vmem:[#allocation10 + $0x40] sm:$0xff]
          %v1041 = vld [vmem:[#allocation10 + $0x48] sm:$0xff]
          %v1042 = vld [vmem:[#allocation10 + $0x50] sm:$0xff]
          %v1043 = vld [vmem:[#allocation10 + $0x58] sm:$0xff]
          %v1044 = vld [vmem:[#allocation10 + $0x60] sm:$0xff]
          %v1045 = vld [vmem:[#allocation10 + $0x68] sm:$0xff]
          %v1046 = vld [vmem:[#allocation10 + $0x70] sm:$0xff]
          %v1047 = vld [vmem:[#allocation10 + $0x78] sm:$0xff]
          %v1048 = vld [vmem:[#allocation10 + $0x80] sm:$0xff]
          %v1049 = vld [vmem:[#allocation10 + $0x88] sm:$0xff]
          %v1050 = vld [vmem:[#allocation10 + $0x90] sm:$0xff]
          %v1051 = vld [vmem:[#allocation10 + $0x98] sm:$0xff]
          %v1052 = vld [vmem:[#allocation10 + $0xa0] sm:$0xff]
          %v1053 = vld [vmem:[#allocation10 + $0xa8] sm:$0xff]
          %v1054 = vld [vmem:[#allocation10 + $0xb0] sm:$0xff]
          %v1055 = vld [vmem:[#allocation10 + $0xb8] sm:$0xff]
          %v1056 = vld [vmem:[#allocation10 + $0xc0] sm:$0xff]
          %v1057 = vld [vmem:[#allocation10 + $0xc8] sm:$0xff]
          %v1058 = vld [vmem:[#allocation10 + $0xd0] sm:$0xff]
          %v1059 = vld [vmem:[#allocation10 + $0xd8] sm:$0xff]
          %v1060 = vld [vmem:[#allocation10 + $0xe0] sm:$0xff]
          %v1061 = vld [vmem:[#allocation10 + $0xe8] sm:$0xff]
          %v1062 = vld [vmem:[#allocation10 + $0xf0] sm:$0xff]
          %v1063 = vld [vmem:[#allocation10 + $0xf8] sm:$0xff]
          %v1064 = vld [vmem:[#allocation12] sm:$0xff]
          %v1065 = vld [vmem:[#allocation12 + $0x8] sm:$0xff]
          %v1066 = vld [vmem:[#allocation12 + $0x10] sm:$0xff]
          %v1067 = vld [vmem:[#allocation12 + $0x18] sm:$0xff]
          %v1068 = vld [vmem:[#allocation12 + $0x20] sm:$0xff]
          %v1069 = vld [vmem:[#allocation12 + $0x28] sm:$0xff]
          %v1070 = vld [vmem:[#allocation12 + $0x30] sm:$0xff]
          %v1071 = vld [vmem:[#allocation12 + $0x38] sm:$0xff]
          %v1072 = vld [vmem:[#allocation12 + $0x40] sm:$0xff]
          %v1073 = vld [vmem:[#allocation12 + $0x48] sm:$0xff]
          %v1074 = vld [vmem:[#allocation12 + $0x50] sm:$0xff]
          %v1075 = vld [vmem:[#allocation12 + $0x58] sm:$0xff]
          %v1076 = vld [vmem:[#allocation12 + $0x60] sm:$0xff]
          %v1077 = vld [vmem:[#allocation12 + $0x68] sm:$0xff]
          %v1078 = vld [vmem:[#allocation12 + $0x70] sm:$0xff]
          %v1079 = vld [vmem:[#allocation12 + $0x78] sm:$0xff]
          %v1080 = vld [vmem:[#allocation12 + $0x80] sm:$0xff]
          %v1081 = vld [vmem:[#allocation12 + $0x88] sm:$0xff]
          %v1082 = vld [vmem:[#allocation12 + $0x90] sm:$0xff]
          %v1083 = vld [vmem:[#allocation12 + $0x98] sm:$0xff]
          %v1084 = vld [vmem:[#allocation12 + $0xa0] sm:$0xff]
          %v1085 = vld [vmem:[#allocation12 + $0xa8] sm:$0xff]
          %v1086 = vld [vmem:[#allocation12 + $0xb0] sm:$0xff]
          %v1087 = vld [vmem:[#allocation12 + $0xb8] sm:$0xff]
          %v1088 = vld [vmem:[#allocation12 + $0xc0] sm:$0xff]
          %v1089 = vld [vmem:[#allocation12 + $0xc8] sm:$0xff]
          %v1090 = vld [vmem:[#allocation12 + $0xd0] sm:$0xff]
          %v1091 = vld [vmem:[#allocation12 + $0xd8] sm:$0xff]
          %v1092 = vld [vmem:[#allocation12 + $0xe0] sm:$0xff]
          %v1093 = vld [vmem:[#allocation12 + $0xe8] sm:$0xff]
          %v1094 = vld [vmem:[#allocation12 + $0xf0] sm:$0xff]
          %v1095 = vld [vmem:[#allocation12 + $0xf8] sm:$0xff]
          %1096 = vmatprep.subr.mxu0 0.0
          %1097 = vmatpush1.msra.mxu0 %v1064
          %1098 = vmatprep.subr.mxu0 0.0
          %1099 = vmatpush1.msra.mxu0 %v1065
          %1100 = vmatprep.subr.mxu0 0.0
          %1101 = vmatpush1.msra.mxu0 %v1066
          %1102 = vmatprep.subr.mxu0 0.0
          %1103 = vmatpush1.msra.mxu0 %v1067
          %1104 = vmatprep.subr.mxu0 0.0
          %1105 = vmatpush1.msra.mxu0 %v1068
          %1106 = vmatprep.subr.mxu0 0.0
          %1107 = vmatpush1.msra.mxu0 %v1069
          %1108 = vmatprep.subr.mxu0 0.0
          %1109 = vmatpush1.msra.mxu0 %v1070
          %1110 = vmatprep.subr.mxu0 0.0
          %1111 = vmatpush1.msra.mxu0 %v1071
          %1112 = vmatprep.subr.mxu0 0.0
          %1113 = vmatpush1.msra.mxu0 %v1072
          %1114 = vmatprep.subr.mxu0 0.0
          %1115 = vmatpush1.msra.mxu0 %v1073
          %1116 = vmatprep.subr.mxu0 0.0
          %1117 = vmatpush1.msra.mxu0 %v1074
          %1118 = vmatprep.subr.mxu0 0.0
          %1119 = vmatpush1.msra.mxu0 %v1075
          %1120 = vmatprep.subr.mxu0 0.0
          %1121 = vmatpush1.msra.mxu0 %v1076
          %1122 = vmatprep.subr.mxu0 0.0
          %1123 = vmatpush1.msra.mxu0 %v1077
          %1124 = vmatprep.subr.mxu0 0.0
          %1125 = vmatpush1.msra.mxu0 %v1078
          %1126 = vmatprep.subr.mxu0 0.0
          %1127 = vmatpush1.msra.mxu0 %v1079
          %1128 = vmatprep.subr.mxu0 0.0
          %1129 = vmatpush1.msra.mxu0 %v1080
          %1130 = vmatprep.subr.mxu0 0.0
          %1131 = vmatpush1.msra.mxu0 %v1081
          %1132 = vmatprep.subr.mxu0 0.0
          %1133 = vmatpush1.msra.mxu0 %v1082
          %1134 = vmatprep.subr.mxu0 0.0
          %1135 = vmatpush1.msra.mxu0 %v1083
          %1136 = vmatprep.subr.mxu0 0.0
          %1137 = vmatpush1.msra.mxu0 %v1084
          %1138 = vmatprep.subr.mxu0 0.0
          %1139 = vmatpush1.msra.mxu0 %v1085
          %1140 = vmatprep.subr.mxu0 0.0
          %1141 = vmatpush1.msra.mxu0 %v1086
          %1142 = vmatprep.subr.mxu0 0.0
          %1143 = vmatpush1.msra.mxu0 %v1087
          %1144 = vmatprep.subr.mxu0 0.0
          %1145 = vmatpush1.msra.mxu0 %v1088
          %1146 = vmatprep.subr.mxu0 0.0
          %1147 = vmatpush1.msra.mxu0 %v1089
          %1148 = vmatprep.subr.mxu0 0.0
          %1149 = vmatpush1.msra.mxu0 %v1090
          %1150 = vmatprep.subr.mxu0 0.0
          %1151 = vmatpush1.msra.mxu0 %v1091
          %1152 = vmatprep.subr.mxu0 0.0
          %1153 = vmatpush1.msra.mxu0 %v1092
          %1154 = vmatprep.subr.mxu0 0.0
          %1155 = vmatpush1.msra.mxu0 %v1093
          %1156 = vmatprep.subr.mxu0 0.0
          %1157 = vmatpush1.msra.mxu0 %v1094
          %1158 = vmatprep.subr.mxu0 0.0
          %1159 = vmatpush1.msra.mxu0 %v1095
          %1160 = vmatprep.mubr.f32.mxu0 %v1001
          %1161 = vmatmul.mubr.f32.gmra.mrb[0].mxu0 %v1000
          %v1162 = vpop.f32.mrb[0].mxu0
          %v1163 = vadd.f32 0.0, %v1162
          %v1164 = vpop.f32.mrb[0].mxu0
          %1165 = vmatprep.mubr.f32.mxu0 %v1003
          %1166 = vmatmul.mubr.f32.gmra.mrb[0].mxu0 %v1002
          %v1167 = vpop.f32.mrb[0].mxu0
          %v1168 = vadd.f32 0.0, %v1167
          %v1169 = vpop.f32.mrb[0].mxu0
          %1170 = vmatprep.mubr.f32.mxu0 %v1005
          %1171 = vmatmul.mubr.f32.gmra.mrb[0].mxu0 %v1004
          %v1172 = vpop.f32.mrb[0].mxu0
          %v1173 = vadd.f32 0.0, %v1172
          %v1174 = vpop.f32.mrb[0].mxu0
          %1175 = vmatprep.mubr.f32.mxu0 %v1007
          %1176 = vmatmul.mubr.f32.gmra.mrb[0].mxu0 %v1006
          %v1177 = vpop.f32.mrb[0].mxu0
          %v1178 = vadd.f32 0.0, %v1177
          %v1179 = vpop.f32.mrb[0].mxu0
          %1180 = vmatprep.mubr.f32.mxu0 %v1009
          %1181 = vmatmul.mubr.f32.gmra.mrb[0].mxu0 %v1008
          %v1182 = vpop.f32.mrb[0].mxu0
          %v1183 = vadd.f32 0.0, %v1182
          %v1184 = vpop.f32.mrb[0].mxu0
          %1185 = vmatprep.mubr.f32.mxu0 %v1011
          %1186 = vmatmul.mubr.f32.gmra.mrb[0].mxu0 %v1010
          %v1187 = vpop.f32.mrb[0].mxu0
          %v1188 = vadd.f32 0.0, %v1187
          %v1189 = vpop.f32.mrb[0].mxu0
          %1190 = vmatprep.mubr.f32.mxu0 %v1013
          %1191 = vmatmul.mubr.f32.gmra.mrb[0].mxu0 %v1012
          %v1192 = vpop.f32.mrb[0].mxu0
          %v1193 = vadd.f32 0.0, %v1192
          %v1194 = vpop.f32.mrb[0].mxu0
          %1195 = vmatprep.mubr.f32.mxu0 %v1015
          %1196 = vmatmul.mubr.f32.gmra.mrb[0].mxu0 %v1014
          %v1197 = vpop.f32.mrb[0].mxu0
          %v1198 = vadd.f32 0.0, %v1197
          %v1199 = vpop.f32.mrb[0].mxu0
          %1200 = vmatprep.mubr.f32.mxu0 %v1017
          %1201 = vmatmul.mubr.f32.gmra.mrb[0].mxu0 %v1016
          %v1202 = vpop.f32.mrb[0].mxu0
          %v1203 = vadd.f32 0.0, %v1202
          %v1204 = vpop.f32.mrb[0].mxu0
          %1205 = vmatprep.mubr.f32.mxu0 %v1019
          %1206 = vmatmul.mubr.f32.gmra.mrb[0].mxu0 %v1018
          %v1207 = vpop.f32.mrb[0].mxu0
          %v1208 = vadd.f32 0.0, %v1207
          %v1209 = vpop.f32.mrb[0].mxu0
          %1210 = vmatprep.mubr.f32.mxu0 %v1021
          %1211 = vmatmul.mubr.f32.gmra.mrb[0].mxu0 %v1020
          %v1212 = vpop.f32.mrb[0].mxu0
          %v1213 = vadd.f32 0.0, %v1212
          %v1214 = vpop.f32.mrb[0].mxu0
          %1215 = vmatprep.mubr.f32.mxu0 %v1023
          %1216 = vmatmul.mubr.f32.gmra.mrb[0].mxu0 %v1022
          %v1217 = vpop.f32.mrb[0].mxu0
          %v1218 = vadd.f32 0.0, %v1217
          %v1219 = vpop.f32.mrb[0].mxu0
          %1220 = vmatprep.mubr.f32.mxu0 %v1025
          %1221 = vmatmul.mubr.f32.gmra.mrb[0].mxu0 %v1024
          %v1222 = vpop.f32.mrb[0].mxu0
          %v1223 = vadd.f32 0.0, %v1222
          %v1224 = vpop.f32.mrb[0].mxu0
          %1225 = vmatprep.mubr.f32.mxu0 %v1027
          %1226 = vmatmul.mubr.f32.gmra.mrb[0].mxu0 %v1026
          %v1227 = vpop.f32.mrb[0].mxu0
          %v1228 = vadd.f32 0.0, %v1227
          %v1229 = vpop.f32.mrb[0].mxu0
          %1230 = vmatprep.mubr.f32.mxu0 %v1029
          %1231 = vmatmul.mubr.f32.gmra.mrb[0].mxu0 %v1028
          %v1232 = vpop.f32.mrb[0].mxu0
          %v1233 = vadd.f32 0.0, %v1232
          %v1234 = vpop.f32.mrb[0].mxu0
          %1235 = vmatprep.mubr.f32.mxu0 %v1031
          %1236 = vmatmul.mubr.f32.gmra.mrb[0].mxu0 %v1030
          %v1237 = vpop.f32.mrb[0].mxu0
          %v1238 = vadd.f32 0.0, %v1237
          %v1239 = vpop.f32.mrb[0].mxu0
          %1240 = vdwg.mxu0
          %1241 = vmatprep.subr.mxu0 0.0
          %1242 = vmatpush1.msra.mxu0 %v1032
          %1243 = vmatprep.subr.mxu0 0.0
          %1244 = vmatpush1.msra.mxu0 %v1033
          %1245 = vmatprep.subr.mxu0 0.0
          %1246 = vmatpush1.msra.mxu0 %v1034
          %1247 = vmatprep.subr.mxu0 0.0
          %1248 = vmatpush1.msra.mxu0 %v1035
          %1249 = vmatprep.subr.mxu0 0.0
          %1250 = vmatpush1.msra.mxu0 %v1036
          %1251 = vmatprep.subr.mxu0 0.0
          %1252 = vmatpush1.msra.mxu0 %v1037
          %1253 = vmatprep.subr.mxu0 0.0
          %1254 = vmatpush1.msra.mxu0 %v1038
          %1255 = vmatprep.subr.mxu0 0.0
          %1256 = vmatpush1.msra.mxu0 %v1039
          %1257 = vmatprep.subr.mxu0 0.0
          %1258 = vmatpush1.msra.mxu0 %v1040
          %1259 = vmatprep.subr.mxu0 0.0
          %1260 = vmatpush1.msra.mxu0 %v1041
          %1261 = vmatprep.subr.mxu0 0.0
          %1262 = vmatpush1.msra.mxu0 %v1042
          %1263 = vmatprep.subr.mxu0 0.0
          %1264 = vmatpush1.msra.mxu0 %v1043
          %1265 = vmatprep.subr.mxu0 0.0
          %1266 = vmatpush1.msra.mxu0 %v1044
          %1267 = vmatprep.subr.mxu0 0.0
          %1268 = vmatpush1.msra.mxu0 %v1045
          %1269 = vmatprep.subr.mxu0 0.0
          %1270 = vmatpush1.msra.mxu0 %v1046
          %1271 = vmatprep.subr.mxu0 0.0
          %1272 = vmatpush1.msra.mxu0 %v1047
          %1273 = vmatprep.subr.mxu0 0.0
          %1274 = vmatpush1.msra.mxu0 %v1048
          %1275 = vmatprep.subr.mxu0 0.0
          %1276 = vmatpush1.msra.mxu0 %v1049
          %1277 = vmatprep.subr.mxu0 0.0
          %1278 = vmatpush1.msra.mxu0 %v1050
          %1279 = vmatprep.subr.mxu0 0.0
          %1280 = vmatpush1.msra.mxu0 %v1051
          %1281 = vmatprep.subr.mxu0 0.0
          %1282 = vmatpush1.msra.mxu0 %v1052
          %1283 = vmatprep.subr.mxu0 0.0
          %1284 = vmatpush1.msra.mxu0 %v1053
          %1285 = vmatprep.subr.mxu0 0.0
          %1286 = vmatpush1.msra.mxu0 %v1054
          %1287 = vmatprep.subr.mxu0 0.0
          %1288 = vmatpush1.msra.mxu0 %v1055
          %1289 = vmatprep.subr.mxu0 0.0
          %1290 = vmatpush1.msra.mxu0 %v1056
          %1291 = vmatprep.subr.mxu0 0.0
          %1292 = vmatpush1.msra.mxu0 %v1057
          %1293 = vmatprep.subr.mxu0 0.0
          %1294 = vmatpush1.msra.mxu0 %v1058
          %1295 = vmatprep.subr.mxu0 0.0
          %1296 = vmatpush1.msra.mxu0 %v1059
          %1297 = vmatprep.subr.mxu0 0.0
          %1298 = vmatpush1.msra.mxu0 %v1060
          %1299 = vmatprep.subr.mxu0 0.0
          %1300 = vmatpush1.msra.mxu0 %v1061
          %1301 = vmatprep.subr.mxu0 0.0
          %1302 = vmatpush1.msra.mxu0 %v1062
          %1303 = vmatprep.subr.mxu0 0.0
          %1304 = vmatpush1.msra.mxu0 %v1063
          %1305 = vmatprep.mubr.f32.mxu0 %v563
          %1306 = vmatmul.mubr.f32.gmra.mrb[0].mxu0 %v562
          %v1307 = vpop.f32.mrb[0].mxu0
          %v1308 = vadd.f32 %v1163, %v1307
          %v1309 = vpop.f32.mrb[0].mxu0
          %1310 = vmatprep.mubr.f32.mxu0 %v565
          %1311 = vmatmul.mubr.f32.gmra.mrb[0].mxu0 %v564
          %v1312 = vpop.f32.mrb[0].mxu0
          %v1313 = vadd.f32 %v1168, %v1312
          %v1314 = vpop.f32.mrb[0].mxu0
          %1315 = vmatprep.mubr.f32.mxu0 %v567
          %1316 = vmatmul.mubr.f32.gmra.mrb[0].mxu0 %v566
          %v1317 = vpop.f32.mrb[0].mxu0
          %v1318 = vadd.f32 %v1173, %v1317
          %v1319 = vpop.f32.mrb[0].mxu0
          %1320 = vmatprep.mubr.f32.mxu0 %v569
          %1321 = vmatmul.mubr.f32.gmra.mrb[0].mxu0 %v568
          %v1322 = vpop.f32.mrb[0].mxu0
          %v1323 = vadd.f32 %v1178, %v1322
          %v1324 = vpop.f32.mrb[0].mxu0
          %1325 = vmatprep.mubr.f32.mxu0 %v571
          %1326 = vmatmul.mubr.f32.gmra.mrb[0].mxu0 %v570
          %v1327 = vpop.f32.mrb[0].mxu0
          %v1328 = vadd.f32 %v1183, %v1327
          %v1329 = vpop.f32.mrb[0].mxu0
          %1330 = vmatprep.mubr.f32.mxu0 %v573
          %1331 = vmatmul.mubr.f32.gmra.mrb[0].mxu0 %v572
          %v1332 = vpop.f32.mrb[0].mxu0
          %v1333 = vadd.f32 %v1188, %v1332
          %v1334 = vpop.f32.mrb[0].mxu0
          %1335 = vmatprep.mubr.f32.mxu0 %v575
          %1336 = vmatmul.mubr.f32.gmra.mrb[0].mxu0 %v574
          %v1337 = vpop.f32.mrb[0].mxu0
          %v1338 = vadd.f32 %v1193, %v1337
          %v1339 = vpop.f32.mrb[0].mxu0
          %1340 = vmatprep.mubr.f32.mxu0 %v577
          %1341 = vmatmul.mubr.f32.gmra.mrb[0].mxu0 %v576
          %v1342 = vpop.f32.mrb[0].mxu0
          %v1343 = vadd.f32 %v1198, %v1342
          %v1344 = vpop.f32.mrb[0].mxu0
          %1345 = vmatprep.mubr.f32.mxu0 %v579
          %1346 = vmatmul.mubr.f32.gmra.mrb[0].mxu0 %v578
          %v1347 = vpop.f32.mrb[0].mxu0
          %v1348 = vadd.f32 %v1203, %v1347
          %v1349 = vpop.f32.mrb[0].mxu0
          %1350 = vmatprep.mubr.f32.mxu0 %v581
          %1351 = vmatmul.mubr.f32.gmra.mrb[0].mxu0 %v580
          %v1352 = vpop.f32.mrb[0].mxu0
          %v1353 = vadd.f32 %v1208, %v1352
          %v1354 = vpop.f32.mrb[0].mxu0
          %1355 = vmatprep.mubr.f32.mxu0 %v583
          %1356 = vmatmul.mubr.f32.gmra.mrb[0].mxu0 %v582
          %v1357 = vpop.f32.mrb[0].mxu0
          %v1358 = vadd.f32 %v1213, %v1357
          %v1359 = vpop.f32.mrb[0].mxu0
          %1360 = vmatprep.mubr.f32.mxu0 %v585
          %1361 = vmatmul.mubr.f32.gmra.mrb[0].mxu0 %v584
          %v1362 = vpop.f32.mrb[0].mxu0
          %v1363 = vadd.f32 %v1218, %v1362
          %v1364 = vpop.f32.mrb[0].mxu0
          %1365 = vmatprep.mubr.f32.mxu0 %v587
          %1366 = vmatmul.mubr.f32.gmra.mrb[0].mxu0 %v586
          %v1367 = vpop.f32.mrb[0].mxu0
          %v1368 = vadd.f32 %v1223, %v1367
          %v1369 = vpop.f32.mrb[0].mxu0
          %1370 = vmatprep.mubr.f32.mxu0 %v589
          %1371 = vmatmul.mubr.f32.gmra.mrb[0].mxu0 %v588
          %v1372 = vpop.f32.mrb[0].mxu0
          %v1373 = vadd.f32 %v1228, %v1372
          %v1374 = vpop.f32.mrb[0].mxu0
          %1375 = vmatprep.mubr.f32.mxu0 %v591
          %1376 = vmatmul.mubr.f32.gmra.mrb[0].mxu0 %v590
          %v1377 = vpop.f32.mrb[0].mxu0
          %v1378 = vadd.f32 %v1233, %v1377
          %v1379 = vpop.f32.mrb[0].mxu0
          %1380 = vmatprep.mubr.f32.mxu0 %v593
          %1381 = vmatmul.mubr.f32.gmra.mrb[0].mxu0 %v592
          %v1382 = vpop.f32.mrb[0].mxu0
          %v1383 = vadd.f32 %v1238, %v1382
          %v1384 = vpop.f32.mrb[0].mxu0
          %1385 = vdwg.mxu0
          %v1386 = vld [vmem:[#allocation13] sm:$0x1]
          %v1388 = vlaneseq
          %v1389 = vshrl.u32 %v1388, 7
          %v1390 = vsub.s32 0, %v1389
          %v1391 = vrot.slane %v1386, %v1390
          %v1393 = vadd.f32 %v1308, %v1391
          %v1394 = vadd.f32 %v1313, %v1391
          %v1395 = vadd.f32 %v1318, %v1391
          %v1396 = vadd.f32 %v1323, %v1391
          %v1397 = vadd.f32 %v1328, %v1391
          %v1398 = vadd.f32 %v1333, %v1391
          %v1399 = vadd.f32 %v1338, %v1391
          %v1400 = vadd.f32 %v1343, %v1391
          %v1401 = vadd.f32 %v1348, %v1391
          %v1402 = vadd.f32 %v1353, %v1391
          %v1403 = vadd.f32 %v1358, %v1391
          %v1404 = vadd.f32 %v1363, %v1391
          %v1405 = vadd.f32 %v1368, %v1391
          %v1406 = vadd.f32 %v1373, %v1391
          %v1407 = vadd.f32 %v1378, %v1391
          %v1408 = vadd.f32 %v1383, %v1391
          %vm1409 = vcmask 31744
          %v1410 = vsel %vm1409, %v1393, -inf
          %1411 = vmax.xlane.f32.xlu0 %v1410
          %v1412 = vpop.xlane.xlu0 %1411
          %v1413 = vsel %vm1409, %v1394, -inf
          %1414 = vmax.xlane.f32.xlu0 %v1413
          %v1415 = vpop.xlane.xlu0 %1414
          %v1416 = vsel %vm1409, %v1395, -inf
          %1417 = vmax.xlane.f32.xlu0 %v1416
          %v1418 = vpop.xlane.xlu0 %1417
          %v1419 = vsel %vm1409, %v1396, -inf
          %1420 = vmax.xlane.f32.xlu0 %v1419
          %v1421 = vpop.xlane.xlu0 %1420
          %v1422 = vsel %vm1409, %v1397, -inf
          %1423 = vmax.xlane.f32.xlu0 %v1422
          %v1424 = vpop.xlane.xlu0 %1423
          %v1425 = vsel %vm1409, %v1398, -inf
          %1426 = vmax.xlane.f32.xlu0 %v1425
          %v1427 = vpop.xlane.xlu0 %1426
          %v1428 = vsel %vm1409, %v1399, -inf
          %1429 = vmax.xlane.f32.xlu0 %v1428
          %v1430 = vpop.xlane.xlu0 %1429
          %v1431 = vsel %vm1409, %v1400, -inf
          %1432 = vmax.xlane.f32.xlu0 %v1431
          %v1433 = vpop.xlane.xlu0 %1432
          %v1434 = vsel %vm1409, %v1401, -inf
          %1435 = vmax.xlane.f32.xlu0 %v1434
          %v1436 = vpop.xlane.xlu0 %1435
          %v1437 = vsel %vm1409, %v1402, -inf
          %1438 = vmax.xlane.f32.xlu0 %v1437
          %v1439 = vpop.xlane.xlu0 %1438
          %v1440 = vsel %vm1409, %v1403, -inf
          %1441 = vmax.xlane.f32.xlu0 %v1440
          %v1442 = vpop.xlane.xlu0 %1441
          %v1443 = vsel %vm1409, %v1404, -inf
          %1444 = vmax.xlane.f32.xlu0 %v1443
          %v1445 = vpop.xlane.xlu0 %1444
          %v1446 = vsel %vm1409, %v1405, -inf
          %1447 = vmax.xlane.f32.xlu0 %v1446
          %v1448 = vpop.xlane.xlu0 %1447
          %v1449 = vsel %vm1409, %v1406, -inf
          %1450 = vmax.xlane.f32.xlu0 %v1449
          %v1451 = vpop.xlane.xlu0 %1450
          %v1452 = vsel %vm1409, %v1407, -inf
          %1453 = vmax.xlane.f32.xlu0 %v1452
          %v1454 = vpop.xlane.xlu0 %1453
          %v1455 = vsel %vm1409, %v1408, -inf
          %1456 = vmax.xlane.f32.xlu0 %v1455
          %v1457 = vpop.xlane.xlu0 %1456
          %v1458 = vsub.f32 %v1393, %v1412
          %v1459 = vsub.f32 %v1394, %v1415
          %v1460 = vsub.f32 %v1395, %v1418
          %v1461 = vsub.f32 %v1396, %v1421
          %v1462 = vsub.f32 %v1397, %v1424
          %v1463 = vsub.f32 %v1398, %v1427
          %v1464 = vsub.f32 %v1399, %v1430
          %v1465 = vsub.f32 %v1400, %v1433
          %v1466 = vsub.f32 %v1401, %v1436
          %v1467 = vsub.f32 %v1402, %v1439
          %v1468 = vsub.f32 %v1403, %v1442
          %v1469 = vsub.f32 %v1404, %v1445
          %v1470 = vsub.f32 %v1405, %v1448
          %v1471 = vsub.f32 %v1406, %v1451
          %v1472 = vsub.f32 %v1407, %v1454
          %v1473 = vsub.f32 %v1408, %v1457
          %v1474 = vmul.f32 %v1458, 1.442695
          %v1475 = vpow.pop %v1474
          %v1476 = vmul.f32 %v1459, 1.442695
          %v1477 = vpow.pop %v1476
          %v1478 = vmul.f32 %v1460, 1.442695
          %v1479 = vpow.pop %v1478
          %v1480 = vmul.f32 %v1461, 1.442695
          %v1481 = vpow.pop %v1480
          %v1482 = vmul.f32 %v1462, 1.442695
          %v1483 = vpow.pop %v1482
          %v1484 = vmul.f32 %v1463, 1.442695
          %v1485 = vpow.pop %v1484
          %v1486 = vmul.f32 %v1464, 1.442695
          %v1487 = vpow.pop %v1486
          %v1488 = vmul.f32 %v1465, 1.442695
          %v1489 = vpow.pop %v1488
          %v1490 = vmul.f32 %v1466, 1.442695
          %v1491 = vpow.pop %v1490
          %v1492 = vmul.f32 %v1467, 1.442695
          %v1493 = vpow.pop %v1492
          %v1494 = vmul.f32 %v1468, 1.442695
          %v1495 = vpow.pop %v1494
          %v1496 = vmul.f32 %v1469, 1.442695
          %v1497 = vpow.pop %v1496
          %v1498 = vmul.f32 %v1470, 1.442695
          %v1499 = vpow.pop %v1498
          %v1500 = vmul.f32 %v1471, 1.442695
          %v1501 = vpow.pop %v1500
          %v1502 = vmul.f32 %v1472, 1.442695
          %v1503 = vpow.pop %v1502
          %v1504 = vmul.f32 %v1473, 1.442695
          %v1505 = vpow.pop %v1504
          %v1506 = vsel %vm1409, %v1475, 0.0
          %1507 = vadd.xlane.f32.xlu0 %v1506
          %v1508 = vpop.xlane.xlu0 %1507
          %v1509 = vsel %vm1409, %v1477, 0.0
          %1510 = vadd.xlane.f32.xlu0 %v1509
          %v1511 = vpop.xlane.xlu0 %1510
          %v1512 = vsel %vm1409, %v1479, 0.0
          %1513 = vadd.xlane.f32.xlu0 %v1512
          %v1514 = vpop.xlane.xlu0 %1513
          %v1515 = vsel %vm1409, %v1481, 0.0
          %1516 = vadd.xlane.f32.xlu0 %v1515
          %v1517 = vpop.xlane.xlu0 %1516
          %v1518 = vsel %vm1409, %v1483, 0.0
          %1519 = vadd.xlane.f32.xlu0 %v1518
          %v1520 = vpop.xlane.xlu0 %1519
          %v1521 = vsel %vm1409, %v1485, 0.0
          %1522 = vadd.xlane.f32.xlu0 %v1521
          %v1523 = vpop.xlane.xlu0 %1522
          %v1524 = vsel %vm1409, %v1487, 0.0
          %1525 = vadd.xlane.f32.xlu0 %v1524
          %v1526 = vpop.xlane.xlu0 %1525
          %v1527 = vsel %vm1409, %v1489, 0.0
          %1528 = vadd.xlane.f32.xlu0 %v1527
          %v1529 = vpop.xlane.xlu0 %1528
          %v1530 = vsel %vm1409, %v1491, 0.0
          %1531 = vadd.xlane.f32.xlu0 %v1530
          %v1532 = vpop.xlane.xlu0 %1531
          %v1533 = vsel %vm1409, %v1493, 0.0
          %1534 = vadd.xlane.f32.xlu0 %v1533
          %v1535 = vpop.xlane.xlu0 %1534
          %v1536 = vsel %vm1409, %v1495, 0.0
          %1537 = vadd.xlane.f32.xlu0 %v1536
          %v1538 = vpop.xlane.xlu0 %1537
          %v1539 = vsel %vm1409, %v1497, 0.0
          %1540 = vadd.xlane.f32.xlu0 %v1539
          %v1541 = vpop.xlane.xlu0 %1540
          %v1542 = vsel %vm1409, %v1499, 0.0
          %1543 = vadd.xlane.f32.xlu0 %v1542
          %v1544 = vpop.xlane.xlu0 %1543
          %v1545 = vsel %vm1409, %v1501, 0.0
          %1546 = vadd.xlane.f32.xlu0 %v1545
          %v1547 = vpop.xlane.xlu0 %1546
          %v1548 = vsel %vm1409, %v1503, 0.0
          %1549 = vadd.xlane.f32.xlu0 %v1548
          %v1550 = vpop.xlane.xlu0 %1549
          %v1551 = vsel %vm1409, %v1505, 0.0
          %1552 = vadd.xlane.f32.xlu0 %v1551
          %v1553 = vpop.xlane.xlu0 %1552
          %v1554 = vrcp.pop %v1508
          %v1555 = vrcp.pop %v1511
          %v1556 = vrcp.pop %v1514
          %v1557 = vrcp.pop %v1517
          %v1558 = vrcp.pop %v1520
          %v1559 = vrcp.pop %v1523
          %v1560 = vrcp.pop %v1526
          %v1561 = vrcp.pop %v1529
          %v1562 = vrcp.pop %v1532
          %v1563 = vrcp.pop %v1535
          %v1564 = vrcp.pop %v1538
          %v1565 = vrcp.pop %v1541
          %v1566 = vrcp.pop %v1544
          %v1567 = vrcp.pop %v1547
          %v1568 = vrcp.pop %v1550
          %v1569 = vrcp.pop %v1553
          %v1570 = vmul.f32 %v1475, %v1554
          %v1571 = vmul.f32 %v1477, %v1555
          %v1572 = vmul.f32 %v1479, %v1556
          %v1573 = vmul.f32 %v1481, %v1557
          %v1574 = vmul.f32 %v1483, %v1558
          %v1575 = vmul.f32 %v1485, %v1559
          %v1576 = vmul.f32 %v1487, %v1560
          %v1577 = vmul.f32 %v1489, %v1561
          %v1578 = vmul.f32 %v1491, %v1562
          %v1579 = vmul.f32 %v1493, %v1563
          %v1580 = vmul.f32 %v1495, %v1564
          %v1581 = vmul.f32 %v1497, %v1565
          %v1582 = vmul.f32 %v1499, %v1566
          %v1583 = vmul.f32 %v1501, %v1567
          %v1584 = vmul.f32 %v1503, %v1568
          %v1585 = vmul.f32 %v1505, %v1569
          %v1586 = vlaneseq
          %v1587 = vand.u32 %v1586, 127
          %v1588 = vsel %vm1409, %v1570, -inf
          %1589 = vmax.xlane.f32.xlu0 %v1588
          %v1590 = vpop.xlane.xlu0 %1589
          %v1591 = vsel %vm1409, %v1571, -inf
          %1592 = vmax.xlane.f32.xlu0 %v1591
          %v1593 = vpop.xlane.xlu0 %1592
          %v1594 = vsel %vm1409, %v1572, -inf
          %1595 = vmax.xlane.f32.xlu0 %v1594
          %v1596 = vpop.xlane.xlu0 %1595
          %v1597 = vsel %vm1409, %v1573, -inf
          %1598 = vmax.xlane.f32.xlu0 %v1597
          %v1599 = vpop.xlane.xlu0 %1598
          %v1600 = vsel %vm1409, %v1574, -inf
          %1601 = vmax.xlane.f32.xlu0 %v1600
          %v1602 = vpop.xlane.xlu0 %1601
          %v1603 = vsel %vm1409, %v1575, -inf
          %1604 = vmax.xlane.f32.xlu0 %v1603
          %v1605 = vpop.xlane.xlu0 %1604
          %v1606 = vsel %vm1409, %v1576, -inf
          %1607 = vmax.xlane.f32.xlu0 %v1606
          %v1608 = vpop.xlane.xlu0 %1607
          %v1609 = vsel %vm1409, %v1577, -inf
          %1610 = vmax.xlane.f32.xlu0 %v1609
          %v1611 = vpop.xlane.xlu0 %1610
          %v1612 = vsel %vm1409, %v1578, -inf
          %1613 = vmax.xlane.f32.xlu0 %v1612
          %v1614 = vpop.xlane.xlu0 %1613
          %v1615 = vsel %vm1409, %v1579, -inf
          %1616 = vmax.xlane.f32.xlu0 %v1615
          %v1617 = vpop.xlane.xlu0 %1616
          %v1618 = vsel %vm1409, %v1580, -inf
          %1619 = vmax.xlane.f32.xlu0 %v1618
          %v1620 = vpop.xlane.xlu0 %1619
          %v1621 = vsel %vm1409, %v1581, -inf
          %1622 = vmax.xlane.f32.xlu0 %v1621
          %v1623 = vpop.xlane.xlu0 %1622
          %v1624 = vsel %vm1409, %v1582, -inf
          %1625 = vmax.xlane.f32.xlu0 %v1624
          %v1626 = vpop.xlane.xlu0 %1625
          %v1627 = vsel %vm1409, %v1583, -inf
          %1628 = vmax.xlane.f32.xlu0 %v1627
          %v1629 = vpop.xlane.xlu0 %1628
          %v1630 = vsel %vm1409, %v1584, -inf
          %1631 = vmax.xlane.f32.xlu0 %v1630
          %v1632 = vpop.xlane.xlu0 %1631
          %v1633 = vsel %vm1409, %v1585, -inf
          %1634 = vmax.xlane.f32.xlu0 %v1633
          %v1635 = vpop.xlane.xlu0 %1634
          %vm1636 = vcmp.eq.f32.partialorder %v1570, %v1590
          %vm1637 = vcmp.eq.f32.partialorder %v1571, %v1593
          %vm1638 = vcmp.eq.f32.partialorder %v1572, %v1596
          %vm1639 = vcmp.eq.f32.partialorder %v1573, %v1599
          %vm1640 = vcmp.eq.f32.partialorder %v1574, %v1602
          %vm1641 = vcmp.eq.f32.partialorder %v1575, %v1605
          %vm1642 = vcmp.eq.f32.partialorder %v1576, %v1608
          %vm1643 = vcmp.eq.f32.partialorder %v1577, %v1611
          %vm1644 = vcmp.eq.f32.partialorder %v1578, %v1614
          %vm1645 = vcmp.eq.f32.partialorder %v1579, %v1617
          %vm1646 = vcmp.eq.f32.partialorder %v1580, %v1620
          %vm1647 = vcmp.eq.f32.partialorder %v1581, %v1623
          %vm1648 = vcmp.eq.f32.partialorder %v1582, %v1626
          %vm1649 = vcmp.eq.f32.partialorder %v1583, %v1629
          %vm1650 = vcmp.eq.f32.partialorder %v1584, %v1632
          %vm1651 = vcmp.eq.f32.partialorder %v1585, %v1635
          %v1652 = vsel %vm1636, %v1587, 4
          %v1653 = vsel %vm1637, %v1587, 4
          %v1654 = vsel %vm1638, %v1587, 4
          %v1655 = vsel %vm1639, %v1587, 4
          %v1656 = vsel %vm1640, %v1587, 4
          %v1657 = vsel %vm1641, %v1587, 4
          %v1658 = vsel %vm1642, %v1587, 4
          %v1659 = vsel %vm1643, %v1587, 4
          %v1660 = vsel %vm1644, %v1587, 4
          %v1661 = vsel %vm1645, %v1587, 4
          %v1662 = vsel %vm1646, %v1587, 4
          %v1663 = vsel %vm1647, %v1587, 4
          %v1664 = vsel %vm1648, %v1587, 4
          %v1665 = vsel %vm1649, %v1587, 4
          %v1666 = vsel %vm1650, %v1587, 4
          %v1667 = vsel %vm1651, %v1587, 4
          %v1668 = vsel %vm1409, %v1652, 2147483647
          %v1669 = vand.u32 %v1668, 65535
          %v1670 = vshra.s32 %v1668, 16
          %v1671 = vcvt.s32.f32 %v1669
          %v1672 = vcvt.s32.f32 %v1670
          %1673 = vmin.xlane.f32.xlu0 %v1672
          %v1674 = vpop.xlane.xlu0 %1673
          %vm1675 = vcmp.eq.f32.partialorder %v1672, %v1674
          %v1676 = vsel %vm1675, %v1671, inf
          %1677 = vmin.xlane.f32.xlu0 %v1676
          %v1678 = vpop.xlane.xlu0 %1677
          %v1679 = vcvt.f32.s32 %v1678
          %v1680 = vcvt.f32.s32 %v1674
          %v1681 = vshll.u32 %v1680, 16
          %v1682 = vadd.s32 %v1681, %v1679
          %v1683 = vsel %vm1409, %v1653, 2147483647
          %v1684 = vand.u32 %v1683, 65535
          %v1685 = vshra.s32 %v1683, 16
          %v1686 = vcvt.s32.f32 %v1684
          %v1687 = vcvt.s32.f32 %v1685
          %1688 = vmin.xlane.f32.xlu0 %v1687
          %v1689 = vpop.xlane.xlu0 %1688
          %vm1690 = vcmp.eq.f32.partialorder %v1687, %v1689
          %v1691 = vsel %vm1690, %v1686, inf
          %1692 = vmin.xlane.f32.xlu0 %v1691
          %v1693 = vpop.xlane.xlu0 %1692
          %v1694 = vcvt.f32.s32 %v1693
          %v1695 = vcvt.f32.s32 %v1689
          %v1696 = vshll.u32 %v1695, 16
          %v1697 = vadd.s32 %v1696, %v1694
          %v1698 = vsel %vm1409, %v1654, 2147483647
          %v1699 = vand.u32 %v1698, 65535
          %v1700 = vshra.s32 %v1698, 16
          %v1701 = vcvt.s32.f32 %v1699
          %v1702 = vcvt.s32.f32 %v1700
          %1703 = vmin.xlane.f32.xlu0 %v1702
          %v1704 = vpop.xlane.xlu0 %1703
          %vm1705 = vcmp.eq.f32.partialorder %v1702, %v1704
          %v1706 = vsel %vm1705, %v1701, inf
          %1707 = vmin.xlane.f32.xlu0 %v1706
          %v1708 = vpop.xlane.xlu0 %1707
          %v1709 = vcvt.f32.s32 %v1708
          %v1710 = vcvt.f32.s32 %v1704
          %v1711 = vshll.u32 %v1710, 16
          %v1712 = vadd.s32 %v1711, %v1709
          %v1713 = vsel %vm1409, %v1655, 2147483647
          %v1714 = vand.u32 %v1713, 65535
          %v1715 = vshra.s32 %v1713, 16
          %v1716 = vcvt.s32.f32 %v1714
          %v1717 = vcvt.s32.f32 %v1715
          %1718 = vmin.xlane.f32.xlu0 %v1717
          %v1719 = vpop.xlane.xlu0 %1718
          %vm1720 = vcmp.eq.f32.partialorder %v1717, %v1719
          %v1721 = vsel %vm1720, %v1716, inf
          %1722 = vmin.xlane.f32.xlu0 %v1721
          %v1723 = vpop.xlane.xlu0 %1722
          %v1724 = vcvt.f32.s32 %v1723
          %v1725 = vcvt.f32.s32 %v1719
          %v1726 = vshll.u32 %v1725, 16
          %v1727 = vadd.s32 %v1726, %v1724
          %v1728 = vsel %vm1409, %v1656, 2147483647
          %v1729 = vand.u32 %v1728, 65535
          %v1730 = vshra.s32 %v1728, 16
          %v1731 = vcvt.s32.f32 %v1729
          %v1732 = vcvt.s32.f32 %v1730
          %1733 = vmin.xlane.f32.xlu0 %v1732
          %v1734 = vpop.xlane.xlu0 %1733
          %vm1735 = vcmp.eq.f32.partialorder %v1732, %v1734
          %v1736 = vsel %vm1735, %v1731, inf
          %1737 = vmin.xlane.f32.xlu0 %v1736
          %v1738 = vpop.xlane.xlu0 %1737
          %v1739 = vcvt.f32.s32 %v1738
          %v1740 = vcvt.f32.s32 %v1734
          %v1741 = vshll.u32 %v1740, 16
          %v1742 = vadd.s32 %v1741, %v1739
          %v1743 = vsel %vm1409, %v1657, 2147483647
          %v1744 = vand.u32 %v1743, 65535
          %v1745 = vshra.s32 %v1743, 16
          %v1746 = vcvt.s32.f32 %v1744
          %v1747 = vcvt.s32.f32 %v1745
          %1748 = vmin.xlane.f32.xlu0 %v1747
          %v1749 = vpop.xlane.xlu0 %1748
          %vm1750 = vcmp.eq.f32.partialorder %v1747, %v1749
          %v1751 = vsel %vm1750, %v1746, inf
          %1752 = vmin.xlane.f32.xlu0 %v1751
          %v1753 = vpop.xlane.xlu0 %1752
          %v1754 = vcvt.f32.s32 %v1753
          %v1755 = vcvt.f32.s32 %v1749
          %v1756 = vshll.u32 %v1755, 16
          %v1757 = vadd.s32 %v1756, %v1754
          %v1758 = vsel %vm1409, %v1658, 2147483647
          %v1759 = vand.u32 %v1758, 65535
          %v1760 = vshra.s32 %v1758, 16
          %v1761 = vcvt.s32.f32 %v1759
          %v1762 = vcvt.s32.f32 %v1760
          %1763 = vmin.xlane.f32.xlu0 %v1762
          %v1764 = vpop.xlane.xlu0 %1763
          %vm1765 = vcmp.eq.f32.partialorder %v1762, %v1764
          %v1766 = vsel %vm1765, %v1761, inf
          %1767 = vmin.xlane.f32.xlu0 %v1766
          %v1768 = vpop.xlane.xlu0 %1767
          %v1769 = vcvt.f32.s32 %v1768
          %v1770 = vcvt.f32.s32 %v1764
          %v1771 = vshll.u32 %v1770, 16
          %v1772 = vadd.s32 %v1771, %v1769
          %v1773 = vsel %vm1409, %v1659, 2147483647
          %v1774 = vand.u32 %v1773, 65535
          %v1775 = vshra.s32 %v1773, 16
          %v1776 = vcvt.s32.f32 %v1774
          %v1777 = vcvt.s32.f32 %v1775
          %1778 = vmin.xlane.f32.xlu0 %v1777
          %v1779 = vpop.xlane.xlu0 %1778
          %vm1780 = vcmp.eq.f32.partialorder %v1777, %v1779
          %v1781 = vsel %vm1780, %v1776, inf
          %1782 = vmin.xlane.f32.xlu0 %v1781
          %v1783 = vpop.xlane.xlu0 %1782
          %v1784 = vcvt.f32.s32 %v1783
          %v1785 = vcvt.f32.s32 %v1779
          %v1786 = vshll.u32 %v1785, 16
          %v1787 = vadd.s32 %v1786, %v1784
          %v1788 = vsel %vm1409, %v1660, 2147483647
          %v1789 = vand.u32 %v1788, 65535
          %v1790 = vshra.s32 %v1788, 16
          %v1791 = vcvt.s32.f32 %v1789
          %v1792 = vcvt.s32.f32 %v1790
          %1793 = vmin.xlane.f32.xlu0 %v1792
          %v1794 = vpop.xlane.xlu0 %1793
          %vm1795 = vcmp.eq.f32.partialorder %v1792, %v1794
          %v1796 = vsel %vm1795, %v1791, inf
          %1797 = vmin.xlane.f32.xlu0 %v1796
          %v1798 = vpop.xlane.xlu0 %1797
          %v1799 = vcvt.f32.s32 %v1798
          %v1800 = vcvt.f32.s32 %v1794
          %v1801 = vshll.u32 %v1800, 16
          %v1802 = vadd.s32 %v1801, %v1799
          %v1803 = vsel %vm1409, %v1661, 2147483647
          %v1804 = vand.u32 %v1803, 65535
          %v1805 = vshra.s32 %v1803, 16
          %v1806 = vcvt.s32.f32 %v1804
          %v1807 = vcvt.s32.f32 %v1805
          %1808 = vmin.xlane.f32.xlu0 %v1807
          %v1809 = vpop.xlane.xlu0 %1808
          %vm1810 = vcmp.eq.f32.partialorder %v1807, %v1809
          %v1811 = vsel %vm1810, %v1806, inf
          %1812 = vmin.xlane.f32.xlu0 %v1811
          %v1813 = vpop.xlane.xlu0 %1812
          %v1814 = vcvt.f32.s32 %v1813
          %v1815 = vcvt.f32.s32 %v1809
          %v1816 = vshll.u32 %v1815, 16
          %v1817 = vadd.s32 %v1816, %v1814
          %v1818 = vsel %vm1409, %v1662, 2147483647
          %v1819 = vand.u32 %v1818, 65535
          %v1820 = vshra.s32 %v1818, 16
          %v1821 = vcvt.s32.f32 %v1819
          %v1822 = vcvt.s32.f32 %v1820
          %1823 = vmin.xlane.f32.xlu0 %v1822
          %v1824 = vpop.xlane.xlu0 %1823
          %vm1825 = vcmp.eq.f32.partialorder %v1822, %v1824
          %v1826 = vsel %vm1825, %v1821, inf
          %1827 = vmin.xlane.f32.xlu0 %v1826
          %v1828 = vpop.xlane.xlu0 %1827
          %v1829 = vcvt.f32.s32 %v1828
          %v1830 = vcvt.f32.s32 %v1824
          %v1831 = vshll.u32 %v1830, 16
          %v1832 = vadd.s32 %v1831, %v1829
          %v1833 = vsel %vm1409, %v1663, 2147483647
          %v1834 = vand.u32 %v1833, 65535
          %v1835 = vshra.s32 %v1833, 16
          %v1836 = vcvt.s32.f32 %v1834
          %v1837 = vcvt.s32.f32 %v1835
          %1838 = vmin.xlane.f32.xlu0 %v1837
          %v1839 = vpop.xlane.xlu0 %1838
          %vm1840 = vcmp.eq.f32.partialorder %v1837, %v1839
          %v1841 = vsel %vm1840, %v1836, inf
          %1842 = vmin.xlane.f32.xlu0 %v1841
          %v1843 = vpop.xlane.xlu0 %1842
          %v1844 = vcvt.f32.s32 %v1843
          %v1845 = vcvt.f32.s32 %v1839
          %v1846 = vshll.u32 %v1845, 16
          %v1847 = vadd.s32 %v1846, %v1844
          %v1848 = vsel %vm1409, %v1664, 2147483647
          %v1849 = vand.u32 %v1848, 65535
          %v1850 = vshra.s32 %v1848, 16
          %v1851 = vcvt.s32.f32 %v1849
          %v1852 = vcvt.s32.f32 %v1850
          %1853 = vmin.xlane.f32.xlu0 %v1852
          %v1854 = vpop.xlane.xlu0 %1853
          %vm1855 = vcmp.eq.f32.partialorder %v1852, %v1854
          %v1856 = vsel %vm1855, %v1851, inf
          %1857 = vmin.xlane.f32.xlu0 %v1856
          %v1858 = vpop.xlane.xlu0 %1857
          %v1859 = vcvt.f32.s32 %v1858
          %v1860 = vcvt.f32.s32 %v1854
          %v1861 = vshll.u32 %v1860, 16
          %v1862 = vadd.s32 %v1861, %v1859
          %v1863 = vsel %vm1409, %v1665, 2147483647
          %v1864 = vand.u32 %v1863, 65535
          %v1865 = vshra.s32 %v1863, 16
          %v1866 = vcvt.s32.f32 %v1864
          %v1867 = vcvt.s32.f32 %v1865
          %1868 = vmin.xlane.f32.xlu0 %v1867
          %v1869 = vpop.xlane.xlu0 %1868
          %vm1870 = vcmp.eq.f32.partialorder %v1867, %v1869
          %v1871 = vsel %vm1870, %v1866, inf
          %1872 = vmin.xlane.f32.xlu0 %v1871
          %v1873 = vpop.xlane.xlu0 %1872
          %v1874 = vcvt.f32.s32 %v1873
          %v1875 = vcvt.f32.s32 %v1869
          %v1876 = vshll.u32 %v1875, 16
          %v1877 = vadd.s32 %v1876, %v1874
          %v1878 = vsel %vm1409, %v1666, 2147483647
          %v1879 = vand.u32 %v1878, 65535
          %v1880 = vshra.s32 %v1878, 16
          %v1881 = vcvt.s32.f32 %v1879
          %v1882 = vcvt.s32.f32 %v1880
          %1883 = vmin.xlane.f32.xlu0 %v1882
          %v1884 = vpop.xlane.xlu0 %1883
          %vm1885 = vcmp.eq.f32.partialorder %v1882, %v1884
          %v1886 = vsel %vm1885, %v1881, inf
          %1887 = vmin.xlane.f32.xlu0 %v1886
          %v1888 = vpop.xlane.xlu0 %1887
          %v1889 = vcvt.f32.s32 %v1888
          %v1890 = vcvt.f32.s32 %v1884
          %v1891 = vshll.u32 %v1890, 16
          %v1892 = vadd.s32 %v1891, %v1889
          %v1893 = vsel %vm1409, %v1667, 2147483647
          %v1894 = vand.u32 %v1893, 65535
          %v1895 = vshra.s32 %v1893, 16
          %v1896 = vcvt.s32.f32 %v1894
          %v1897 = vcvt.s32.f32 %v1895
          %1898 = vmin.xlane.f32.xlu0 %v1897
          %v1899 = vpop.xlane.xlu0 %1898
          %vm1900 = vcmp.eq.f32.partialorder %v1897, %v1899
          %v1901 = vsel %vm1900, %v1896, inf
          %1902 = vmin.xlane.f32.xlu0 %v1901
          %v1903 = vpop.xlane.xlu0 %1902
          %v1904 = vcvt.f32.s32 %v1903
          %v1905 = vcvt.f32.s32 %v1899
          %v1906 = vshll.u32 %v1905, 16
          %v1907 = vadd.s32 %v1906, %v1904
          %vm1908 = vcmp.eq.s32.totalorder %v1587, %v1682
          %vm1909 = vcmp.eq.s32.totalorder %v1587, %v1697
          %vm1910 = vcmp.eq.s32.totalorder %v1587, %v1712
          %vm1911 = vcmp.eq.s32.totalorder %v1587, %v1727
          %vm1912 = vcmp.eq.s32.totalorder %v1587, %v1742
          %vm1913 = vcmp.eq.s32.totalorder %v1587, %v1757
          %vm1914 = vcmp.eq.s32.totalorder %v1587, %v1772
          %vm1915 = vcmp.eq.s32.totalorder %v1587, %v1787
          %vm1916 = vcmp.eq.s32.totalorder %v1587, %v1802
          %vm1917 = vcmp.eq.s32.totalorder %v1587, %v1817
          %vm1918 = vcmp.eq.s32.totalorder %v1587, %v1832
          %vm1919 = vcmp.eq.s32.totalorder %v1587, %v1847
          %vm1920 = vcmp.eq.s32.totalorder %v1587, %v1862
          %vm1921 = vcmp.eq.s32.totalorder %v1587, %v1877
          %vm1922 = vcmp.eq.s32.totalorder %v1587, %v1892
          %vm1923 = vcmp.eq.s32.totalorder %v1587, %v1907
          %v1924 = vsel %vm1908, -inf, %v1570
          %v1925 = vsel %vm1909, -inf, %v1571
          %v1926 = vsel %vm1910, -inf, %v1572
          %v1927 = vsel %vm1911, -inf, %v1573
          %v1928 = vsel %vm1912, -inf, %v1574
          %v1929 = vsel %vm1913, -inf, %v1575
          %v1930 = vsel %vm1914, -inf, %v1576
          %v1931 = vsel %vm1915, -inf, %v1577
          %v1932 = vsel %vm1916, -inf, %v1578
          %v1933 = vsel %vm1917, -inf, %v1579
          %v1934 = vsel %vm1918, -inf, %v1580
          %v1935 = vsel %vm1919, -inf, %v1581
          %v1936 = vsel %vm1920, -inf, %v1582
          %v1937 = vsel %vm1921, -inf, %v1583
          %v1938 = vsel %vm1922, -inf, %v1584
          %v1939 = vsel %vm1923, -inf, %v1585
          %v1940 = vsel %vm1409, %v1924, -inf
          %1941 = vmax.xlane.f32.xlu0 %v1940
          %v1942 = vpop.xlane.xlu0 %1941
          %v1943 = vsel %vm1409, %v1925, -inf
          %1944 = vmax.xlane.f32.xlu0 %v1943
          %v1945 = vpop.xlane.xlu0 %1944
          %v1946 = vsel %vm1409, %v1926, -inf
          %1947 = vmax.xlane.f32.xlu0 %v1946
          %v1948 = vpop.xlane.xlu0 %1947
          %v1949 = vsel %vm1409, %v1927, -inf
          %1950 = vmax.xlane.f32.xlu0 %v1949
          %v1951 = vpop.xlane.xlu0 %1950
          %v1952 = vsel %vm1409, %v1928, -inf
          %1953 = vmax.xlane.f32.xlu0 %v1952
          %v1954 = vpop.xlane.xlu0 %1953
          %v1955 = vsel %vm1409, %v1929, -inf
          %1956 = vmax.xlane.f32.xlu0 %v1955
          %v1957 = vpop.xlane.xlu0 %1956
          %v1958 = vsel %vm1409, %v1930, -inf
          %1959 = vmax.xlane.f32.xlu0 %v1958
          %v1960 = vpop.xlane.xlu0 %1959
          %v1961 = vsel %vm1409, %v1931, -inf
          %1962 = vmax.xlane.f32.xlu0 %v1961
          %v1963 = vpop.xlane.xlu0 %1962
          %v1964 = vsel %vm1409, %v1932, -inf
          %1965 = vmax.xlane.f32.xlu0 %v1964
          %v1966 = vpop.xlane.xlu0 %1965
          %v1967 = vsel %vm1409, %v1933, -inf
          %1968 = vmax.xlane.f32.xlu0 %v1967
          %v1969 = vpop.xlane.xlu0 %1968
          %v1970 = vsel %vm1409, %v1934, -inf
          %1971 = vmax.xlane.f32.xlu0 %v1970
          %v1972 = vpop.xlane.xlu0 %1971
          %v1973 = vsel %vm1409, %v1935, -inf
          %1974 = vmax.xlane.f32.xlu0 %v1973
          %v1975 = vpop.xlane.xlu0 %1974
          %v1976 = vsel %vm1409, %v1936, -inf
          %1977 = vmax.xlane.f32.xlu0 %v1976
          %v1978 = vpop.xlane.xlu0 %1977
          %v1979 = vsel %vm1409, %v1937, -inf
          %1980 = vmax.xlane.f32.xlu0 %v1979
          %v1981 = vpop.xlane.xlu0 %1980
          %v1982 = vsel %vm1409, %v1938, -inf
          %1983 = vmax.xlane.f32.xlu0 %v1982
          %v1984 = vpop.xlane.xlu0 %1983
          %v1985 = vsel %vm1409, %v1939, -inf
          %1986 = vmax.xlane.f32.xlu0 %v1985
          %v1987 = vpop.xlane.xlu0 %1986
          %vm1988 = vcmp.eq.f32.partialorder %v1924, %v1942
          %vm1989 = vcmp.eq.f32.partialorder %v1925, %v1945
          %vm1990 = vcmp.eq.f32.partialorder %v1926, %v1948
          %vm1991 = vcmp.eq.f32.partialorder %v1927, %v1951
          %vm1992 = vcmp.eq.f32.partialorder %v1928, %v1954
          %vm1993 = vcmp.eq.f32.partialorder %v1929, %v1957
          %vm1994 = vcmp.eq.f32.partialorder %v1930, %v1960
          %vm1995 = vcmp.eq.f32.partialorder %v1931, %v1963
          %vm1996 = vcmp.eq.f32.partialorder %v1932, %v1966
          %vm1997 = vcmp.eq.f32.partialorder %v1933, %v1969
          %vm1998 = vcmp.eq.f32.partialorder %v1934, %v1972
          %vm1999 = vcmp.eq.f32.partialorder %v1935, %v1975
          %vm2000 = vcmp.eq.f32.partialorder %v1936, %v1978
          %vm2001 = vcmp.eq.f32.partialorder %v1937, %v1981
          %vm2002 = vcmp.eq.f32.partialorder %v1938, %v1984
          %vm2003 = vcmp.eq.f32.partialorder %v1939, %v1987
          %v2004 = vsel %vm1988, %v1587, 4
          %v2005 = vsel %vm1989, %v1587, 4
          %v2006 = vsel %vm1990, %v1587, 4
          %v2007 = vsel %vm1991, %v1587, 4
          %v2008 = vsel %vm1992, %v1587, 4
          %v2009 = vsel %vm1993, %v1587, 4
          %v2010 = vsel %vm1994, %v1587, 4
          %v2011 = vsel %vm1995, %v1587, 4
          %v2012 = vsel %vm1996, %v1587, 4
          %v2013 = vsel %vm1997, %v1587, 4
          %v2014 = vsel %vm1998, %v1587, 4
          %v2015 = vsel %vm1999, %v1587, 4
          %v2016 = vsel %vm2000, %v1587, 4
          %v2017 = vsel %vm2001, %v1587, 4
          %v2018 = vsel %vm2002, %v1587, 4
          %v2019 = vsel %vm2003, %v1587, 4
          %v2020 = vsel %vm1409, %v2004, 2147483647
          %v2021 = vand.u32 %v2020, 65535
          %v2022 = vshra.s32 %v2020, 16
          %v2023 = vcvt.s32.f32 %v2021
          %v2024 = vcvt.s32.f32 %v2022
          %2025 = vmin.xlane.f32.xlu0 %v2024
          %v2026 = vpop.xlane.xlu0 %2025
          %vm2027 = vcmp.eq.f32.partialorder %v2024, %v2026
          %v2028 = vsel %vm2027, %v2023, inf
          %2029 = vmin.xlane.f32.xlu0 %v2028
          %v2030 = vpop.xlane.xlu0 %2029
          %v2031 = vcvt.f32.s32 %v2030
          %v2032 = vcvt.f32.s32 %v2026
          %v2033 = vshll.u32 %v2032, 16
          %v2034 = vadd.s32 %v2033, %v2031
          %v2035 = vsel %vm1409, %v2005, 2147483647
          %v2036 = vand.u32 %v2035, 65535
          %v2037 = vshra.s32 %v2035, 16
          %v2038 = vcvt.s32.f32 %v2036
          %v2039 = vcvt.s32.f32 %v2037
          %2040 = vmin.xlane.f32.xlu0 %v2039
          %v2041 = vpop.xlane.xlu0 %2040
          %vm2042 = vcmp.eq.f32.partialorder %v2039, %v2041
          %v2043 = vsel %vm2042, %v2038, inf
          %2044 = vmin.xlane.f32.xlu0 %v2043
          %v2045 = vpop.xlane.xlu0 %2044
          %v2046 = vcvt.f32.s32 %v2045
          %v2047 = vcvt.f32.s32 %v2041
          %v2048 = vshll.u32 %v2047, 16
          %v2049 = vadd.s32 %v2048, %v2046
          %v2050 = vsel %vm1409, %v2006, 2147483647
          %v2051 = vand.u32 %v2050, 65535
          %v2052 = vshra.s32 %v2050, 16
          %v2053 = vcvt.s32.f32 %v2051
          %v2054 = vcvt.s32.f32 %v2052
          %2055 = vmin.xlane.f32.xlu0 %v2054
          %v2056 = vpop.xlane.xlu0 %2055
          %vm2057 = vcmp.eq.f32.partialorder %v2054, %v2056
          %v2058 = vsel %vm2057, %v2053, inf
          %2059 = vmin.xlane.f32.xlu0 %v2058
          %v2060 = vpop.xlane.xlu0 %2059
          %v2061 = vcvt.f32.s32 %v2060
          %v2062 = vcvt.f32.s32 %v2056
          %v2063 = vshll.u32 %v2062, 16
          %v2064 = vadd.s32 %v2063, %v2061
          %v2065 = vsel %vm1409, %v2007, 2147483647
          %v2066 = vand.u32 %v2065, 65535
          %v2067 = vshra.s32 %v2065, 16
          %v2068 = vcvt.s32.f32 %v2066
          %v2069 = vcvt.s32.f32 %v2067
          %2070 = vmin.xlane.f32.xlu0 %v2069
          %v2071 = vpop.xlane.xlu0 %2070
          %vm2072 = vcmp.eq.f32.partialorder %v2069, %v2071
          %v2073 = vsel %vm2072, %v2068, inf
          %2074 = vmin.xlane.f32.xlu0 %v2073
          %v2075 = vpop.xlane.xlu0 %2074
          %v2076 = vcvt.f32.s32 %v2075
          %v2077 = vcvt.f32.s32 %v2071
          %v2078 = vshll.u32 %v2077, 16
          %v2079 = vadd.s32 %v2078, %v2076
          %v2080 = vsel %vm1409, %v2008, 2147483647
          %v2081 = vand.u32 %v2080, 65535
          %v2082 = vshra.s32 %v2080, 16
          %v2083 = vcvt.s32.f32 %v2081
          %v2084 = vcvt.s32.f32 %v2082
          %2085 = vmin.xlane.f32.xlu0 %v2084
          %v2086 = vpop.xlane.xlu0 %2085
          %vm2087 = vcmp.eq.f32.partialorder %v2084, %v2086
          %v2088 = vsel %vm2087, %v2083, inf
          %2089 = vmin.xlane.f32.xlu0 %v2088
          %v2090 = vpop.xlane.xlu0 %2089
          %v2091 = vcvt.f32.s32 %v2090
          %v2092 = vcvt.f32.s32 %v2086
          %v2093 = vshll.u32 %v2092, 16
          %v2094 = vadd.s32 %v2093, %v2091
          %v2095 = vsel %vm1409, %v2009, 2147483647
          %v2096 = vand.u32 %v2095, 65535
          %v2097 = vshra.s32 %v2095, 16
          %v2098 = vcvt.s32.f32 %v2096
          %v2099 = vcvt.s32.f32 %v2097
          %2100 = vmin.xlane.f32.xlu0 %v2099
          %v2101 = vpop.xlane.xlu0 %2100
          %vm2102 = vcmp.eq.f32.partialorder %v2099, %v2101
          %v2103 = vsel %vm2102, %v2098, inf
          %2104 = vmin.xlane.f32.xlu0 %v2103
          %v2105 = vpop.xlane.xlu0 %2104
          %v2106 = vcvt.f32.s32 %v2105
          %v2107 = vcvt.f32.s32 %v2101
          %v2108 = vshll.u32 %v2107, 16
          %v2109 = vadd.s32 %v2108, %v2106
          %v2110 = vsel %vm1409, %v2010, 2147483647
          %v2111 = vand.u32 %v2110, 65535
          %v2112 = vshra.s32 %v2110, 16
          %v2113 = vcvt.s32.f32 %v2111
          %v2114 = vcvt.s32.f32 %v2112
          %2115 = vmin.xlane.f32.xlu0 %v2114
          %v2116 = vpop.xlane.xlu0 %2115
          %vm2117 = vcmp.eq.f32.partialorder %v2114, %v2116
          %v2118 = vsel %vm2117, %v2113, inf
          %2119 = vmin.xlane.f32.xlu0 %v2118
          %v2120 = vpop.xlane.xlu0 %2119
          %v2121 = vcvt.f32.s32 %v2120
          %v2122 = vcvt.f32.s32 %v2116
          %v2123 = vshll.u32 %v2122, 16
          %v2124 = vadd.s32 %v2123, %v2121
          %v2125 = vsel %vm1409, %v2011, 2147483647
          %v2126 = vand.u32 %v2125, 65535
          %v2127 = vshra.s32 %v2125, 16
          %v2128 = vcvt.s32.f32 %v2126
          %v2129 = vcvt.s32.f32 %v2127
          %2130 = vmin.xlane.f32.xlu0 %v2129
          %v2131 = vpop.xlane.xlu0 %2130
          %vm2132 = vcmp.eq.f32.partialorder %v2129, %v2131
          %v2133 = vsel %vm2132, %v2128, inf
          %2134 = vmin.xlane.f32.xlu0 %v2133
          %v2135 = vpop.xlane.xlu0 %2134
          %v2136 = vcvt.f32.s32 %v2135
          %v2137 = vcvt.f32.s32 %v2131
          %v2138 = vshll.u32 %v2137, 16
          %v2139 = vadd.s32 %v2138, %v2136
          %v2140 = vsel %vm1409, %v2012, 2147483647
          %v2141 = vand.u32 %v2140, 65535
          %v2142 = vshra.s32 %v2140, 16
          %v2143 = vcvt.s32.f32 %v2141
          %v2144 = vcvt.s32.f32 %v2142
          %2145 = vmin.xlane.f32.xlu0 %v2144
          %v2146 = vpop.xlane.xlu0 %2145
          %vm2147 = vcmp.eq.f32.partialorder %v2144, %v2146
          %v2148 = vsel %vm2147, %v2143, inf
          %2149 = vmin.xlane.f32.xlu0 %v2148
          %v2150 = vpop.xlane.xlu0 %2149
          %v2151 = vcvt.f32.s32 %v2150
          %v2152 = vcvt.f32.s32 %v2146
          %v2153 = vshll.u32 %v2152, 16
          %v2154 = vadd.s32 %v2153, %v2151
          %v2155 = vsel %vm1409, %v2013, 2147483647
          %v2156 = vand.u32 %v2155, 65535
          %v2157 = vshra.s32 %v2155, 16
          %v2158 = vcvt.s32.f32 %v2156
          %v2159 = vcvt.s32.f32 %v2157
          %2160 = vmin.xlane.f32.xlu0 %v2159
          %v2161 = vpop.xlane.xlu0 %2160
          %vm2162 = vcmp.eq.f32.partialorder %v2159, %v2161
          %v2163 = vsel %vm2162, %v2158, inf
          %2164 = vmin.xlane.f32.xlu0 %v2163
          %v2165 = vpop.xlane.xlu0 %2164
          %v2166 = vcvt.f32.s32 %v2165
          %v2167 = vcvt.f32.s32 %v2161
          %v2168 = vshll.u32 %v2167, 16
          %v2169 = vadd.s32 %v2168, %v2166
          %v2170 = vsel %vm1409, %v2014, 2147483647
          %v2171 = vand.u32 %v2170, 65535
          %v2172 = vshra.s32 %v2170, 16
          %v2173 = vcvt.s32.f32 %v2171
          %v2174 = vcvt.s32.f32 %v2172
          %2175 = vmin.xlane.f32.xlu0 %v2174
          %v2176 = vpop.xlane.xlu0 %2175
          %vm2177 = vcmp.eq.f32.partialorder %v2174, %v2176
          %v2178 = vsel %vm2177, %v2173, inf
          %2179 = vmin.xlane.f32.xlu0 %v2178
          %v2180 = vpop.xlane.xlu0 %2179
          %v2181 = vcvt.f32.s32 %v2180
          %v2182 = vcvt.f32.s32 %v2176
          %v2183 = vshll.u32 %v2182, 16
          %v2184 = vadd.s32 %v2183, %v2181
          %v2185 = vsel %vm1409, %v2015, 2147483647
          %v2186 = vand.u32 %v2185, 65535
          %v2187 = vshra.s32 %v2185, 16
          %v2188 = vcvt.s32.f32 %v2186
          %v2189 = vcvt.s32.f32 %v2187
          %2190 = vmin.xlane.f32.xlu0 %v2189
          %v2191 = vpop.xlane.xlu0 %2190
          %vm2192 = vcmp.eq.f32.partialorder %v2189, %v2191
          %v2193 = vsel %vm2192, %v2188, inf
          %2194 = vmin.xlane.f32.xlu0 %v2193
          %v2195 = vpop.xlane.xlu0 %2194
          %v2196 = vcvt.f32.s32 %v2195
          %v2197 = vcvt.f32.s32 %v2191
          %v2198 = vshll.u32 %v2197, 16
          %v2199 = vadd.s32 %v2198, %v2196
          %v2200 = vsel %vm1409, %v2016, 2147483647
          %v2201 = vand.u32 %v2200, 65535
          %v2202 = vshra.s32 %v2200, 16
          %v2203 = vcvt.s32.f32 %v2201
          %v2204 = vcvt.s32.f32 %v2202
          %2205 = vmin.xlane.f32.xlu0 %v2204
          %v2206 = vpop.xlane.xlu0 %2205
          %vm2207 = vcmp.eq.f32.partialorder %v2204, %v2206
          %v2208 = vsel %vm2207, %v2203, inf
          %2209 = vmin.xlane.f32.xlu0 %v2208
          %v2210 = vpop.xlane.xlu0 %2209
          %v2211 = vcvt.f32.s32 %v2210
          %v2212 = vcvt.f32.s32 %v2206
          %v2213 = vshll.u32 %v2212, 16
          %v2214 = vadd.s32 %v2213, %v2211
          %v2215 = vsel %vm1409, %v2017, 2147483647
          %v2216 = vand.u32 %v2215, 65535
          %v2217 = vshra.s32 %v2215, 16
          %v2218 = vcvt.s32.f32 %v2216
          %v2219 = vcvt.s32.f32 %v2217
          %2220 = vmin.xlane.f32.xlu0 %v2219
          %v2221 = vpop.xlane.xlu0 %2220
          %vm2222 = vcmp.eq.f32.partialorder %v2219, %v2221
          %v2223 = vsel %vm2222, %v2218, inf
          %2224 = vmin.xlane.f32.xlu0 %v2223
          %v2225 = vpop.xlane.xlu0 %2224
          %v2226 = vcvt.f32.s32 %v2225
          %v2227 = vcvt.f32.s32 %v2221
          %v2228 = vshll.u32 %v2227, 16
          %v2229 = vadd.s32 %v2228, %v2226
          %v2230 = vsel %vm1409, %v2018, 2147483647
          %v2231 = vand.u32 %v2230, 65535
          %v2232 = vshra.s32 %v2230, 16
          %v2233 = vcvt.s32.f32 %v2231
          %v2234 = vcvt.s32.f32 %v2232
          %2235 = vmin.xlane.f32.xlu0 %v2234
          %v2236 = vpop.xlane.xlu0 %2235
          %vm2237 = vcmp.eq.f32.partialorder %v2234, %v2236
          %v2238 = vsel %vm2237, %v2233, inf
          %2239 = vmin.xlane.f32.xlu0 %v2238
          %v2240 = vpop.xlane.xlu0 %2239
          %v2241 = vcvt.f32.s32 %v2240
          %v2242 = vcvt.f32.s32 %v2236
          %v2243 = vshll.u32 %v2242, 16
          %v2244 = vadd.s32 %v2243, %v2241
          %v2245 = vsel %vm1409, %v2019, 2147483647
          %v2246 = vand.u32 %v2245, 65535
          %v2247 = vshra.s32 %v2245, 16
          %v2248 = vcvt.s32.f32 %v2246
          %v2249 = vcvt.s32.f32 %v2247
          %2250 = vmin.xlane.f32.xlu0 %v2249
          %v2251 = vpop.xlane.xlu0 %2250
          %vm2252 = vcmp.eq.f32.partialorder %v2249, %v2251
          %v2253 = vsel %vm2252, %v2248, inf
          %2254 = vmin.xlane.f32.xlu0 %v2253
          %v2255 = vpop.xlane.xlu0 %2254
          %v2256 = vcvt.f32.s32 %v2255
          %v2257 = vcvt.f32.s32 %v2251
          %v2258 = vshll.u32 %v2257, 16
          %v2259 = vadd.s32 %v2258, %v2256
          %vm2260 = vcmp.eq.s32.totalorder %v1587, %v2034
          %vm2261 = vcmp.eq.s32.totalorder %v1587, %v2049
          %vm2262 = vcmp.eq.s32.totalorder %v1587, %v2064
          %vm2263 = vcmp.eq.s32.totalorder %v1587, %v2079
          %vm2264 = vcmp.eq.s32.totalorder %v1587, %v2094
          %vm2265 = vcmp.eq.s32.totalorder %v1587, %v2109
          %vm2266 = vcmp.eq.s32.totalorder %v1587, %v2124
          %vm2267 = vcmp.eq.s32.totalorder %v1587, %v2139
          %vm2268 = vcmp.eq.s32.totalorder %v1587, %v2154
          %vm2269 = vcmp.eq.s32.totalorder %v1587, %v2169
          %vm2270 = vcmp.eq.s32.totalorder %v1587, %v2184
          %vm2271 = vcmp.eq.s32.totalorder %v1587, %v2199
          %vm2272 = vcmp.eq.s32.totalorder %v1587, %v2214
          %vm2273 = vcmp.eq.s32.totalorder %v1587, %v2229
          %vm2274 = vcmp.eq.s32.totalorder %v1587, %v2244
          %vm2275 = vcmp.eq.s32.totalorder %v1587, %v2259
          %vm2276 = vmor %vm1908, %vm2260
          %vm2277 = vmor %vm1909, %vm2261
          %vm2278 = vmor %vm1910, %vm2262
          %vm2279 = vmor %vm1911, %vm2263
          %vm2280 = vmor %vm1912, %vm2264
          %vm2281 = vmor %vm1913, %vm2265
          %vm2282 = vmor %vm1914, %vm2266
          %vm2283 = vmor %vm1915, %vm2267
          %vm2284 = vmor %vm1916, %vm2268
          %vm2285 = vmor %vm1917, %vm2269
          %vm2286 = vmor %vm1918, %vm2270
          %vm2287 = vmor %vm1919, %vm2271
          %vm2288 = vmor %vm1920, %vm2272
          %vm2289 = vmor %vm1921, %vm2273
          %vm2290 = vmor %vm1922, %vm2274
          %vm2291 = vmor %vm1923, %vm2275
          %v2292 = vsel %vm2276, %v1570, 0.0
          %v2293 = vsel %vm2277, %v1571, 0.0
          %v2294 = vsel %vm2278, %v1572, 0.0
          %v2295 = vsel %vm2279, %v1573, 0.0
          %v2296 = vsel %vm2280, %v1574, 0.0
          %v2297 = vsel %vm2281, %v1575, 0.0
          %v2298 = vsel %vm2282, %v1576, 0.0
          %v2299 = vsel %vm2283, %v1577, 0.0
          %v2300 = vsel %vm2284, %v1578, 0.0
          %v2301 = vsel %vm2285, %v1579, 0.0
          %v2302 = vsel %vm2286, %v1580, 0.0
          %v2303 = vsel %vm2287, %v1581, 0.0
          %v2304 = vsel %vm2288, %v1582, 0.0
          %v2305 = vsel %vm2289, %v1583, 0.0
          %v2306 = vsel %vm2290, %v1584, 0.0
          %v2307 = vsel %vm2291, %v1585, 0.0
          %2308 = vst.msk [vmem:[#allocation3] sm:$0xff] %vm1409, %v2292
          %2309 = vst.msk [vmem:[#allocation3 + $0x8] sm:$0xff] %vm1409, %v2293
          %2310 = vst.msk [vmem:[#allocation3 + $0x10] sm:$0xff] %vm1409, %v2294
          %2311 = vst.msk [vmem:[#allocation3 + $0x18] sm:$0xff] %vm1409, %v2295
          %2312 = vst.msk [vmem:[#allocation3 + $0x20] sm:$0xff] %vm1409, %v2296
          %2313 = vst.msk [vmem:[#allocation3 + $0x28] sm:$0xff] %vm1409, %v2297
          %2314 = vst.msk [vmem:[#allocation3 + $0x30] sm:$0xff] %vm1409, %v2298
          %2315 = vst.msk [vmem:[#allocation3 + $0x38] sm:$0xff] %vm1409, %v2299
          %2316 = vst.msk [vmem:[#allocation3 + $0x40] sm:$0xff] %vm1409, %v2300
          %2317 = vst.msk [vmem:[#allocation3 + $0x48] sm:$0xff] %vm1409, %v2301
          %2318 = vst.msk [vmem:[#allocation3 + $0x50] sm:$0xff] %vm1409, %v2302
          %2319 = vst.msk [vmem:[#allocation3 + $0x58] sm:$0xff] %vm1409, %v2303
          %2320 = vst.msk [vmem:[#allocation3 + $0x60] sm:$0xff] %vm1409, %v2304
          %2321 = vst.msk [vmem:[#allocation3 + $0x68] sm:$0xff] %vm1409, %v2305
          %2322 = vst.msk [vmem:[#allocation3 + $0x70] sm:$0xff] %vm1409, %v2306
          %2323 = vst.msk [vmem:[#allocation3 + $0x78] sm:$0xff] %vm1409, %v2307
          %vm2324 = vcmp.eq.s32.totalorder %v1587, 0
          %vm2325 = vcmp.eq.s32.totalorder %v1587, 1
          %v2326 = vsel %vm2325, %v2034, 0
          %v2327 = vsel %vm2325, %v2049, 0
          %v2328 = vsel %vm2325, %v2064, 0
          %v2329 = vsel %vm2325, %v2079, 0
          %v2330 = vsel %vm2325, %v2094, 0
          %v2331 = vsel %vm2325, %v2109, 0
          %v2332 = vsel %vm2325, %v2124, 0
          %v2333 = vsel %vm2325, %v2139, 0
          %v2334 = vsel %vm2325, %v2154, 0
          %v2335 = vsel %vm2325, %v2169, 0
          %v2336 = vsel %vm2325, %v2184, 0
          %v2337 = vsel %vm2325, %v2199, 0
          %v2338 = vsel %vm2325, %v2214, 0
          %v2339 = vsel %vm2325, %v2229, 0
          %v2340 = vsel %vm2325, %v2244, 0
          %v2341 = vsel %vm2325, %v2259, 0
          %v2342 = vsel %vm2324, %v1682, %v2326
          %v2343 = vsel %vm2324, %v1697, %v2327
          %v2344 = vsel %vm2324, %v1712, %v2328
          %v2345 = vsel %vm2324, %v1727, %v2329
          %v2346 = vsel %vm2324, %v1742, %v2330
          %v2347 = vsel %vm2324, %v1757, %v2331
          %v2348 = vsel %vm2324, %v1772, %v2332
          %v2349 = vsel %vm2324, %v1787, %v2333
          %v2350 = vsel %vm2324, %v1802, %v2334
          %v2351 = vsel %vm2324, %v1817, %v2335
          %v2352 = vsel %vm2324, %v1832, %v2336
          %v2353 = vsel %vm2324, %v1847, %v2337
          %v2354 = vsel %vm2324, %v1862, %v2338
          %v2355 = vsel %vm2324, %v1877, %v2339
          %v2356 = vsel %vm2324, %v1892, %v2340
          %v2357 = vsel %vm2324, %v1907, %v2341
          %2358 = vst [vmem:[%s552] sm:$0xff] %v2342
          %2359 = vst [vmem:[%s552 + $0x8] sm:$0xff] %v2343
          %2360 = vst [vmem:[%s552 + $0x10] sm:$0xff] %v2344
          %2361 = vst [vmem:[%s552 + $0x18] sm:$0xff] %v2345
          %2362 = vst [vmem:[%s552 + $0x20] sm:$0xff] %v2346
          %2363 = vst [vmem:[%s552 + $0x28] sm:$0xff] %v2347
          %2364 = vst [vmem:[%s552 + $0x30] sm:$0xff] %v2348
          %2365 = vst [vmem:[%s552 + $0x38] sm:$0xff] %v2349
          %2366 = vst [vmem:[%s552 + $0x40] sm:$0xff] %v2350
          %2367 = vst [vmem:[%s552 + $0x48] sm:$0xff] %v2351
          %2368 = vst [vmem:[%s552 + $0x50] sm:$0xff] %v2352
          %2369 = vst [vmem:[%s552 + $0x58] sm:$0xff] %v2353
          %2370 = vst [vmem:[%s552 + $0x60] sm:$0xff] %v2354
          %2371 = vst [vmem:[%s552 + $0x68] sm:$0xff] %v2355
          %2372 = vst [vmem:[%s552 + $0x70] sm:$0xff] %v2356
          %2373 = vst [vmem:[%s552 + $0x78] sm:$0xff] %v2357
          %2374 = vst [vmem:[#allocation2] sm:$0xff] 0.0
          %2375 = vst [vmem:[#allocation2 + $0x8] sm:$0xff] 0.0
          %2376 = vst [vmem:[#allocation2 + $0x10] sm:$0xff] 0.0
          %2377 = vst [vmem:[#allocation2 + $0x18] sm:$0xff] 0.0
          %2378 = vst [vmem:[#allocation2 + $0x20] sm:$0xff] 0.0
          %2379 = vst [vmem:[#allocation2 + $0x28] sm:$0xff] 0.0
          %2380 = vst [vmem:[#allocation2 + $0x30] sm:$0xff] 0.0
          %2381 = vst [vmem:[#allocation2 + $0x38] sm:$0xff] 0.0
          %2382 = vst [vmem:[#allocation2 + $0x40] sm:$0xff] 0.0
          %2383 = vst [vmem:[#allocation2 + $0x48] sm:$0xff] 0.0
          %2384 = vst [vmem:[#allocation2 + $0x50] sm:$0xff] 0.0
          %2385 = vst [vmem:[#allocation2 + $0x58] sm:$0xff] 0.0
          %2386 = vst [vmem:[#allocation2 + $0x60] sm:$0xff] 0.0
          %2387 = vst [vmem:[#allocation2 + $0x68] sm:$0xff] 0.0
          %2388 = vst [vmem:[#allocation2 + $0x70] sm:$0xff] 0.0
          %2389 = vst [vmem:[#allocation2 + $0x78] sm:$0xff] 0.0
        $region88: #{tpu_custom_call.1} parent=51 // pred_fallthru
          _
        %v2390 = vld [vmem:[%s457] sm:$0xff]
        %v2391 = vld [vmem:[%s457 + $0x8] sm:$0xff]
        %v2392 = vld [vmem:[%s457 + $0x10] sm:$0xff]
        %v2393 = vld [vmem:[%s457 + $0x18] sm:$0xff]
        %v2394 = vld [vmem:[%s457 + $0x20] sm:$0xff]
        %v2395 = vld [vmem:[%s457 + $0x28] sm:$0xff]
        %v2396 = vld [vmem:[%s457 + $0x30] sm:$0xff]
        %v2397 = vld [vmem:[%s457 + $0x38] sm:$0xff]
        %v2398 = vld [vmem:[%s457 + $0x40] sm:$0xff]
        %v2399 = vld [vmem:[%s457 + $0x48] sm:$0xff]
        %v2400 = vld [vmem:[%s457 + $0x50] sm:$0xff]
        %v2401 = vld [vmem:[%s457 + $0x58] sm:$0xff]
        %v2402 = vld [vmem:[%s457 + $0x60] sm:$0xff]
        %v2403 = vld [vmem:[%s457 + $0x68] sm:$0xff]
        %v2404 = vld [vmem:[%s457 + $0x70] sm:$0xff]
        %v2405 = vld [vmem:[%s457 + $0x78] sm:$0xff]
        %v2406 = vld [vmem:[%s457 + $0x80] sm:$0xff]
        %v2407 = vld [vmem:[%s457 + $0x88] sm:$0xff]
        %v2408 = vld [vmem:[%s457 + $0x90] sm:$0xff]
        %v2409 = vld [vmem:[%s457 + $0x98] sm:$0xff]
        %v2410 = vld [vmem:[%s457 + $0xa0] sm:$0xff]
        %v2411 = vld [vmem:[%s457 + $0xa8] sm:$0xff]
        %v2412 = vld [vmem:[%s457 + $0xb0] sm:$0xff]
        %v2413 = vld [vmem:[%s457 + $0xb8] sm:$0xff]
        %v2414 = vld [vmem:[%s457 + $0xc0] sm:$0xff]
        %v2415 = vld [vmem:[%s457 + $0xc8] sm:$0xff]
        %v2416 = vld [vmem:[%s457 + $0xd0] sm:$0xff]
        %v2417 = vld [vmem:[%s457 + $0xd8] sm:$0xff]
        %v2418 = vld [vmem:[%s457 + $0xe0] sm:$0xff]
        %v2419 = vld [vmem:[%s457 + $0xe8] sm:$0xff]
        %v2420 = vld [vmem:[%s457 + $0xf0] sm:$0xff]
        %v2421 = vld [vmem:[%s457 + $0xf8] sm:$0xff]
        %v2422 = vpack.c.bf16 %v2392, %v2390
        %v2423 = vpack.c.bf16 %v2393, %v2391
        %v2424 = vpack.c.bf16 %v2396, %v2394
        %v2425 = vpack.c.bf16 %v2397, %v2395
        %v2426 = vpack.c.bf16 %v2400, %v2398
        %v2427 = vpack.c.bf16 %v2401, %v2399
        %v2428 = vpack.c.bf16 %v2404, %v2402
        %v2429 = vpack.c.bf16 %v2405, %v2403
        %v2430 = vpack.c.bf16 %v2408, %v2406
        %v2431 = vpack.c.bf16 %v2409, %v2407
        %v2432 = vpack.c.bf16 %v2412, %v2410
        %v2433 = vpack.c.bf16 %v2413, %v2411
        %v2434 = vpack.c.bf16 %v2416, %v2414
        %v2435 = vpack.c.bf16 %v2417, %v2415
        %v2436 = vpack.c.bf16 %v2420, %v2418
        %v2437 = vpack.c.bf16 %v2421, %v2419
        %v2438 = vld [vmem:[%s491] sm:$0xf]
        %v2439 = vld [vmem:[%s491 + $0x4] sm:$0xf]
        %v2440 = vld [vmem:[%s491 + $0x8] sm:$0xf]
        %v2441 = vld [vmem:[%s491 + $0xc] sm:$0xf]
        %v2442 = vld [vmem:[%s491 + $0x10] sm:$0xf]
        %v2443 = vld [vmem:[%s491 + $0x14] sm:$0xf]
        %v2444 = vld [vmem:[%s491 + $0x18] sm:$0xf]
        %v2445 = vld [vmem:[%s491 + $0x1c] sm:$0xf]
        %v2446 = vld [vmem:[%s491 + $0x20] sm:$0xf]
        %v2447 = vld [vmem:[%s491 + $0x24] sm:$0xf]
        %v2448 = vld [vmem:[%s491 + $0x28] sm:$0xf]
        %v2449 = vld [vmem:[%s491 + $0x2c] sm:$0xf]
        %v2450 = vld [vmem:[%s491 + $0x30] sm:$0xf]
        %v2451 = vld [vmem:[%s491 + $0x34] sm:$0xf]
        %v2452 = vld [vmem:[%s491 + $0x38] sm:$0xf]
        %v2453 = vld [vmem:[%s491 + $0x3c] sm:$0xf]
        %v2454 = vld [vmem:[%s491 + $0x40] sm:$0xf]
        %v2455 = vld [vmem:[%s491 + $0x44] sm:$0xf]
        %v2456 = vld [vmem:[%s491 + $0x48] sm:$0xf]
        %v2457 = vld [vmem:[%s491 + $0x4c] sm:$0xf]
        %v2458 = vld [vmem:[%s491 + $0x50] sm:$0xf]
        %v2459 = vld [vmem:[%s491 + $0x54] sm:$0xf]
        %v2460 = vld [vmem:[%s491 + $0x58] sm:$0xf]
        %v2461 = vld [vmem:[%s491 + $0x5c] sm:$0xf]
        %v2462 = vld [vmem:[%s491 + $0x60] sm:$0xf]
        %v2463 = vld [vmem:[%s491 + $0x64] sm:$0xf]
        %v2464 = vld [vmem:[%s491 + $0x68] sm:$0xf]
        %v2465 = vld [vmem:[%s491 + $0x6c] sm:$0xf]
        %v2466 = vld [vmem:[%s491 + $0x70] sm:$0xf]
        %v2467 = vld [vmem:[%s491 + $0x74] sm:$0xf]
        %v2468 = vld [vmem:[%s491 + $0x78] sm:$0xf]
        %v2469 = vld [vmem:[%s491 + $0x7c] sm:$0xf]
        %v2470 = vld [vmem:[%s499] sm:$0x1]
        %v2472 = vlaneseq
        %v2473 = vshrl.u32 %v2472, 7
        %v2474 = vsub.s32 0, %v2473
        %v2475 = vrot.slane %v2470, %v2474
        %v2509 = vunpack.c.l.b16 %v2438
        %v2510 = vunpack.c.l.b16 %v2439
        %v2511 = vunpack.c.l.b16 %v2440
        %v2512 = vunpack.c.l.b16 %v2441
        %v2513 = vunpack.c.l.b16 %v2442
        %v2514 = vunpack.c.l.b16 %v2443
        %v2515 = vunpack.c.l.b16 %v2444
        %v2516 = vunpack.c.l.b16 %v2445
        %v2517 = vunpack.c.l.b16 %v2446
        %v2518 = vunpack.c.l.b16 %v2447
        %v2519 = vunpack.c.l.b16 %v2448
        %v2520 = vunpack.c.l.b16 %v2449
        %v2521 = vunpack.c.l.b16 %v2450
        %v2522 = vunpack.c.l.b16 %v2451
        %v2523 = vunpack.c.l.b16 %v2452
        %v2524 = vunpack.c.l.b16 %v2453
        %v2525 = vunpack.c.l.b16 %v2454
        %v2526 = vunpack.c.l.b16 %v2455
        %v2527 = vunpack.c.l.b16 %v2456
        %v2528 = vunpack.c.l.b16 %v2457
        %v2529 = vunpack.c.l.b16 %v2458
        %v2530 = vunpack.c.l.b16 %v2459
        %v2531 = vunpack.c.l.b16 %v2460
        %v2532 = vunpack.c.l.b16 %v2461
        %v2533 = vunpack.c.l.b16 %v2462
        %v2534 = vunpack.c.l.b16 %v2463
        %v2535 = vunpack.c.l.b16 %v2464
        %v2536 = vunpack.c.l.b16 %v2465
        %v2537 = vunpack.c.l.b16 %v2466
        %v2538 = vunpack.c.l.b16 %v2467
        %v2539 = vunpack.c.l.b16 %v2468
        %v2540 = vunpack.c.l.b16 %v2469
        %v2541 = vpack.c.b16 %v2510, %v2509
        %v2542 = vpack.c.b16 %v2512, %v2511
        %v2543 = vpack.c.b16 %v2514, %v2513
        %v2544 = vpack.c.b16 %v2516, %v2515
        %v2545 = vpack.c.b16 %v2518, %v2517
        %v2546 = vpack.c.b16 %v2520, %v2519
        %v2547 = vpack.c.b16 %v2522, %v2521
        %v2548 = vpack.c.b16 %v2524, %v2523
        %v2549 = vpack.c.b16 %v2526, %v2525
        %v2550 = vpack.c.b16 %v2528, %v2527
        %v2551 = vpack.c.b16 %v2530, %v2529
        %v2552 = vpack.c.b16 %v2532, %v2531
        %v2553 = vpack.c.b16 %v2534, %v2533
        %v2554 = vpack.c.b16 %v2536, %v2535
        %v2555 = vpack.c.b16 %v2538, %v2537
        %v2556 = vpack.c.b16 %v2540, %v2539
        %2573 = vmatprep.subr.bf16.mxu0 0
        %2574 = vmatpush1.bf16.msra.mxu0 %v2541
        %2575 = vmatprep.subr.bf16.mxu0 0
        %2576 = vmatpush1.bf16.msra.mxu0 %v2542
        %2577 = vmatprep.subr.bf16.mxu0 0
        %2578 = vmatpush1.bf16.msra.mxu0 %v2543
        %2579 = vmatprep.subr.bf16.mxu0 0
        %2580 = vmatpush1.bf16.msra.mxu0 %v2544
        %2581 = vmatprep.subr.bf16.mxu0 0
        %2582 = vmatpush1.bf16.msra.mxu0 %v2545
        %2583 = vmatprep.subr.bf16.mxu0 0
        %2584 = vmatpush1.bf16.msra.mxu0 %v2546
        %2585 = vmatprep.subr.bf16.mxu0 0
        %2586 = vmatpush1.bf16.msra.mxu0 %v2547
        %2587 = vmatprep.subr.bf16.mxu0 0
        %2588 = vmatpush1.bf16.msra.mxu0 %v2548
        %2589 = vmatprep.subr.bf16.mxu0 0
        %2590 = vmatpush1.bf16.msra.mxu0 %v2549
        %2591 = vmatprep.subr.bf16.mxu0 0
        %2592 = vmatpush1.bf16.msra.mxu0 %v2550
        %2593 = vmatprep.subr.bf16.mxu0 0
        %2594 = vmatpush1.bf16.msra.mxu0 %v2551
        %2595 = vmatprep.subr.bf16.mxu0 0
        %2596 = vmatpush1.bf16.msra.mxu0 %v2552
        %2597 = vmatprep.subr.bf16.mxu0 0
        %2598 = vmatpush1.bf16.msra.mxu0 %v2553
        %2599 = vmatprep.subr.bf16.mxu0 0
        %2600 = vmatpush1.bf16.msra.mxu0 %v2554
        %2601 = vmatprep.subr.bf16.mxu0 0
        %2602 = vmatpush1.bf16.msra.mxu0 %v2555
        %2603 = vmatprep.subr.bf16.mxu0 0
        %2604 = vmatpush1.bf16.msra.mxu0 %v2556
        %2605 = vmatprep.mubr.bf16.mxu0 %v2423
        %2606 = vmatmul.mubr.bf16.gmra.mrb[0].mxu0 %v2422
        %v2607 = vpop.f32.mrb[0].mxu0
        %v2608 = vadd.f32 %v2475, %v2607
        %v2609 = vpop.f32.mrb[0].mxu0
        %v2610 = vpop.f32.mrb[0].mxu0
        %v2611 = vadd.f32 %v2475, %v2610
        %v2612 = vpop.f32.mrb[0].mxu0
        %2613 = vmatprep.mubr.bf16.mxu0 %v2425
        %2614 = vmatmul.mubr.bf16.gmra.mrb[0].mxu0 %v2424
        %v2615 = vpop.f32.mrb[0].mxu0
        %v2616 = vadd.f32 %v2475, %v2615
        %v2617 = vpop.f32.mrb[0].mxu0
        %v2618 = vpop.f32.mrb[0].mxu0
        %v2619 = vadd.f32 %v2475, %v2618
        %v2620 = vpop.f32.mrb[0].mxu0
        %2621 = vmatprep.mubr.bf16.mxu0 %v2427
        %2622 = vmatmul.mubr.bf16.gmra.mrb[0].mxu0 %v2426
        %v2623 = vpop.f32.mrb[0].mxu0
        %v2624 = vadd.f32 %v2475, %v2623
        %v2625 = vpop.f32.mrb[0].mxu0
        %v2626 = vpop.f32.mrb[0].mxu0
        %v2627 = vadd.f32 %v2475, %v2626
        %v2628 = vpop.f32.mrb[0].mxu0
        %2629 = vmatprep.mubr.bf16.mxu0 %v2429
        %2630 = vmatmul.mubr.bf16.gmra.mrb[0].mxu0 %v2428
        %v2631 = vpop.f32.mrb[0].mxu0
        %v2632 = vadd.f32 %v2475, %v2631
        %v2633 = vpop.f32.mrb[0].mxu0
        %v2634 = vpop.f32.mrb[0].mxu0
        %v2635 = vadd.f32 %v2475, %v2634
        %v2636 = vpop.f32.mrb[0].mxu0
        %2637 = vmatprep.mubr.bf16.mxu0 %v2431
        %2638 = vmatmul.mubr.bf16.gmra.mrb[0].mxu0 %v2430
        %v2639 = vpop.f32.mrb[0].mxu0
        %v2640 = vadd.f32 %v2475, %v2639
        %v2641 = vpop.f32.mrb[0].mxu0
        %v2642 = vpop.f32.mrb[0].mxu0
        %v2643 = vadd.f32 %v2475, %v2642
        %v2644 = vpop.f32.mrb[0].mxu0
        %2645 = vmatprep.mubr.bf16.mxu0 %v2433
        %2646 = vmatmul.mubr.bf16.gmra.mrb[0].mxu0 %v2432
        %v2647 = vpop.f32.mrb[0].mxu0
        %v2648 = vadd.f32 %v2475, %v2647
        %v2649 = vpop.f32.mrb[0].mxu0
        %v2650 = vpop.f32.mrb[0].mxu0
        %v2651 = vadd.f32 %v2475, %v2650
        %v2652 = vpop.f32.mrb[0].mxu0
        %2653 = vmatprep.mubr.bf16.mxu0 %v2435
        %2654 = vmatmul.mubr.bf16.gmra.mrb[0].mxu0 %v2434
        %v2655 = vpop.f32.mrb[0].mxu0
        %v2656 = vadd.f32 %v2475, %v2655
        %v2657 = vpop.f32.mrb[0].mxu0
        %v2658 = vpop.f32.mrb[0].mxu0
        %v2659 = vadd.f32 %v2475, %v2658
        %v2660 = vpop.f32.mrb[0].mxu0
        %2661 = vmatprep.mubr.bf16.mxu0 %v2437
        %2662 = vmatmul.mubr.bf16.gmra.mrb[0].mxu0 %v2436
        %v2663 = vpop.f32.mrb[0].mxu0
        %v2664 = vadd.f32 %v2475, %v2663
        %v2665 = vpop.f32.mrb[0].mxu0
        %v2666 = vpop.f32.mrb[0].mxu0
        %v2667 = vadd.f32 %v2475, %v2666
        %v2668 = vpop.f32.mrb[0].mxu0
        %2669 = vdwg.mxu0
        %v2670 = vlaneseq
        %v2671 = vand.u32 %v2670, 127
        %v2672 = vstv %s42
        %vm2673 = vcmp.eq.s32.totalorder %v2671, %v2672
        %v2674 = vld [vmem:[#allocation3] sm:$0xff]
        %v2675 = vld [vmem:[#allocation3 + $0x8] sm:$0xff]
        %v2676 = vld [vmem:[#allocation3 + $0x10] sm:$0xff]
        %v2677 = vld [vmem:[#allocation3 + $0x18] sm:$0xff]
        %v2678 = vld [vmem:[#allocation3 + $0x20] sm:$0xff]
        %v2679 = vld [vmem:[#allocation3 + $0x28] sm:$0xff]
        %v2680 = vld [vmem:[#allocation3 + $0x30] sm:$0xff]
        %v2681 = vld [vmem:[#allocation3 + $0x38] sm:$0xff]
        %v2682 = vld [vmem:[#allocation3 + $0x40] sm:$0xff]
        %v2683 = vld [vmem:[#allocation3 + $0x48] sm:$0xff]
        %v2684 = vld [vmem:[#allocation3 + $0x50] sm:$0xff]
        %v2685 = vld [vmem:[#allocation3 + $0x58] sm:$0xff]
        %v2686 = vld [vmem:[#allocation3 + $0x60] sm:$0xff]
        %v2687 = vld [vmem:[#allocation3 + $0x68] sm:$0xff]
        %v2688 = vld [vmem:[#allocation3 + $0x70] sm:$0xff]
        %v2689 = vld [vmem:[#allocation3 + $0x78] sm:$0xff]
        %v2690 = vsel %vm2673, %v2674, 0.0
        %v2691 = vsel %vm2673, %v2675, 0.0
        %v2692 = vsel %vm2673, %v2676, 0.0
        %v2693 = vsel %vm2673, %v2677, 0.0
        %v2694 = vsel %vm2673, %v2678, 0.0
        %v2695 = vsel %vm2673, %v2679, 0.0
        %v2696 = vsel %vm2673, %v2680, 0.0
        %v2697 = vsel %vm2673, %v2681, 0.0
        %v2698 = vsel %vm2673, %v2682, 0.0
        %v2699 = vsel %vm2673, %v2683, 0.0
        %v2700 = vsel %vm2673, %v2684, 0.0
        %v2701 = vsel %vm2673, %v2685, 0.0
        %v2702 = vsel %vm2673, %v2686, 0.0
        %v2703 = vsel %vm2673, %v2687, 0.0
        %v2704 = vsel %vm2673, %v2688, 0.0
        %v2705 = vsel %vm2673, %v2689, 0.0
        %vm2706 = vcmask 31744
        %v2707 = vsel %vm2706, %v2690, 0.0
        %2708 = vadd.xlane.f32.xlu0 %v2707
        %v2709 = vpop.xlane.xlu0 %2708
        %v2710 = vsel %vm2706, %v2691, 0.0
        %2711 = vadd.xlane.f32.xlu0 %v2710
        %v2712 = vpop.xlane.xlu0 %2711
        %v2713 = vsel %vm2706, %v2692, 0.0
        %2714 = vadd.xlane.f32.xlu0 %v2713
        %v2715 = vpop.xlane.xlu0 %2714
        %v2716 = vsel %vm2706, %v2693, 0.0
        %2717 = vadd.xlane.f32.xlu0 %v2716
        %v2718 = vpop.xlane.xlu0 %2717
        %v2719 = vsel %vm2706, %v2694, 0.0
        %2720 = vadd.xlane.f32.xlu0 %v2719
        %v2721 = vpop.xlane.xlu0 %2720
        %v2722 = vsel %vm2706, %v2695, 0.0
        %2723 = vadd.xlane.f32.xlu0 %v2722
        %v2724 = vpop.xlane.xlu0 %2723
        %v2725 = vsel %vm2706, %v2696, 0.0
        %2726 = vadd.xlane.f32.xlu0 %v2725
        %v2727 = vpop.xlane.xlu0 %2726
        %v2728 = vsel %vm2706, %v2697, 0.0
        %2729 = vadd.xlane.f32.xlu0 %v2728
        %v2730 = vpop.xlane.xlu0 %2729
        %v2731 = vsel %vm2706, %v2698, 0.0
        %2732 = vadd.xlane.f32.xlu0 %v2731
        %v2733 = vpop.xlane.xlu0 %2732
        %v2734 = vsel %vm2706, %v2699, 0.0
        %2735 = vadd.xlane.f32.xlu0 %v2734
        %v2736 = vpop.xlane.xlu0 %2735
        %v2737 = vsel %vm2706, %v2700, 0.0
        %2738 = vadd.xlane.f32.xlu0 %v2737
        %v2739 = vpop.xlane.xlu0 %2738
        %v2740 = vsel %vm2706, %v2701, 0.0
        %2741 = vadd.xlane.f32.xlu0 %v2740
        %v2742 = vpop.xlane.xlu0 %2741
        %v2743 = vsel %vm2706, %v2702, 0.0
        %2744 = vadd.xlane.f32.xlu0 %v2743
        %v2745 = vpop.xlane.xlu0 %2744
        %v2746 = vsel %vm2706, %v2703, 0.0
        %2747 = vadd.xlane.f32.xlu0 %v2746
        %v2748 = vpop.xlane.xlu0 %2747
        %v2749 = vsel %vm2706, %v2704, 0.0
        %2750 = vadd.xlane.f32.xlu0 %v2749
        %v2751 = vpop.xlane.xlu0 %2750
        %v2752 = vsel %vm2706, %v2705, 0.0
        %2753 = vadd.xlane.f32.xlu0 %v2752
        %v2754 = vpop.xlane.xlu0 %2753
        %v2755 = vld [vmem:[#allocation2] sm:$0xff]
        %v2756 = vld [vmem:[#allocation2 + $0x8] sm:$0xff]
        %v2757 = vld [vmem:[#allocation2 + $0x10] sm:$0xff]
        %v2758 = vld [vmem:[#allocation2 + $0x18] sm:$0xff]
        %v2759 = vld [vmem:[#allocation2 + $0x20] sm:$0xff]
        %v2760 = vld [vmem:[#allocation2 + $0x28] sm:$0xff]
        %v2761 = vld [vmem:[#allocation2 + $0x30] sm:$0xff]
        %v2762 = vld [vmem:[#allocation2 + $0x38] sm:$0xff]
        %v2763 = vld [vmem:[#allocation2 + $0x40] sm:$0xff]
        %v2764 = vld [vmem:[#allocation2 + $0x48] sm:$0xff]
        %v2765 = vld [vmem:[#allocation2 + $0x50] sm:$0xff]
        %v2766 = vld [vmem:[#allocation2 + $0x58] sm:$0xff]
        %v2767 = vld [vmem:[#allocation2 + $0x60] sm:$0xff]
        %v2768 = vld [vmem:[#allocation2 + $0x68] sm:$0xff]
        %v2769 = vld [vmem:[#allocation2 + $0x70] sm:$0xff]
        %v2770 = vld [vmem:[#allocation2 + $0x78] sm:$0xff]
        %v2771 = vmul.f32 %v2608, %v2709
        %v2772 = vmul.f32 %v2611, %v2712
        %v2773 = vmul.f32 %v2616, %v2715
        %v2774 = vmul.f32 %v2619, %v2718
        %v2775 = vmul.f32 %v2624, %v2721
        %v2776 = vmul.f32 %v2627, %v2724
        %v2777 = vmul.f32 %v2632, %v2727
        %v2778 = vmul.f32 %v2635, %v2730
        %v2779 = vmul.f32 %v2640, %v2733
        %v2780 = vmul.f32 %v2643, %v2736
        %v2781 = vmul.f32 %v2648, %v2739
        %v2782 = vmul.f32 %v2651, %v2742
        %v2783 = vmul.f32 %v2656, %v2745
        %v2784 = vmul.f32 %v2659, %v2748
        %v2785 = vmul.f32 %v2664, %v2751
        %v2786 = vmul.f32 %v2667, %v2754
        %v2787 = vadd.f32 %v2755, %v2771
        %v2788 = vadd.f32 %v2756, %v2772
        %v2789 = vadd.f32 %v2757, %v2773
        %v2790 = vadd.f32 %v2758, %v2774
        %v2791 = vadd.f32 %v2759, %v2775
        %v2792 = vadd.f32 %v2760, %v2776
        %v2793 = vadd.f32 %v2761, %v2777
        %v2794 = vadd.f32 %v2762, %v2778
        %v2795 = vadd.f32 %v2763, %v2779
        %v2796 = vadd.f32 %v2764, %v2780
        %v2797 = vadd.f32 %v2765, %v2781
        %v2798 = vadd.f32 %v2766, %v2782
        %v2799 = vadd.f32 %v2767, %v2783
        %v2800 = vadd.f32 %v2768, %v2784
        %v2801 = vadd.f32 %v2769, %v2785
        %v2802 = vadd.f32 %v2770, %v2786
        %2803 = vst [vmem:[#allocation2] sm:$0xff] %v2787
        %2804 = vst [vmem:[#allocation2 + $0x8] sm:$0xff] %v2788
        %2805 = vst [vmem:[#allocation2 + $0x10] sm:$0xff] %v2789
        %2806 = vst [vmem:[#allocation2 + $0x18] sm:$0xff] %v2790
        %2807 = vst [vmem:[#allocation2 + $0x20] sm:$0xff] %v2791
        %2808 = vst [vmem:[#allocation2 + $0x28] sm:$0xff] %v2792
        %2809 = vst [vmem:[#allocation2 + $0x30] sm:$0xff] %v2793
        %2810 = vst [vmem:[#allocation2 + $0x38] sm:$0xff] %v2794
        %2811 = vst [vmem:[#allocation2 + $0x40] sm:$0xff] %v2795
        %2812 = vst [vmem:[#allocation2 + $0x48] sm:$0xff] %v2796
        %2813 = vst [vmem:[#allocation2 + $0x50] sm:$0xff] %v2797
        %2814 = vst [vmem:[#allocation2 + $0x58] sm:$0xff] %v2798
        %2815 = vst [vmem:[#allocation2 + $0x60] sm:$0xff] %v2799
        %2816 = vst [vmem:[#allocation2 + $0x68] sm:$0xff] %v2800
        %2817 = vst [vmem:[#allocation2 + $0x70] sm:$0xff] %v2801
        %2818 = vst [vmem:[#allocation2 + $0x78] sm:$0xff] %v2802
        %p2819 = scmp.eq.s32.totalorder %s42, 3
        // Predicated region
        $region89: #{tpu_custom_call.1} parent=51 // pred_check
          %p2820 = pneg %p2819
        $region90: #{tpu_custom_call.1} parent=51 // pred_check_branch
          %2822 = sbr.rel (%p2820) target = $region92
        $region91: #{tpu_custom_call.1} parent=51 // pred_region
          %v2823 = vld [vmem:[#allocation2] sm:$0xff]
          %v2824 = vld [vmem:[#allocation2 + $0x8] sm:$0xff]
          %v2825 = vld [vmem:[#allocation2 + $0x10] sm:$0xff]
          %v2826 = vld [vmem:[#allocation2 + $0x18] sm:$0xff]
          %v2827 = vld [vmem:[#allocation2 + $0x20] sm:$0xff]
          %v2828 = vld [vmem:[#allocation2 + $0x28] sm:$0xff]
          %v2829 = vld [vmem:[#allocation2 + $0x30] sm:$0xff]
          %v2830 = vld [vmem:[#allocation2 + $0x38] sm:$0xff]
          %v2831 = vld [vmem:[#allocation2 + $0x40] sm:$0xff]
          %v2832 = vld [vmem:[#allocation2 + $0x48] sm:$0xff]
          %v2833 = vld [vmem:[#allocation2 + $0x50] sm:$0xff]
          %v2834 = vld [vmem:[#allocation2 + $0x58] sm:$0xff]
          %v2835 = vld [vmem:[#allocation2 + $0x60] sm:$0xff]
          %v2836 = vld [vmem:[#allocation2 + $0x68] sm:$0xff]
          %v2837 = vld [vmem:[#allocation2 + $0x70] sm:$0xff]
          %v2838 = vld [vmem:[#allocation2 + $0x78] sm:$0xff]
          %2839 = vst [vmem:[%s545] sm:$0xff] %v2823
          %2840 = vst [vmem:[%s545 + $0x8] sm:$0xff] %v2824
          %2841 = vst [vmem:[%s545 + $0x10] sm:$0xff] %v2825
          %2842 = vst [vmem:[%s545 + $0x18] sm:$0xff] %v2826
          %2843 = vst [vmem:[%s545 + $0x20] sm:$0xff] %v2827
          %2844 = vst [vmem:[%s545 + $0x28] sm:$0xff] %v2828
          %2845 = vst [vmem:[%s545 + $0x30] sm:$0xff] %v2829
          %2846 = vst [vmem:[%s545 + $0x38] sm:$0xff] %v2830
          %2847 = vst [vmem:[%s545 + $0x40] sm:$0xff] %v2831
          %2848 = vst [vmem:[%s545 + $0x48] sm:$0xff] %v2832
          %2849 = vst [vmem:[%s545 + $0x50] sm:$0xff] %v2833
          %2850 = vst [vmem:[%s545 + $0x58] sm:$0xff] %v2834
          %2851 = vst [vmem:[%s545 + $0x60] sm:$0xff] %v2835
          %2852 = vst [vmem:[%s545 + $0x68] sm:$0xff] %v2836
          %2853 = vst [vmem:[%s545 + $0x70] sm:$0xff] %v2837
          %2854 = vst [vmem:[%s545 + $0x78] sm:$0xff] %v2838
        $region92: #{tpu_custom_call.1} parent=51 // pred_fallthru
          _
        %s2855 = sand.u32 %s256, 1
        %s2856 = scalar_lea.sflag [#allocation6], %s2855
        %s2857 = sand.u32 %s256, 1
        %s2858 = smul.addr %s2857, 128
        %s2859 = scalar_lea.vmem [#allocation17], %s2858
        %s2860 = sand.u32 %s282, 1
        %s2861 = scalar_lea.sflag [#allocation19], %s2860
        %s2862 = sand.u32 %s282, 1
        %s2863 = smul.addr %s2862, 128
        %s2864 = scalar_lea.vmem [#allocation18], %s2863
        // Predicated region
        $region93: #{tpu_custom_call.1} parent=51 // pred_check
          %p2865 = pneg %p266
        $region94: #{tpu_custom_call.1} parent=51 // pred_check_branch
          %2867 = sbr.rel (%p2865) target = $region96
        $region95: #{tpu_custom_call.1} parent=51 // pred_region
          %s2868 = smul.u32 16, %s40
          %s2870 = ssub.s32 2048, 2048
          %2871 = vsyncadd %s2856, %s2870
          %s2872 = smul.addr %s2868, 2
          %s2873 = sadd.s32 %s41, %s2872
          %s2874 = smul.addr %s2873, 128
          %s2875 = scalar_lea.hbm %s8, %s2874
          %s2876 = sshll.u32 %s2859, 4
          %s2877 = int_to_ptr.vmem [resolvable:$true] %s2876
          %2882 = dma.vmem_to_hbm [thread:$0]  %s2877, 2048, %s2875, %s2856, 128, 256, 8
        $region96: #{tpu_custom_call.1} parent=51 // pred_fallthru
          _
        // Predicated region
        $region97: #{tpu_custom_call.1} parent=51 // pred_check
          %p2883 = pneg %p292
        $region98: #{tpu_custom_call.1} parent=51 // pred_check_branch
          %2885 = sbr.rel (%p2883) target = $region100
        $region99: #{tpu_custom_call.1} parent=51 // pred_region
          %s2886 = smul.u32 16, %s40
          %s2888 = ssub.s32 2048, 2048
          %2889 = vsyncadd %s2861, %s2888
          %s2890 = smul.addr %s2886, 128
          %s2891 = scalar_lea.hbm %s9, %s2890
          %s2892 = sshll.u32 %s2864, 4
          %s2893 = int_to_ptr.vmem [resolvable:$true] %s2892
          %2898 = dma.vmem_to_hbm [thread:$0]  %s2893, 2048, %s2891, %s2861, 128, 128, 8
        $region100: #{tpu_custom_call.1} parent=51 // pred_fallthru
          _
      $region52: #{tpu_custom_call.1} parent=5 // pred_fallthru
        _
      %p2899 = scmp.le.s32.totalorder 2, %s30
      // Predicated region
      $region101: #{tpu_custom_call.1} parent=5 // pred_check
        %p2900 = pneg %p2899
      $region102: #{tpu_custom_call.1} parent=5 // pred_check_branch
        %2902 = sbr.rel (%p2900) target = $region104
      $region103: #{tpu_custom_call.1} parent=5 // pred_region
        %s2903 = ssub.s32 %s30, 2
        // Predicated region
        $region105: #{tpu_custom_call.1} parent=103 // pred_check
          %p2904 = pneg %p272
        $region106: #{tpu_custom_call.1} parent=103 // pred_check_branch
          %2906 = sbr.rel (%p2904) target = $region108
        $region107: #{tpu_custom_call.1} parent=103 // pred_region
          %s2907 = sand.u32 %s257, 1
          %s2908 = scalar_lea.sflag [#allocation6], %s2907
          %s2909 = sand.u32 %s257, 1
          %s2910 = smul.addr %s2909, 128
          %s2911 = scalar_lea.vmem [#allocation17], %s2910
          %2912 = dma.done %s2908, 2048
        $region108: #{tpu_custom_call.1} parent=103 // pred_fallthru
          _
        // Predicated region
        $region109: #{tpu_custom_call.1} parent=103 // pred_check
          %p2913 = pneg %p298
        $region110: #{tpu_custom_call.1} parent=103 // pred_check_branch
          %2915 = sbr.rel (%p2913) target = $region112
        $region111: #{tpu_custom_call.1} parent=103 // pred_region
          %s2916 = sand.u32 %s283, 1
          %s2917 = scalar_lea.sflag [#allocation19], %s2916
          %s2918 = sand.u32 %s283, 1
          %s2919 = smul.addr %s2918, 128
          %s2920 = scalar_lea.vmem [#allocation18], %s2919
          %2921 = dma.done %s2917, 2048
        $region112: #{tpu_custom_call.1} parent=103 // pred_fallthru
          _
      $region104: #{tpu_custom_call.1} parent=5 // pred_fallthru
        _
    $region6: #{tpu_custom_call.1} parent=1 // loop_footer
      %s34 = sadd.s32 1, %s30
    $region7: #{tpu_custom_call.1} parent=1 // loop_footer_branch
      %29 = sbr.rel target = $region3
    $region8: #{tpu_custom_call.1} parent=1 // loop_exit
      _
    %2922 = vsyncpa [#allocation5], 1
    %s2923 = scalar_lea.sflag [#allocation5], 1
    %2924 = vsyncpa %s2923, 1
    %2925 = vsyncpa [#allocation8], 1
    %s2926 = scalar_lea.sflag [#allocation8], 1
    %2927 = vsyncpa %s2926, 1
    %2928 = vsyncpa [#allocation11], 1
    %2929 = vsyncpa [#allocation14], 1
    %2930 = vsyncpa [#allocation6], 1
    %s2931 = scalar_lea.sflag [#allocation6], 1
    %2932 = vsyncpa %s2931, 1
    %2933 = vsyncpa [#allocation19], 1
    %s2934 = scalar_lea.sflag [#allocation19], 1
    %2935 = vsyncpa %s2934, 1

</llo_original>
